<compile_context>
chip_gen: v7x
topology: tpu7x:2x2x1
jax: 0.10.0
libtpu: 0.0.40
codegen_flags: <defaults>
</compile_context>

<pallas_src>
import jax
import jax.numpy as jnp
from jax import lax
from jax.experimental import pallas as pl
from jax.experimental.pallas import tpu as pltpu


_EPS = 1e-5
_LRELU_SLOPE = 0.2

# Sized so tiles fit comfortably inside v7x's smaller VMEM (64 MiB physical,
# 32 MiB scoped default); plenty of headroom on v5e/v6e (128 MiB).
_COMPILER_PARAMS = pltpu.CompilerParams(
    dimension_semantics=("parallel",),
    vmem_limit_bytes=48 * 1024 * 1024,
)


def _round_up(v, m):
    return (v + m - 1) // m * m


def _pick_tile_h(h, max_tile=16):
    t = min(max_tile, h)
    while h % t:
        t -= 1
    return t


# ----------------------------- kernel helpers -----------------------------


def _conv3x3(x, w_ref, th, wd, cp):
    """3x3 'same' conv on an already-padded tile.

    x:     (th+2, wp, cin)   padded activation tile (wp >= wd+2, extra cols are 0)
    w_ref: (3, cin, 3*cp)    w_ref[kh, ci, kw*cp + co] = torch_weight[co, ci, kh, kw]
    returns (th, wd, cp) float32
    """
    wp = x.shape[1]
    cin = x.shape[2]
    acc = jnp.zeros((th * wp, 3 * cp), jnp.float32)
    for kh in range(3):                       # 3 MXU calls: K=cin, N=3*cp
        lhs = x[kh:kh + th].reshape(th * wp, cin)
        acc = acc + jnp.dot(lhs, w_ref[kh], preferred_element_type=jnp.float32)
    z = acc.reshape(th, wp, 3 * cp)
    # Fold the three column taps back together: shifted sublane slices + two
    # adds; the lane slices are 128-aligned (cp is a multiple of 128).
    return (z[:, 0:wd, 0 * cp:1 * cp]
            + z[:, 1:wd + 1, 1 * cp:2 * cp]
            + z[:, 2:wd + 2, 2 * cp:3 * cp])


def _write_stats(st_ref, y):
    """Per-channel partial sum / sum-of-squares into rows 0 and 1 of an (8, Cp) slab."""
    st_ref[:, 0:1, :] = jnp.sum(y, axis=(0, 1), keepdims=True)
    st_ref[:, 1:2, :] = jnp.sum(y * y, axis=(0, 1), keepdims=True)


def _make_conv1_kernel(th, wd, cp):
    def kernel(x_ref, w_ref, y_ref, st_ref):
        # Conv bias intentionally omitted: cancelled by training-mode BN.
        y = _conv3x3(x_ref[0], w_ref, th, wd, cp)          # f32
        y_ref[0] = y.astype(y_ref.dtype)
        _write_stats(st_ref, y)
    return kernel


def _make_bn_conv2_kernel(th, wd, cp, n_h_tiles):
    def kernel(y1_ref, sc_ref, sh_ref, w_ref, y_ref, st_ref):
        h_idx = pl.program_id(0) % n_h_tiles
        wp = y1_ref.shape[2]
        # BN1 (pre-folded scale/shift) + LeakyReLU on the raw conv1 tile,
        # including its halo rows (elementwise, so halo values are exact).
        act = y1_ref[0] * sc_ref[...] + sh_ref[...]
        act = jnp.where(act > 0, act, _LRELU_SLOPE * act)
        # The chunks were cut from a zero-padded *raw* tensor; positions that
        # correspond to conv2's zero padding at the image border must be
        # forced back to zero *after* the affine BN.
        row = lax.broadcasted_iota(jnp.int32, (th + 2, wp, 1), 0)
        col = lax.broadcasted_iota(jnp.int32, (th + 2, wp, 1), 1)
        valid = (col >= 1) & (col <= wd)
        valid &= (row >= 1) | (h_idx > 0)
        valid &= (row <= th) | (h_idx < n_h_tiles - 1)
        act = jnp.where(valid, act, 0.0)
        y = _conv3x3(act, w_ref, th, wd, cp)
        y_ref[0] = y.astype(y_ref.dtype)
        _write_stats(st_ref, y)
    return kernel


def _bn_lrelu_kernel(y_ref, sc_ref, sh_ref, o_ref):
    v = y_ref[0] * sc_ref[...] + sh_ref[...]
    o_ref[0] = jnp.where(v > 0, v, _LRELU_SLOPE * v).astype(o_ref.dtype)


# ----------------------------- wrapper glue -----------------------------


def _chunk_rows(x_nhwc, tile_h, w_pad):
    """(N, H, W, C) -> (N*H//tile_h, tile_h+2, w_pad, C) overlapping zero-padded
    row chunks (1-row halo each side; W padded by 1 left, w_pad-W-1 right)."""
    n, h, w, c = x_nhwc.shape
    n_tiles = h // tile_h
    xp = jnp.pad(x_nhwc, ((0, 0), (1, 1), (1, w_pad - w - 1), (0, 0)))
    idx = (jnp.arange(n_tiles)[:, None] * tile_h
           + jnp.arange(tile_h + 2)[None, :]).reshape(-1)
    xc = jnp.take(xp, idx, axis=1)
    return xc.reshape(n * n_tiles, tile_h + 2, w_pad, c)


def _pack_weight(w_oihw, cin_pad, cout_pad):
    """(Cout, Cin, 3, 3) -> (3, cin_pad, 3*cout_pad):
    B[kh, ci, kw*cout_pad + co] = w[co, ci, kh, kw]; padded channels are zero."""
    cout, cin = w_oihw.shape[0], w_oihw.shape[1]
    wt = jnp.transpose(w_oihw, (2, 1, 3, 0))               # (kh, ci, kw, co)
    wt = jnp.pad(wt, ((0, 0), (0, cin_pad - cin), (0, 0), (0, cout_pad - cout)))
    return wt.reshape(3, cin_pad, 3 * cout_pad)


def _pad_channels(v, cp):
    return jnp.pad(v.astype(jnp.float32), (0, cp - v.shape[0]))


def _bn_fold(stats, gamma_p, beta_p, count):
    """Partial (sum, sumsq) tiles -> folded per-channel (scale, shift), shape (1, Cp)."""
    s = jnp.sum(stats[:, 0, :], axis=0)
    ss = jnp.sum(stats[:, 1, :], axis=0)
    mean = s / count
    var = jnp.maximum(ss / count - mean * mean, 0.0)        # biased var (training-mode BN)
    scale = gamma_p * lax.rsqrt(var + _EPS)
    shift = beta_p - mean * scale
    return scale.reshape(1, -1), shift.reshape(1, -1)


def double_conv_forward(x_nchw, params, tile_h=None):
    """PyTorch-equivalent forward.  x_nchw: (N, Cin, H, W) -> (N, Cout, H, W)."""
    n, cin, h, w = x_nchw.shape
    out_c = params["w1"].shape[0]          # mid_c == out_c in this module
    cp = _round_up(out_c, 128)             # lane-dense channel width
    if tile_h is None:
        tile_h = _pick_tile_h(h)
    assert h % tile_h == 0, "tile_h must divide H"
    n_h = h // tile_h
    t = n * n_h
    wp = _round_up(w + 2, 8)               # sublane-aligned padded width
    count = float(n * h * w)

    # ---- layout prep (plain JAX glue) ----
    x_nhwc = jnp.transpose(x_nchw, (0, 2, 3, 1))
    xc = _chunk_rows(x_nhwc, tile_h, wp)                    # (T, th+2, wp, Cin)
    w1 = _pack_weight(params["w1"], cin, cp)                # (3, Cin, 3*Cp)
    w2 = _pack_weight(params["w2"], cp, cp)                 # (3, Cp, 3*Cp)
    g1, b1 = _pad_channels(params["gamma1"], cp), _pad_channels(params["beta1"], cp)
    g2, b2 = _pad_channels(params["gamma2"], cp), _pad_channels(params["beta2"], cp)
    # NOTE: conv biases params["b1"]/["b2"] are unused on purpose: a
    # per-channel constant added before training-mode BatchNorm is exactly
    # cancelled by the mean subtraction (zero numerical change).

    raw_shape = jax.ShapeDtypeStruct((t, tile_h, w, cp), jnp.float32)
    st_shape = jax.ShapeDtypeStruct((t, 8, cp), jnp.float32)
    raw_spec = pl.BlockSpec((1, tile_h, w, cp), lambda i: (i, 0, 0, 0))
    st_spec = pl.BlockSpec((1, 8, cp), lambda i: (i, 0, 0))
    vec_spec = pl.BlockSpec((1, cp), lambda i: (0, 0))

    # ---- pass 1: conv1 + per-tile BN statistics ----
    y1_raw, st1 = pl.pallas_call(
        _make_conv1_kernel(tile_h, w, cp),
        out_shape=(raw_shape, st_shape),
        grid=(t,),
        in_specs=[
            pl.BlockSpec((1, tile_h + 2, wp, cin), lambda i: (i, 0, 0, 0)),
            pl.BlockSpec((3, cin, 3 * cp), lambda i: (0, 0, 0)),
        ],
        out_specs=(raw_spec, st_spec),
        compiler_params=_COMPILER_PARAMS,
    )(xc, w1)
    scale1, shift1 = _bn_fold(st1, g1, b1, count)

    # ---- pass 2: BN1 + LeakyReLU fused into conv2 (+ BN2 statistics) ----
    y1c = _chunk_rows(y1_raw.reshape(n, h, w, cp), tile_h, wp)   # (T, th+2, wp, Cp)
    y2_raw, st2 = pl.pallas_call(
        _make_bn_conv2_kernel(tile_h, w, cp, n_h),
        out_shape=(raw_shape, st_shape),
        grid=(t,),
        in_specs=[
            pl.BlockSpec((1, tile_h + 2, wp, cp), lambda i: (i, 0, 0, 0)),
            vec_spec, vec_spec,
            pl.BlockSpec((3, cp, 3 * cp), lambda i: (0, 0, 0)),
        ],
        out_specs=(raw_spec, st_spec),
        compiler_params=_COMPILER_PARAMS,
    )(y1c, scale1, shift1, w2)
    scale2, shift2 = _bn_fold(st2, g2, b2, count)

    # ---- pass 3: BN2 + LeakyReLU ----
    out = pl.pallas_call(
        _bn_lrelu_kernel,
        out_shape=jax.ShapeDtypeStruct((t, tile_h, w, cp), x_nchw.dtype),
        grid=(t,),
        in_specs=[raw_spec, vec_spec, vec_spec],
        out_specs=raw_spec,
        compiler_params=_COMPILER_PARAMS,
    )(y2_raw, scale2, shift2)

    out = out.reshape(n, h, w, cp)[..., :out_c]              # drop padded channels
    return jnp.transpose(out, (0, 3, 1, 2))                  # NHWC -> NCHW


def init_params(key, in_c, out_c, dtype=jnp.float32):
    mid_c = out_c  # matches the module (mid_c is overwritten to out_c)
    k1, k2, k3, k4 = jax.random.split(key, 4)
    s1 = 1.0 / jnp.sqrt(in_c * 9.0)
    s2 = 1.0 / jnp.sqrt(mid_c * 9.0)
    return {
        "w1": jax.random.uniform(k1, (mid_c, in_c, 3, 3), dtype, -s1, s1),
        "b1": jax.random.uniform(k2, (mid_c,), dtype, -s1, s1),
        "gamma1": jnp.ones((mid_c,), dtype),
        "beta1": jnp.zeros((mid_c,), dtype),
        "w2": jax.random.uniform(k3, (out_c, mid_c, 3, 3), dtype, -s2, s2),
        "b2": jax.random.uniform(k4, (out_c,), dtype, -s2, s2),
        "gamma2": jnp.ones((out_c,), dtype),
        "beta2": jnp.zeros((out_c,), dtype),
    }


def _reference_forward(x_nchw, params):
    """Pure-JAX (XLA) reference of the PyTorch module, for a correctness check."""
    def block(x, w, b, gamma, beta):
        y = lax.conv_general_dilated(
            x, w, window_strides=(1, 1), padding=((1, 1), (1, 1)),
            dimension_numbers=("NCHW", "OIHW", "NCHW"))
        y = y + b[None, :, None, None]
        mean = jnp.mean(y, axis=(0, 2, 3), keepdims=True)
        var = jnp.var(y, axis=(0, 2, 3), keepdims=True)
        y = (y - mean) * lax.rsqrt(var + _EPS)
        y = y * gamma[None, :, None, None] + beta[None, :, None, None]
        return jnp.where(y > 0, y, _LRELU_SLOPE * y)

    x = block(x_nchw, params["w1"], params["b1"], params["gamma1"], params["beta1"])
    x = block(x, params["w2"], params["b2"], params["gamma2"], params["beta2"])
    return x


if __name__ == "__main__":
    key = jax.random.PRNGKey(0)
    kx, kp = jax.random.split(key)

    N, in_c, out_c, H, W = 2, 4, 8, 16, 16
    x = jax.random.normal(kx, (N, in_c, H, W), jnp.float32)
    params = init_params(kp, in_c, out_c)

    fwd = jax.jit(lambda xx, pp: double_conv_forward(xx, pp, tile_h=8))
    y = jax.block_until_ready(fwd(x, params))
    assert y.shape == (N, out_c, H, W)

    ref = jax.block_until_ready(jax.jit(_reference_forward)(x, params))
    err = float(jnp.max(jnp.abs(y - ref)))
    assert err < 2e-3, f"max abs error vs reference = {err}"

    print("KERNEL_OK")
</pallas_src>

<mosaic_0001>
module attributes {stable_mosaic.version = 11 : i64} {
  func.func @kernel(%arg0: i32, %arg1: memref<1x10x24x4xf32, #tpu.memory_space<vmem>>, %arg2: memref<3x4x384xf32, #tpu.memory_space<vmem>>, %arg3: memref<1x8x16x128xf32, #tpu.memory_space<vmem>>, %arg4: memref<1x8x128xf32, #tpu.memory_space<vmem>>) attributes {dimension_semantics = [#tpu.dimension_semantics<parallel>], iteration_bounds = array<i64: 4>, scalar_prefetch = 0 : i64, scratch_operands = 0 : i64, tpu.core_type = #tpu.core_type<tc>, window_params = [{transform_indices = @transform_0, window_bounds = array<i64: 1, 10, 24, 4>}, {pipeline_mode = #tpu.pipeline_mode<synchronous>, transform_indices = @transform_1, window_bounds = array<i64: 3, 4, 384>}, {transform_indices = @transform_2, window_bounds = array<i64: 1, 8, 16, 128>}, {transform_indices = @transform_3, window_bounds = array<i64: 1, 8, 128>}]} {
    %c0 = arith.constant 0 : index
    %c0_0 = arith.constant 0 : index
    %c0_1 = arith.constant 0 : index
    %c0_2 = arith.constant 0 : index
    %0 = vector.load %arg1[%c0, %c0_0, %c0_1, %c0_2] : memref<1x10x24x4xf32, #tpu.memory_space<vmem>>, vector<1x10x24x4xf32>
    %1 = vector.shape_cast %0 : vector<1x10x24x4xf32> to vector<10x24x4xf32>
    %cst = arith.constant 0.000000e+00 : f32
    %2 = vector.broadcast %cst : f32 to vector<192x384xf32>
    %3 = vector.extract_strided_slice %1 {offsets = [0, 0, 0], sizes = [8, 24, 4], strides = [1, 1, 1]} : vector<10x24x4xf32> to vector<8x24x4xf32>
    %4 = vector.shape_cast %3 : vector<8x24x4xf32> to vector<192x4xf32>
    %c0_3 = arith.constant 0 : index
    %c0_4 = arith.constant 0 : index
    %c0_5 = arith.constant 0 : index
    %5 = vector.load %arg2[%c0_3, %c0_4, %c0_5] : memref<3x4x384xf32, #tpu.memory_space<vmem>>, vector<1x4x384xf32>
    %6 = vector.shape_cast %5 : vector<1x4x384xf32> to vector<4x384xf32>
    %cst_6 = arith.constant dense<0.000000e+00> : vector<192x384xf32>
    %7 = tpu.matmul %4, %6, %cst_6 {dimension_numbers = #tpu.dot_dimension_numbers<[1], [0], [0], [1], [0, 0, 1, 1], [], []>} : vector<192x4xf32>, vector<4x384xf32>, vector<192x384xf32> -> vector<192x384xf32>
    %8 = arith.addf %2, %7 : vector<192x384xf32>
    %9 = vector.extract_strided_slice %1 {offsets = [1, 0, 0], sizes = [8, 24, 4], strides = [1, 1, 1]} : vector<10x24x4xf32> to vector<8x24x4xf32>
    %10 = vector.shape_cast %9 : vector<8x24x4xf32> to vector<192x4xf32>
    %c1 = arith.constant 1 : index
    %c0_7 = arith.constant 0 : index
    %c0_8 = arith.constant 0 : index
    %11 = vector.load %arg2[%c1, %c0_7, %c0_8] : memref<3x4x384xf32, #tpu.memory_space<vmem>>, vector<1x4x384xf32>
    %12 = vector.shape_cast %11 : vector<1x4x384xf32> to vector<4x384xf32>
    %cst_9 = arith.constant dense<0.000000e+00> : vector<192x384xf32>
    %13 = tpu.matmul %10, %12, %cst_9 {dimension_numbers = #tpu.dot_dimension_numbers<[1], [0], [0], [1], [0, 0, 1, 1], [], []>} : vector<192x4xf32>, vector<4x384xf32>, vector<192x384xf32> -> vector<192x384xf32>
    %14 = arith.addf %8, %13 : vector<192x384xf32>
    %15 = vector.extract_strided_slice %1 {offsets = [2, 0, 0], sizes = [8, 24, 4], strides = [1, 1, 1]} : vector<10x24x4xf32> to vector<8x24x4xf32>
    %16 = vector.shape_cast %15 : vector<8x24x4xf32> to vector<192x4xf32>
    %c2 = arith.constant 2 : index
    %c0_10 = arith.constant 0 : index
    %c0_11 = arith.constant 0 : index
    %17 = vector.load %arg2[%c2, %c0_10, %c0_11] : memref<3x4x384xf32, #tpu.memory_space<vmem>>, vector<1x4x384xf32>
    %18 = vector.shape_cast %17 : vector<1x4x384xf32> to vector<4x384xf32>
    %cst_12 = arith.constant dense<0.000000e+00> : vector<192x384xf32>
    %19 = tpu.matmul %16, %18, %cst_12 {dimension_numbers = #tpu.dot_dimension_numbers<[1], [0], [0], [1], [0, 0, 1, 1], [], []>} : vector<192x4xf32>, vector<4x384xf32>, vector<192x384xf32> -> vector<192x384xf32>
    %20 = arith.addf %14, %19 : vector<192x384xf32>
    %21 = vector.shape_cast %20 : vector<192x384xf32> to vector<8x24x384xf32>
    %22 = vector.extract_strided_slice %21 {offsets = [0, 0, 0], sizes = [8, 16, 128], strides = [1, 1, 1]} : vector<8x24x384xf32> to vector<8x16x128xf32>
    %23 = vector.extract_strided_slice %21 {offsets = [0, 1, 128], sizes = [8, 16, 128], strides = [1, 1, 1]} : vector<8x24x384xf32> to vector<8x16x128xf32>
    %24 = arith.addf %22, %23 : vector<8x16x128xf32>
    %25 = vector.extract_strided_slice %21 {offsets = [0, 2, 256], sizes = [8, 16, 128], strides = [1, 1, 1]} : vector<8x24x384xf32> to vector<8x16x128xf32>
    %26 = arith.addf %24, %25 : vector<8x16x128xf32>
    %c0_13 = arith.constant 0 : index
    %c0_14 = arith.constant 0 : index
    %c0_15 = arith.constant 0 : index
    %c0_16 = arith.constant 0 : index
    %27 = vector.load %arg3[%c0_13, %c0_14, %c0_15, %c0_16] : memref<1x8x16x128xf32, #tpu.memory_space<vmem>>, vector<1x8x16x128xf32>
    %28 = vector.shape_cast %27 : vector<1x8x16x128xf32> to vector<8x16x128xf32>
    %29 = vector.shape_cast %26 : vector<8x16x128xf32> to vector<1x8x16x128xf32>
    tpu.vector_store %arg3[%c0_13, %c0_14, %c0_15, %c0_16], %29 {strides = array<i32>} : memref<1x8x16x128xf32, #tpu.memory_space<vmem>>, vector<1x8x16x128xf32>,
    %cst_17 = arith.constant dense<0.000000e+00> : vector<128xf32>
    %30 = vector.multi_reduction <add>, %26, %cst_17 [0, 1] : vector<8x16x128xf32> to vector<128xf32>
    %31 = vector.shape_cast %30 : vector<128xf32> to vector<1x1x128xf32>
    %c0_18 = arith.constant 0 : index
    %c0_19 = arith.constant 0 : index
    %c0_20 = arith.constant 0 : index
    %32 = vector.load %arg4[%c0_18, %c0_19, %c0_20] : memref<1x8x128xf32, #tpu.memory_space<vmem>>, vector<1x1x128xf32>
    tpu.vector_store %arg4[%c0_18, %c0_19, %c0_20], %31 {strides = array<i32>} : memref<1x8x128xf32, #tpu.memory_space<vmem>>, vector<1x1x128xf32>,
    %33 = arith.mulf %26, %26 : vector<8x16x128xf32>
    %cst_21 = arith.constant dense<0.000000e+00> : vector<128xf32>
    %34 = vector.multi_reduction <add>, %33, %cst_21 [0, 1] : vector<8x16x128xf32> to vector<128xf32>
    %35 = vector.shape_cast %34 : vector<128xf32> to vector<1x1x128xf32>
    %c0_22 = arith.constant 0 : index
    %c1_23 = arith.constant 1 : index
    %c0_24 = arith.constant 0 : index
    %36 = vector.load %arg4[%c0_22, %c1_23, %c0_24] : memref<1x8x128xf32, #tpu.memory_space<vmem>>, vector<1x1x128xf32>
    tpu.vector_store %arg4[%c0_22, %c1_23, %c0_24], %35 {strides = array<i32>} : memref<1x8x128xf32, #tpu.memory_space<vmem>>, vector<1x1x128xf32>,
    return
  }
  func.func @transform_0(%arg0: i32) -> (i32, i32, i32, i32) {
    %c0_i32 = arith.constant 0 : i32
    %c0_i32_0 = arith.constant 0 : i32
    %c0_i32_1 = arith.constant 0 : i32
    %c0_i32_2 = arith.constant 0 : i32
    return %arg0, %c0_i32, %c0_i32_0, %c0_i32_1 : i32, i32, i32, i32
  }
  func.func @transform_1(%arg0: i32) -> (i32, i32, i32) {
    %c0_i32 = arith.constant 0 : i32
    %c0_i32_0 = arith.constant 0 : i32
    %c0_i32_1 = arith.constant 0 : i32
    %c0_i32_2 = arith.constant 0 : i32
    return %c0_i32, %c0_i32_0, %c0_i32_1 : i32, i32, i32
  }
  func.func @transform_2(%arg0: i32) -> (i32, i32, i32, i32) {
    %c0_i32 = arith.constant 0 : i32
    %c0_i32_0 = arith.constant 0 : i32
    %c0_i32_1 = arith.constant 0 : i32
    %c0_i32_2 = arith.constant 0 : i32
    return %arg0, %c0_i32, %c0_i32_0, %c0_i32_1 : i32, i32, i32, i32
  }
  func.func @transform_3(%arg0: i32) -> (i32, i32, i32) {
    %c0_i32 = arith.constant 0 : i32
    %c0_i32_0 = arith.constant 0 : i32
    %c0_i32_1 = arith.constant 0 : i32
    return %arg0, %c0_i32, %c0_i32_0 : i32, i32, i32
  }
}

module attributes {stable_mosaic.version = 11 : i64} {
  func.func @kernel(%arg0: i32, %arg1: memref<1x10x24x128xf32, #tpu.memory_space<vmem>>, %arg2: memref<1x128xf32, #tpu.memory_space<vmem>>, %arg3: memref<1x128xf32, #tpu.memory_space<vmem>>, %arg4: memref<3x128x384xf32, #tpu.memory_space<vmem>>, %arg5: memref<1x8x16x128xf32, #tpu.memory_space<vmem>>, %arg6: memref<1x8x128xf32, #tpu.memory_space<vmem>>) attributes {dimension_semantics = [#tpu.dimension_semantics<parallel>], iteration_bounds = array<i64: 4>, scalar_prefetch = 0 : i64, scratch_operands = 0 : i64, tpu.core_type = #tpu.core_type<tc>, window_params = [{transform_indices = @transform_0, window_bounds = array<i64: 1, 10, 24, 128>}, {pipeline_mode = #tpu.pipeline_mode<synchronous>, transform_indices = @transform_1, window_bounds = array<i64: 1, 128>}, {pipeline_mode = #tpu.pipeline_mode<synchronous>, transform_indices = @transform_2, window_bounds = array<i64: 1, 128>}, {pipeline_mode = #tpu.pipeline_mode<synchronous>, transform_indices = @transform_3, window_bounds = array<i64: 3, 128, 384>}, {transform_indices = @transform_4, window_bounds = array<i64: 1, 8, 16, 128>}, {transform_indices = @transform_5, window_bounds = array<i64: 1, 8, 128>}]} {
    %c2_i32 = arith.constant 2 : i32
    %c0_i32 = arith.constant 0 : i32
    %0 = arith.cmpi eq, %c2_i32, %c0_i32 : i32
    %c1_i32 = arith.constant 1 : i32
    %1 = arith.select %0, %c1_i32, %c2_i32 : i32
    %2 = arith.remsi %arg0, %1 : i32
    %c0_i32_0 = arith.constant 0 : i32
    %3 = arith.cmpi ne, %2, %c0_i32_0 : i32
    %c0_i32_1 = arith.constant 0 : i32
    %4 = arith.cmpi slt, %2, %c0_i32_1 : i32
    %c0_i32_2 = arith.constant 0 : i32
    %5 = arith.cmpi slt, %1, %c0_i32_2 : i32
    %6 = arith.xori %4, %5 : i1
    %7 = arith.andi %6, %3 : i1
    %8 = arith.addi %2, %1 : i32
    %9 = arith.select %7, %8, %2 : i32
    %c0 = arith.constant 0 : index
    %c0_3 = arith.constant 0 : index
    %c0_4 = arith.constant 0 : index
    %c0_5 = arith.constant 0 : index
    %10 = vector.load %arg1[%c0, %c0_3, %c0_4, %c0_5] : memref<1x10x24x128xf32, #tpu.memory_space<vmem>>, vector<1x10x24x128xf32>
    %11 = vector.shape_cast %10 : vector<1x10x24x128xf32> to vector<10x24x128xf32>
    %c0_6 = arith.constant 0 : index
    %c0_7 = arith.constant 0 : index
    %12 = vector.load %arg2[%c0_6, %c0_7] : memref<1x128xf32, #tpu.memory_space<vmem>>, vector<1x128xf32>
    %13 = vector.shape_cast %12 : vector<1x128xf32> to vector<1x1x128xf32>
    %14 = vector.broadcast %13 : vector<1x1x128xf32> to vector<10x24x128xf32>
    %15 = arith.mulf %11, %14 : vector<10x24x128xf32>
    %c0_8 = arith.constant 0 : index
    %c0_9 = arith.constant 0 : index
    %16 = vector.load %arg3[%c0_8, %c0_9] : memref<1x128xf32, #tpu.memory_space<vmem>>, vector<1x128xf32>
    %17 = vector.shape_cast %16 : vector<1x128xf32> to vector<1x1x128xf32>
    %18 = vector.broadcast %17 : vector<1x1x128xf32> to vector<10x24x128xf32>
    %19 = arith.addf %15, %18 : vector<10x24x128xf32>
    %cst = arith.constant 0.000000e+00 : f32
    %20 = vector.broadcast %cst : f32 to vector<10x24x128xf32>
    %21 = arith.cmpf ogt, %19, %20 : vector<10x24x128xf32>
    %cst_10 = arith.constant 2.000000e-01 : f32
    %22 = vector.broadcast %cst_10 : f32 to vector<10x24x128xf32>
    %23 = arith.mulf %22, %19 : vector<10x24x128xf32>
    %24 = arith.select %21, %19, %23 : vector<10x24x128xi1>, vector<10x24x128xf32>
    %25 = tpu.iota {dimensions = array<i32: 0>} : vector<10x24x1xi32>
    %26 = tpu.iota {dimensions = array<i32: 1>} : vector<10x24x1xi32>
    %c1_i32_11 = arith.constant 1 : i32
    %27 = vector.broadcast %c1_i32_11 : i32 to vector<10x24x1xi32>
    %28 = arith.cmpi sge, %26, %27 : vector<10x24x1xi32>
    %c16_i32 = arith.constant 16 : i32
    %29 = vector.broadcast %c16_i32 : i32 to vector<10x24x1xi32>
    %30 = arith.cmpi sle, %26, %29 : vector<10x24x1xi32>
    %31 = arith.andi %28, %30 : vector<10x24x1xi1>
    %c1_i32_12 = arith.constant 1 : i32
    %32 = vector.broadcast %c1_i32_12 : i32 to vector<10x24x1xi32>
    %33 = arith.cmpi sge, %25, %32 : vector<10x24x1xi32>
    %c0_i32_13 = arith.constant 0 : i32
    %34 = arith.cmpi sgt, %9, %c0_i32_13 : i32
    %35 = vector.broadcast %34 : i1 to vector<10x24x1xi1>
    %36 = arith.ori %33, %35 : vector<10x24x1xi1>
    %37 = arith.andi %31, %36 : vector<10x24x1xi1>
    %c8_i32 = arith.constant 8 : i32
    %38 = vector.broadcast %c8_i32 : i32 to vector<10x24x1xi32>
    %39 = arith.cmpi sle, %25, %38 : vector<10x24x1xi32>
    %c1_i32_14 = arith.constant 1 : i32
    %40 = arith.cmpi slt, %9, %c1_i32_14 : i32
    %41 = vector.broadcast %40 : i1 to vector<10x24x1xi1>
    %42 = arith.ori %39, %41 : vector<10x24x1xi1>
    %43 = arith.andi %37, %42 : vector<10x24x1xi1>
    %cst_15 = arith.constant 0.000000e+00 : f32
    %44 = vector.shape_cast %43 : vector<10x24x1xi1> to vector<10x24x1xi1>
    %45 = vector.broadcast %44 : vector<10x24x1xi1> to vector<10x24x128xi1>
    %46 = vector.broadcast %cst_15 : f32 to vector<10x24x128xf32>
    %47 = arith.select %45, %24, %46 : vector<10x24x128xi1>, vector<10x24x128xf32>
    %cst_16 = arith.constant 0.000000e+00 : f32
    %48 = vector.broadcast %cst_16 : f32 to vector<192x384xf32>
    %49 = vector.extract_strided_slice %47 {offsets = [0, 0, 0], sizes = [8, 24, 128], strides = [1, 1, 1]} : vector<10x24x128xf32> to vector<8x24x128xf32>
    %50 = vector.shape_cast %49 : vector<8x24x128xf32> to vector<192x128xf32>
    %c0_17 = arith.constant 0 : index
    %c0_18 = arith.constant 0 : index
    %c0_19 = arith.constant 0 : index
    %51 = vector.load %arg4[%c0_17, %c0_18, %c0_19] : memref<3x128x384xf32, #tpu.memory_space<vmem>>, vector<1x128x384xf32>
    %52 = vector.shape_cast %51 : vector<1x128x384xf32> to vector<128x384xf32>
    %cst_20 = arith.constant dense<0.000000e+00> : vector<192x384xf32>
    %53 = tpu.matmul %50, %52, %cst_20 {dimension_numbers = #tpu.dot_dimension_numbers<[1], [0], [0], [1], [0, 0, 1, 1], [], []>} : vector<192x128xf32>, vector<128x384xf32>, vector<192x384xf32> -> vector<192x384xf32>
    %54 = arith.addf %48, %53 : vector<192x384xf32>
    %55 = vector.extract_strided_slice %47 {offsets = [1, 0, 0], sizes = [8, 24, 128], strides = [1, 1, 1]} : vector<10x24x128xf32> to vector<8x24x128xf32>
    %56 = vector.shape_cast %55 : vector<8x24x128xf32> to vector<192x128xf32>
    %c1 = arith.constant 1 : index
    %c0_21 = arith.constant 0 : index
    %c0_22 = arith.constant 0 : index
    %57 = vector.load %arg4[%c1, %c0_21, %c0_22] : memref<3x128x384xf32, #tpu.memory_space<vmem>>, vector<1x128x384xf32>
    %58 = vector.shape_cast %57 : vector<1x128x384xf32> to vector<128x384xf32>
    %cst_23 = arith.constant dense<0.000000e+00> : vector<192x384xf32>
    %59 = tpu.matmul %56, %58, %cst_23 {dimension_numbers = #tpu.dot_dimension_numbers<[1], [0], [0], [1], [0, 0, 1, 1], [], []>} : vector<192x128xf32>, vector<128x384xf32>, vector<192x384xf32> -> vector<192x384xf32>
    %60 = arith.addf %54, %59 : vector<192x384xf32>
    %61 = vector.extract_strided_slice %47 {offsets = [2, 0, 0], sizes = [8, 24, 128], strides = [1, 1, 1]} : vector<10x24x128xf32> to vector<8x24x128xf32>
    %62 = vector.shape_cast %61 : vector<8x24x128xf32> to vector<192x128xf32>
    %c2 = arith.constant 2 : index
    %c0_24 = arith.constant 0 : index
    %c0_25 = arith.constant 0 : index
    %63 = vector.load %arg4[%c2, %c0_24, %c0_25] : memref<3x128x384xf32, #tpu.memory_space<vmem>>, vector<1x128x384xf32>
    %64 = vector.shape_cast %63 : vector<1x128x384xf32> to vector<128x384xf32>
    %cst_26 = arith.constant dense<0.000000e+00> : vector<192x384xf32>
    %65 = tpu.matmul %62, %64, %cst_26 {dimension_numbers = #tpu.dot_dimension_numbers<[1], [0], [0], [1], [0, 0, 1, 1], [], []>} : vector<192x128xf32>, vector<128x384xf32>, vector<192x384xf32> -> vector<192x384xf32>
    %66 = arith.addf %60, %65 : vector<192x384xf32>
    %67 = vector.shape_cast %66 : vector<192x384xf32> to vector<8x24x384xf32>
    %68 = vector.extract_strided_slice %67 {offsets = [0, 0, 0], sizes = [8, 16, 128], strides = [1, 1, 1]} : vector<8x24x384xf32> to vector<8x16x128xf32>
    %69 = vector.extract_strided_slice %67 {offsets = [0, 1, 128], sizes = [8, 16, 128], strides = [1, 1, 1]} : vector<8x24x384xf32> to vector<8x16x128xf32>
    %70 = arith.addf %68, %69 : vector<8x16x128xf32>
    %71 = vector.extract_strided_slice %67 {offsets = [0, 2, 256], sizes = [8, 16, 128], strides = [1, 1, 1]} : vector<8x24x384xf32> to vector<8x16x128xf32>
    %72 = arith.addf %70, %71 : vector<8x16x128xf32>
    %c0_27 = arith.constant 0 : index
    %c0_28 = arith.constant 0 : index
    %c0_29 = arith.constant 0 : index
    %c0_30 = arith.constant 0 : index
    %73 = vector.load %arg5[%c0_27, %c0_28, %c0_29, %c0_30] : memref<1x8x16x128xf32, #tpu.memory_space<vmem>>, vector<1x8x16x128xf32>
    %74 = vector.shape_cast %73 : vector<1x8x16x128xf32> to vector<8x16x128xf32>
    %75 = vector.shape_cast %72 : vector<8x16x128xf32> to vector<1x8x16x128xf32>
    tpu.vector_store %arg5[%c0_27, %c0_28, %c0_29, %c0_30], %75 {strides = array<i32>} : memref<1x8x16x128xf32, #tpu.memory_space<vmem>>, vector<1x8x16x128xf32>,
    %cst_31 = arith.constant dense<0.000000e+00> : vector<128xf32>
    %76 = vector.multi_reduction <add>, %72, %cst_31 [0, 1] : vector<8x16x128xf32> to vector<128xf32>
    %77 = vector.shape_cast %76 : vector<128xf32> to vector<1x1x128xf32>
    %c0_32 = arith.constant 0 : index
    %c0_33 = arith.constant 0 : index
    %c0_34 = arith.constant 0 : index
    %78 = vector.load %arg6[%c0_32, %c0_33, %c0_34] : memref<1x8x128xf32, #tpu.memory_space<vmem>>, vector<1x1x128xf32>
    tpu.vector_store %arg6[%c0_32, %c0_33, %c0_34], %77 {strides = array<i32>} : memref<1x8x128xf32, #tpu.memory_space<vmem>>, vector<1x1x128xf32>,
    %79 = arith.mulf %72, %72 : vector<8x16x128xf32>
    %cst_35 = arith.constant dense<0.000000e+00> : vector<128xf32>
    %80 = vector.multi_reduction <add>, %79, %cst_35 [0, 1] : vector<8x16x128xf32> to vector<128xf32>
    %81 = vector.shape_cast %80 : vector<128xf32> to vector<1x1x128xf32>
    %c0_36 = arith.constant 0 : index
    %c1_37 = arith.constant 1 : index
    %c0_38 = arith.constant 0 : index
    %82 = vector.load %arg6[%c0_36, %c1_37, %c0_38] : memref<1x8x128xf32, #tpu.memory_space<vmem>>, vector<1x1x128xf32>
    tpu.vector_store %arg6[%c0_36, %c1_37, %c0_38], %81 {strides = array<i32>} : memref<1x8x128xf32, #tpu.memory_space<vmem>>, vector<1x1x128xf32>,
    return
  }
  func.func @transform_0(%arg0: i32) -> (i32, i32, i32, i32) {
    %c0_i32 = arith.constant 0 : i32
    %c0_i32_0 = arith.constant 0 : i32
    %c0_i32_1 = arith.constant 0 : i32
    %c0_i32_2 = arith.constant 0 : i32
    return %arg0, %c0_i32, %c0_i32_0, %c0_i32_1 : i32, i32, i32, i32
  }
  func.func @transform_1(%arg0: i32) -> (i32, i32) {
    %c0_i32 = arith.constant 0 : i32
    %c0_i32_0 = arith.constant 0 : i32
    %c0_i32_1 = arith.constant 0 : i32
    return %c0_i32, %c0_i32_0 : i32, i32
  }
  func.func @transform_2(%arg0: i32) -> (i32, i32) {
    %c0_i32 = arith.constant 0 : i32
    %c0_i32_0 = arith.constant 0 : i32
    %c0_i32_1 = arith.constant 0 : i32
    return %c0_i32, %c0_i32_0 : i32, i32
  }
  func.func @transform_3(%arg0: i32) -> (i32, i32, i32) {
    %c0_i32 = arith.constant 0 : i32
    %c0_i32_0 = arith.constant 0 : i32
    %c0_i32_1 = arith.constant 0 : i32
    %c0_i32_2 = arith.constant 0 : i32
    return %c0_i32, %c0_i32_0, %c0_i32_1 : i32, i32, i32
  }
  func.func @transform_4(%arg0: i32) -> (i32, i32, i32, i32) {
    %c0_i32 = arith.constant 0 : i32
    %c0_i32_0 = arith.constant 0 : i32
    %c0_i32_1 = arith.constant 0 : i32
    %c0_i32_2 = arith.constant 0 : i32
    return %arg0, %c0_i32, %c0_i32_0, %c0_i32_1 : i32, i32, i32, i32
  }
  func.func @transform_5(%arg0: i32) -> (i32, i32, i32) {
    %c0_i32 = arith.constant 0 : i32
    %c0_i32_0 = arith.constant 0 : i32
    %c0_i32_1 = arith.constant 0 : i32
    return %arg0, %c0_i32, %c0_i32_0 : i32, i32, i32
  }
}

module attributes {stable_mosaic.version = 11 : i64} {
  func.func @_bn_lrelu_kernel(%arg0: i32, %arg1: memref<1x8x16x128xf32, #tpu.memory_space<vmem>>, %arg2: memref<1x128xf32, #tpu.memory_space<vmem>>, %arg3: memref<1x128xf32, #tpu.memory_space<vmem>>, %arg4: memref<1x8x16x128xf32, #tpu.memory_space<vmem>>) attributes {dimension_semantics = [#tpu.dimension_semantics<parallel>], iteration_bounds = array<i64: 4>, scalar_prefetch = 0 : i64, scratch_operands = 0 : i64, tpu.core_type = #tpu.core_type<tc>, window_params = [{transform_indices = @transform_0, window_bounds = array<i64: 1, 8, 16, 128>}, {pipeline_mode = #tpu.pipeline_mode<synchronous>, transform_indices = @transform_1, window_bounds = array<i64: 1, 128>}, {pipeline_mode = #tpu.pipeline_mode<synchronous>, transform_indices = @transform_2, window_bounds = array<i64: 1, 128>}, {transform_indices = @transform_3, window_bounds = array<i64: 1, 8, 16, 128>}]} {
    %c0 = arith.constant 0 : index
    %c0_0 = arith.constant 0 : index
    %c0_1 = arith.constant 0 : index
    %c0_2 = arith.constant 0 : index
    %0 = vector.load %arg1[%c0, %c0_0, %c0_1, %c0_2] : memref<1x8x16x128xf32, #tpu.memory_space<vmem>>, vector<1x8x16x128xf32>
    %1 = vector.shape_cast %0 : vector<1x8x16x128xf32> to vector<8x16x128xf32>
    %c0_3 = arith.constant 0 : index
    %c0_4 = arith.constant 0 : index
    %2 = vector.load %arg2[%c0_3, %c0_4] : memref<1x128xf32, #tpu.memory_space<vmem>>, vector<1x128xf32>
    %3 = vector.shape_cast %2 : vector<1x128xf32> to vector<1x1x128xf32>
    %4 = vector.broadcast %3 : vector<1x1x128xf32> to vector<8x16x128xf32>
    %5 = arith.mulf %1, %4 : vector<8x16x128xf32>
    %c0_5 = arith.constant 0 : index
    %c0_6 = arith.constant 0 : index
    %6 = vector.load %arg3[%c0_5, %c0_6] : memref<1x128xf32, #tpu.memory_space<vmem>>, vector<1x128xf32>
    %7 = vector.shape_cast %6 : vector<1x128xf32> to vector<1x1x128xf32>
    %8 = vector.broadcast %7 : vector<1x1x128xf32> to vector<8x16x128xf32>
    %9 = arith.addf %5, %8 : vector<8x16x128xf32>
    %cst = arith.constant 0.000000e+00 : f32
    %10 = vector.broadcast %cst : f32 to vector<8x16x128xf32>
    %11 = arith.cmpf ogt, %9, %10 : vector<8x16x128xf32>
    %cst_7 = arith.constant 2.000000e-01 : f32
    %12 = vector.broadcast %cst_7 : f32 to vector<8x16x128xf32>
    %13 = arith.mulf %12, %9 : vector<8x16x128xf32>
    %14 = arith.select %11, %9, %13 : vector<8x16x128xi1>, vector<8x16x128xf32>
    %c0_8 = arith.constant 0 : index
    %c0_9 = arith.constant 0 : index
    %c0_10 = arith.constant 0 : index
    %c0_11 = arith.constant 0 : index
    %15 = vector.load %arg4[%c0_8, %c0_9, %c0_10, %c0_11] : memref<1x8x16x128xf32, #tpu.memory_space<vmem>>, vector<1x8x16x128xf32>
    %16 = vector.shape_cast %15 : vector<1x8x16x128xf32> to vector<8x16x128xf32>
    %17 = vector.shape_cast %14 : vector<8x16x128xf32> to vector<1x8x16x128xf32>
    tpu.vector_store %arg4[%c0_8, %c0_9, %c0_10, %c0_11], %17 {strides = array<i32>} : memref<1x8x16x128xf32, #tpu.memory_space<vmem>>, vector<1x8x16x128xf32>,
    return
  }
  func.func @transform_0(%arg0: i32) -> (i32, i32, i32, i32) {
    %c0_i32 = arith.constant 0 : i32
    %c0_i32_0 = arith.constant 0 : i32
    %c0_i32_1 = arith.constant 0 : i32
    %c0_i32_2 = arith.constant 0 : i32
    return %arg0, %c0_i32, %c0_i32_0, %c0_i32_1 : i32, i32, i32, i32
  }
  func.func @transform_1(%arg0: i32) -> (i32, i32) {
    %c0_i32 = arith.constant 0 : i32
    %c0_i32_0 = arith.constant 0 : i32
    %c0_i32_1 = arith.constant 0 : i32
    return %c0_i32, %c0_i32_0 : i32, i32
  }
  func.func @transform_2(%arg0: i32) -> (i32, i32) {
    %c0_i32 = arith.constant 0 : i32
    %c0_i32_0 = arith.constant 0 : i32
    %c0_i32_1 = arith.constant 0 : i32
    return %c0_i32, %c0_i32_0 : i32, i32
  }
  func.func @transform_3(%arg0: i32) -> (i32, i32, i32, i32) {
    %c0_i32 = arith.constant 0 : i32
    %c0_i32_0 = arith.constant 0 : i32
    %c0_i32_1 = arith.constant 0 : i32
    %c0_i32_2 = arith.constant 0 : i32
    return %arg0, %c0_i32, %c0_i32_0, %c0_i32_1 : i32, i32, i32, i32
  }
}

</mosaic_0001>

<llo_original>
// kernel: _lambda_.3
$region0: #{_lambda_.3}
  #allocation0 [shape = 'u32[]', space=smem, size = 0x4, offset = 0x4, fixed_abs, tag = 'smem constant byte address 0x4 - core index']
  #allocation1 [shape = 'u32[144,128]{1,0:T(1,128)}', space=vmem, size = 0x12000, scoped, tag = 'internal scratch']
  %s0 = inlined_call_operand.vmem [shape: f32[4,10,24,4], index: 0, kind: input, shape index: {}]
  %s1 = inlined_call_operand.vmem [shape: f32[3,4,384], index: 1, kind: input, shape index: {}]
  %s2 = inlined_call_operand.vmem [shape: f32[4,8,16,128], index: 2, kind: output, shape index: {0}]
  %s3 = inlined_call_operand.vmem [shape: f32[4,8,128], index: 3, kind: output, shape index: {1}]
  %4 = xla_tuple %s2, %s3
  %s5 = sld [smem:[#allocation0]]
  $region49: #{_lambda_.3} parent=0
    _
  %s7 = ssub.s32 1, %s5
  %s8 = scalar_select 0, %s7, %s5
  loop: start=0, step=1, limit=6
  $region2: #{_lambda_.3} parent=0 // loop_pre_header
    _
  $region3: #{_lambda_.3} parent=0 // loop_header
    %s10 = sphi 0, %s14
    %p11 = scmp.ge.s32.totalorder %s10, 6
    %s20 = sphi 0, %s22
    %s23 = sphi 0, %s20
    %s24 = sphi 0, %s23
    %s40 = sphi 0, %s24
    %s44 = sphi 0, %s44
    %s46 = sphi 0, %s44
    %s47 = sphi 0, %s46
    %s61 = sphi 0, %s47
    %s67 = sphi 0, %s69
    %s70 = sphi 0, %s67
    %s71 = sphi 0, %s70
    %s87 = sphi 0, %s71
    %s93 = sphi 0, %s95
    %s96 = sphi 0, %s93
    %s97 = sphi 0, %s96
    %s113 = sphi 0, %s97
  $region4: #{_lambda_.3} parent=0 // loop_header_branch
    %13 = sbr.rel (%p11) target = $region8
  $region5: #{_lambda_.3} parent=0 // loop_body
    %s15 = ssub.s32 %s10, 1
    %s16 = ssub.s32 %s10, 2
    %s17 = sadd.s32 %s10, 1
    %s18 = ssub.s32 %s10, %s17
    %p19 = scmp.eq.s32.totalorder %s18, 0
    %s21 = sadd.s32 %s20, 1
    %s22 = scalar_select %p19, %s20, %s21
    %p25 = pneg %p19
    %p26 = scmp.eq.s32.totalorder %s10, 3
    %p27 = por %p25, %p26
    %p28 = scmp.ne.s32.totalorder %s20, %s23
    %p29 = scmp.eq.s32.totalorder %s10, 0
    %p30 = por %p28, %p29
    %p31 = scmp.ne.s32.totalorder %s20, %s23
    %p32 = scmp.eq.s32.totalorder %s15, 3
    %p33 = por %p31, %p32
    %p34 = scmp.ne.s32.totalorder %s23, %s24
    %p35 = scmp.eq.s32.totalorder %s15, 0
    %p36 = por %p34, %p35
    %p37 = scmp.ne.s32.totalorder %s23, %s24
    %p38 = scmp.eq.s32.totalorder %s16, 3
    %p39 = por %p37, %p38
    %p41 = scmp.ne.s32.totalorder %s24, %s40
    %p42 = scmp.eq.s32.totalorder %s16, 0
    %p43 = por %p41, %p42
    %s45 = sadd.s32 %s44, 1
    %p48 = scmp.eq.s32.totalorder %s10, 3
    %p49 = scmp.ne.s32.totalorder %s44, %s46
    %p50 = scmp.eq.s32.totalorder %s10, 0
    %p51 = por %p49, %p50
    %p52 = scmp.ne.s32.totalorder %s44, %s46
    %p53 = scmp.eq.s32.totalorder %s15, 3
    %p54 = por %p52, %p53
    %p55 = scmp.ne.s32.totalorder %s46, %s47
    %p56 = scmp.eq.s32.totalorder %s15, 0
    %p57 = por %p55, %p56
    %p58 = scmp.ne.s32.totalorder %s46, %s47
    %p59 = scmp.eq.s32.totalorder %s16, 3
    %p60 = por %p58, %p59
    %p62 = scmp.ne.s32.totalorder %s47, %s61
    %p63 = scmp.eq.s32.totalorder %s16, 0
    %p64 = por %p62, %p63
    %s65 = ssub.s32 %s10, %s17
    %p66 = scmp.eq.s32.totalorder %s65, 0
    %s68 = sadd.s32 %s67, 1
    %s69 = scalar_select %p66, %s67, %s68
    %p72 = pneg %p66
    %p73 = scmp.eq.s32.totalorder %s10, 3
    %p74 = por %p72, %p73
    %p75 = scmp.ne.s32.totalorder %s67, %s70
    %p76 = scmp.eq.s32.totalorder %s10, 0
    %p77 = por %p75, %p76
    %p78 = scmp.ne.s32.totalorder %s67, %s70
    %p79 = scmp.eq.s32.totalorder %s15, 3
    %p80 = por %p78, %p79
    %p81 = scmp.ne.s32.totalorder %s70, %s71
    %p82 = scmp.eq.s32.totalorder %s15, 0
    %p83 = por %p81, %p82
    %p84 = scmp.ne.s32.totalorder %s70, %s71
    %p85 = scmp.eq.s32.totalorder %s16, 3
    %p86 = por %p84, %p85
    %p88 = scmp.ne.s32.totalorder %s71, %s87
    %p89 = scmp.eq.s32.totalorder %s16, 0
    %p90 = por %p88, %p89
    %s91 = ssub.s32 %s10, %s17
    %p92 = scmp.eq.s32.totalorder %s91, 0
    %s94 = sadd.s32 %s93, 1
    %s95 = scalar_select %p92, %s93, %s94
    %p98 = pneg %p92
    %p99 = scmp.eq.s32.totalorder %s10, 3
    %p100 = por %p98, %p99
    %p101 = scmp.ne.s32.totalorder %s93, %s96
    %p102 = scmp.eq.s32.totalorder %s10, 0
    %p103 = por %p101, %p102
    %p104 = scmp.ne.s32.totalorder %s93, %s96
    %p105 = scmp.eq.s32.totalorder %s15, 3
    %p106 = por %p104, %p105
    %p107 = scmp.ne.s32.totalorder %s96, %s97
    %p108 = scmp.eq.s32.totalorder %s15, 0
    %p109 = por %p107, %p108
    %p110 = scmp.ne.s32.totalorder %s96, %s97
    %p111 = scmp.eq.s32.totalorder %s16, 3
    %p112 = por %p110, %p111
    %p114 = scmp.ne.s32.totalorder %s97, %s113
    %p115 = scmp.eq.s32.totalorder %s16, 0
    %p116 = por %p114, %p115
    %p117 = scmp.le.s32.totalorder 1, %s10
    %p118 = scmp.lt.s32.totalorder %s10, 5
    %p119 = pnand %p117, %p118
    %p120 = pneg %p119
    // Predicated region
    $region9: #{_lambda_.3} parent=5 // pred_check
      _
    $region10: #{_lambda_.3} parent=5 // pred_check_branch
      %122 = sbr.rel (%p119) target = $region12
    $region11: #{_lambda_.3} parent=5 // pred_region
      %s123 = ssub.s32 %s10, 1
      // Predicated region
      $region13: #{_lambda_.3} parent=11 // pred_check
        %p124 = pneg %p57
      $region14: #{_lambda_.3} parent=11 // pred_check_branch
        %126 = sbr.rel (%p124) target = $region16
      $region15: #{_lambda_.3} parent=11 // pred_region
        _
      $region16: #{_lambda_.3} parent=11 // pred_fallthru
        _
    $region12: #{_lambda_.3} parent=5 // pred_fallthru
      _
    %p127 = scmp.lt.s32.totalorder %s10, 4
    // Predicated region
    $region17: #{_lambda_.3} parent=5 // pred_check
      %p128 = pneg %p127
    $region18: #{_lambda_.3} parent=5 // pred_check_branch
      %130 = sbr.rel (%p128) target = $region20
    $region19: #{_lambda_.3} parent=5 // pred_region
      // Predicated region
      $region21: #{_lambda_.3} parent=19 // pred_check
        %p131 = pneg %p30
      $region22: #{_lambda_.3} parent=19 // pred_check_branch
        %133 = sbr.rel (%p131) target = $region24
      $region23: #{_lambda_.3} parent=19 // pred_region
        %p134 = scmp.lt.s32.totalorder %s10, 3
        %s135 = scalar_select %p134, %s10, 3
        %s136 = smul.addr %s135, 30
        %s137 = smul.addr %s136, 8
        %s138 = scalar_lea.vmem %s0, %s137
      $region24: #{_lambda_.3} parent=19 // pred_fallthru
        _
    $region20: #{_lambda_.3} parent=5 // pred_fallthru
      _
    %p139 = scmp.le.s32.totalorder 1, %s10
    %p140 = scmp.lt.s32.totalorder %s10, 5
    %p141 = pnand %p139, %p140
    %p142 = pneg %p141
    // Predicated region
    $region25: #{_lambda_.3} parent=5 // pred_check
      _
    $region26: #{_lambda_.3} parent=5 // pred_check_branch
      %144 = sbr.rel (%p141) target = $region28
    $region27: #{_lambda_.3} parent=5 // pred_region
      %s145 = ssub.s32 %s10, 1
      %p146 = scmp.lt.s32.totalorder %s15, 3
      %s147 = scalar_select %p146, %s15, 3
      %s148 = smul.addr %s147, 30
      %s149 = smul.addr %s148, 8
      %s150 = scalar_lea.vmem %s0, %s149
      %p151 = pneg %p36
      %p152 = pneg %p33
      %p153 = pneg %p57
      %p154 = pneg %p54
      %p155 = pneg %p83
      %p156 = pneg %p80
      %p157 = scmp.lt.s32.totalorder %s15, 3
      %s158 = scalar_select %p157, %s15, 3
      %s159 = smul.addr %s158, 16
      %s160 = smul.addr %s159, 8
      %s161 = scalar_lea.vmem %s2, %s160
      %p162 = pneg %p109
      %p163 = pneg %p106
      %p164 = scmp.lt.s32.totalorder %s15, 3
      %s165 = scalar_select %p164, %s15, 3
      %s166 = smul.addr %s165, 8
      %s167 = scalar_lea.vmem %s3, %s166
      %p168 = scmp.lt.s32.totalorder %s15, 3
      %s169 = scalar_select %p168, %s15, 3
      %s170 = smul.addr %s169, 30
      %s171 = smul.addr %s170, 8
      %s172 = scalar_lea.vmem %s0, %s171
      %p173 = scmp.lt.s32.totalorder %s15, 3
      %s174 = scalar_select %p173, %s15, 3
      %s175 = smul.addr %s174, 16
      %s176 = smul.addr %s175, 8
      %s177 = scalar_lea.vmem %s2, %s176
      %p178 = scmp.lt.s32.totalorder %s15, 3
      %s179 = scalar_select %p178, %s15, 3
      %s180 = smul.addr %s179, 8
      %s181 = scalar_lea.vmem %s3, %s180
      %v182 = vld [vmem:[%s172] sm:$0xff]
      %v183 = vld [vmem:[%s172 + $0x8] sm:$0xff]
      %v184 = vld [vmem:[%s172 + $0x10] sm:$0xff]
      %v185 = vld [vmem:[%s172 + $0x18] sm:$0xff]
      %v186 = vld [vmem:[%s172 + $0x20] sm:$0xff]
      %v187 = vld [vmem:[%s172 + $0x28] sm:$0xff]
      %v188 = vld [vmem:[%s172 + $0x30] sm:$0xff]
      %v189 = vld [vmem:[%s172 + $0x38] sm:$0xff]
      %v190 = vld [vmem:[%s172 + $0x40] sm:$0xff]
      %v191 = vld [vmem:[%s172 + $0x48] sm:$0xff]
      %v192 = vld [vmem:[%s172 + $0x50] sm:$0xff]
      %v193 = vld [vmem:[%s172 + $0x58] sm:$0xff]
      %v194 = vld [vmem:[%s172 + $0x60] sm:$0xff]
      %v195 = vld [vmem:[%s172 + $0x68] sm:$0xff]
      %v196 = vld [vmem:[%s172 + $0x70] sm:$0xff]
      %v197 = vld [vmem:[%s172 + $0x78] sm:$0xff]
      %v198 = vld [vmem:[%s172 + $0x80] sm:$0xff]
      %v199 = vld [vmem:[%s172 + $0x88] sm:$0xff]
      %v200 = vld [vmem:[%s172 + $0x90] sm:$0xff]
      %v201 = vld [vmem:[%s172 + $0x98] sm:$0xff]
      %v202 = vld [vmem:[%s172 + $0xa0] sm:$0xff]
      %v203 = vld [vmem:[%s172 + $0xa8] sm:$0xff]
      %v204 = vld [vmem:[%s172 + $0xb0] sm:$0xff]
      %v205 = vld [vmem:[%s172 + $0xb8] sm:$0xff]
      %v206 = vld [vmem:[%s172 + $0xc0] sm:$0xff]
      %v207 = vld [vmem:[%s172 + $0xc8] sm:$0xff]
      %v208 = vld [vmem:[%s172 + $0xd0] sm:$0xff]
      %v209 = vld [vmem:[%s172 + $0xd8] sm:$0xff]
      %v210 = vld [vmem:[%s172 + $0xe0] sm:$0xff]
      %v211 = vld [vmem:[%s172 + $0xe8] sm:$0xff]
      %v212 = vld [vmem:[%s1] sm:$0xff]
      %v213 = vld [vmem:[%s1 + $0x8] sm:$0xf]
      %s214 = scalar_lea.vmem %s1, 12
      %v215 = vld [vmem:[%s214] sm:$0xff]
      %v216 = vld [vmem:[%s214 + $0x8] sm:$0xf]
      %v219 = vcombine.high %v215, %v215
      %vm220 = vcmask 31744
      %v222 = vsel %vm220, %v185, 0
      %v225 = vsel %vm220, %v186, 0
      %v228 = vsel %vm220, %v187, 0
      %v231 = vsel %vm220, %v188, 0
      %v234 = vsel %vm220, %v189, 0
      %v237 = vsel %vm220, %v190, 0
      %v240 = vsel %vm220, %v191, 0
      %v243 = vsel %vm220, %v192, 0
      %v246 = vsel %vm220, %v193, 0
      %v249 = vsel %vm220, %v194, 0
      %v252 = vsel %vm220, %v195, 0
      %v255 = vsel %vm220, %v196, 0
      %v258 = vsel %vm220, %v197, 0
      %v261 = vsel %vm220, %v198, 0
      %v264 = vsel %vm220, %v199, 0
      %v267 = vsel %vm220, %v200, 0
      %v270 = vsel %vm220, %v201, 0
      %v273 = vsel %vm220, %v202, 0
      %v276 = vsel %vm220, %v203, 0
      %v279 = vsel %vm220, %v204, 0
      %v282 = vsel %vm220, %v205, 0
      %v285 = vsel %vm220, %v206, 0
      %v288 = vsel %vm220, %v207, 0
      %v291 = vsel %vm220, %v208, 0
      %vm293 = vcmask 1043456
      %v294 = vsel %vm293, %v215, 0
      %v296 = vsel %vm293, %v219, 0
      %v298 = vsel %vm293, %v216, 0
      %300 = vmatprep.subr.mxu0 %v296
      %301 = vmatpush1.msra.mxu0 %v294
      %302 = vmatprep.subr.mxu0 0.0
      %303 = vmatpush1.msra.mxu0 0.0
      %304 = vmatprep.subr.mxu0 0.0
      %305 = vmatpush1.msra.mxu0 0.0
      %306 = vmatprep.subr.mxu0 0.0
      %307 = vmatpush1.msra.mxu0 0.0
      %308 = vmatprep.subr.mxu0 0.0
      %309 = vmatpush1.msra.mxu0 0.0
      %310 = vmatprep.subr.mxu0 0.0
      %311 = vmatpush1.msra.mxu0 0.0
      %312 = vmatprep.subr.mxu0 0.0
      %313 = vmatpush1.msra.mxu0 0.0
      %314 = vmatprep.subr.mxu0 0.0
      %315 = vmatpush1.msra.mxu0 0.0
      %316 = vmatprep.subr.mxu0 0.0
      %317 = vmatpush1.msra.mxu0 0.0
      %318 = vmatprep.subr.mxu0 0.0
      %319 = vmatpush1.msra.mxu0 0.0
      %320 = vmatprep.subr.mxu0 0.0
      %321 = vmatpush1.msra.mxu0 0.0
      %322 = vmatprep.subr.mxu0 0.0
      %323 = vmatpush1.msra.mxu0 0.0
      %324 = vmatprep.subr.mxu0 0.0
      %325 = vmatpush1.msra.mxu0 0.0
      %326 = vmatprep.subr.mxu0 0.0
      %327 = vmatpush1.msra.mxu0 0.0
      %328 = vmatprep.subr.mxu0 0.0
      %329 = vmatpush1.msra.mxu0 0.0
      %330 = vmatprep.subr.mxu0 0.0
      %331 = vmatpush1.msra.mxu0 0.0
      %332 = vmatprep.subr.mxu0 0.0
      %333 = vmatpush1.msra.mxu0 0.0
      %334 = vmatprep.subr.mxu0 0.0
      %335 = vmatpush1.msra.mxu0 0.0
      %336 = vmatprep.subr.mxu0 0.0
      %337 = vmatpush1.msra.mxu0 0.0
      %338 = vmatprep.subr.mxu0 0.0
      %339 = vmatpush1.msra.mxu0 0.0
      %340 = vmatprep.subr.mxu0 0.0
      %341 = vmatpush1.msra.mxu0 0.0
      %342 = vmatprep.subr.mxu0 0.0
      %343 = vmatpush1.msra.mxu0 0.0
      %344 = vmatprep.subr.mxu0 0.0
      %345 = vmatpush1.msra.mxu0 0.0
      %346 = vmatprep.subr.mxu0 0.0
      %347 = vmatpush1.msra.mxu0 0.0
      %348 = vmatprep.subr.mxu0 0.0
      %349 = vmatpush1.msra.mxu0 0.0
      %350 = vmatprep.subr.mxu0 0.0
      %351 = vmatpush1.msra.mxu0 0.0
      %352 = vmatprep.subr.mxu0 0.0
      %353 = vmatpush1.msra.mxu0 0.0
      %354 = vmatprep.subr.mxu0 0.0
      %355 = vmatpush1.msra.mxu0 0.0
      %356 = vmatprep.subr.mxu0 0.0
      %357 = vmatpush1.msra.mxu0 0.0
      %358 = vmatprep.subr.mxu0 0.0
      %359 = vmatpush1.msra.mxu0 0.0
      %360 = vmatprep.subr.mxu0 0.0
      %361 = vmatpush1.msra.mxu0 0.0
      %362 = vmatprep.subr.mxu0 0.0
      %363 = vmatpush1.msra.mxu0 0.0
      %364 = vmatprep.mubr.f32.mxu0 0.0
      %365 = vmatmul.mubr.f32.gmra.mrb[0].mxu0 %v222
      %v366 = vpop.f32.mrb[0].mxu0
      %v367 = vadd.f32 0.0, %v366
      %v368 = vpop.f32.mrb[0].mxu0
      %v369 = vadd.f32 0.0, %v368
      %370 = vmatprep.mubr.f32.mxu0 0.0
      %371 = vmatmul.mubr.f32.gmra.mrb[0].mxu0 %v225
      %v372 = vpop.f32.mrb[0].mxu0
      %v373 = vadd.f32 0.0, %v372
      %v374 = vpop.f32.mrb[0].mxu0
      %v375 = vadd.f32 0.0, %v374
      %376 = vmatprep.mubr.f32.mxu0 0.0
      %377 = vmatmul.mubr.f32.gmra.mrb[0].mxu0 %v228
      %v378 = vpop.f32.mrb[0].mxu0
      %v379 = vpop.f32.mrb[0].mxu0
      %v380 = vadd.f32 0.0, %v379
      %381 = vmatprep.mubr.f32.mxu0 0.0
      %382 = vmatmul.mubr.f32.gmra.mrb[0].mxu0 %v231
      %v383 = vpop.f32.mrb[0].mxu0
      %v384 = vadd.f32 0.0, %v383
      %v385 = vpop.f32.mrb[0].mxu0
      %v386 = vadd.f32 0.0, %v385
      %387 = vmatprep.mubr.f32.mxu0 0.0
      %388 = vmatmul.mubr.f32.gmra.mrb[0].mxu0 %v234
      %v389 = vpop.f32.mrb[0].mxu0
      %v390 = vadd.f32 0.0, %v389
      %v391 = vpop.f32.mrb[0].mxu0
      %v392 = vadd.f32 0.0, %v391
      %393 = vmatprep.mubr.f32.mxu0 0.0
      %394 = vmatmul.mubr.f32.gmra.mrb[0].mxu0 %v237
      %v395 = vpop.f32.mrb[0].mxu0
      %v396 = vpop.f32.mrb[0].mxu0
      %v397 = vadd.f32 0.0, %v396
      %398 = vmatprep.mubr.f32.mxu0 0.0
      %399 = vmatmul.mubr.f32.gmra.mrb[0].mxu0 %v240
      %v400 = vpop.f32.mrb[0].mxu0
      %v401 = vadd.f32 0.0, %v400
      %v402 = vpop.f32.mrb[0].mxu0
      %v403 = vadd.f32 0.0, %v402
      %404 = vmatprep.mubr.f32.mxu0 0.0
      %405 = vmatmul.mubr.f32.gmra.mrb[0].mxu0 %v243
      %v406 = vpop.f32.mrb[0].mxu0
      %v407 = vadd.f32 0.0, %v406
      %v408 = vpop.f32.mrb[0].mxu0
      %v409 = vadd.f32 0.0, %v408
      %410 = vmatprep.mubr.f32.mxu0 0.0
      %411 = vmatmul.mubr.f32.gmra.mrb[0].mxu0 %v246
      %v412 = vpop.f32.mrb[0].mxu0
      %v413 = vpop.f32.mrb[0].mxu0
      %v414 = vadd.f32 0.0, %v413
      %415 = vmatprep.mubr.f32.mxu0 0.0
      %416 = vmatmul.mubr.f32.gmra.mrb[0].mxu0 %v249
      %v417 = vpop.f32.mrb[0].mxu0
      %v418 = vadd.f32 0.0, %v417
      %v419 = vpop.f32.mrb[0].mxu0
      %v420 = vadd.f32 0.0, %v419
      %421 = vmatprep.mubr.f32.mxu0 0.0
      %422 = vmatmul.mubr.f32.gmra.mrb[0].mxu0 %v252
      %v423 = vpop.f32.mrb[0].mxu0
      %v424 = vadd.f32 0.0, %v423
      %v425 = vpop.f32.mrb[0].mxu0
      %v426 = vadd.f32 0.0, %v425
      %427 = vmatprep.mubr.f32.mxu0 0.0
      %428 = vmatmul.mubr.f32.gmra.mrb[0].mxu0 %v255
      %v429 = vpop.f32.mrb[0].mxu0
      %v430 = vpop.f32.mrb[0].mxu0
      %v431 = vadd.f32 0.0, %v430
      %432 = vmatprep.mubr.f32.mxu0 0.0
      %433 = vmatmul.mubr.f32.gmra.mrb[0].mxu0 %v258
      %v434 = vpop.f32.mrb[0].mxu0
      %v435 = vadd.f32 0.0, %v434
      %v436 = vpop.f32.mrb[0].mxu0
      %v437 = vadd.f32 0.0, %v436
      %438 = vmatprep.mubr.f32.mxu0 0.0
      %439 = vmatmul.mubr.f32.gmra.mrb[0].mxu0 %v261
      %v440 = vpop.f32.mrb[0].mxu0
      %v441 = vadd.f32 0.0, %v440
      %v442 = vpop.f32.mrb[0].mxu0
      %v443 = vadd.f32 0.0, %v442
      %444 = vmatprep.mubr.f32.mxu0 0.0
      %445 = vmatmul.mubr.f32.gmra.mrb[0].mxu0 %v264
      %v446 = vpop.f32.mrb[0].mxu0
      %v447 = vpop.f32.mrb[0].mxu0
      %v448 = vadd.f32 0.0, %v447
      %449 = vmatprep.mubr.f32.mxu0 0.0
      %450 = vmatmul.mubr.f32.gmra.mrb[0].mxu0 %v267
      %v451 = vpop.f32.mrb[0].mxu0
      %v452 = vadd.f32 0.0, %v451
      %v453 = vpop.f32.mrb[0].mxu0
      %v454 = vadd.f32 0.0, %v453
      %455 = vmatprep.mubr.f32.mxu0 0.0
      %456 = vmatmul.mubr.f32.gmra.mrb[0].mxu0 %v270
      %v457 = vpop.f32.mrb[0].mxu0
      %v458 = vadd.f32 0.0, %v457
      %v459 = vpop.f32.mrb[0].mxu0
      %v460 = vadd.f32 0.0, %v459
      %461 = vmatprep.mubr.f32.mxu0 0.0
      %462 = vmatmul.mubr.f32.gmra.mrb[0].mxu0 %v273
      %v463 = vpop.f32.mrb[0].mxu0
      %v464 = vpop.f32.mrb[0].mxu0
      %v465 = vadd.f32 0.0, %v464
      %466 = vmatprep.mubr.f32.mxu0 0.0
      %467 = vmatmul.mubr.f32.gmra.mrb[0].mxu0 %v276
      %v468 = vpop.f32.mrb[0].mxu0
      %v469 = vadd.f32 0.0, %v468
      %v470 = vpop.f32.mrb[0].mxu0
      %v471 = vadd.f32 0.0, %v470
      %472 = vmatprep.mubr.f32.mxu0 0.0
      %473 = vmatmul.mubr.f32.gmra.mrb[0].mxu0 %v279
      %v474 = vpop.f32.mrb[0].mxu0
      %v475 = vadd.f32 0.0, %v474
      %v476 = vpop.f32.mrb[0].mxu0
      %v477 = vadd.f32 0.0, %v476
      %478 = vmatprep.mubr.f32.mxu0 0.0
      %479 = vmatmul.mubr.f32.gmra.mrb[0].mxu0 %v282
      %v480 = vpop.f32.mrb[0].mxu0
      %v481 = vpop.f32.mrb[0].mxu0
      %v482 = vadd.f32 0.0, %v481
      %483 = vmatprep.mubr.f32.mxu0 0.0
      %484 = vmatmul.mubr.f32.gmra.mrb[0].mxu0 %v285
      %v485 = vpop.f32.mrb[0].mxu0
      %v486 = vadd.f32 0.0, %v485
      %v487 = vpop.f32.mrb[0].mxu0
      %v488 = vadd.f32 0.0, %v487
      %489 = vmatprep.mubr.f32.mxu0 0.0
      %490 = vmatmul.mubr.f32.gmra.mrb[0].mxu0 %v288
      %v491 = vpop.f32.mrb[0].mxu0
      %v492 = vadd.f32 0.0, %v491
      %v493 = vpop.f32.mrb[0].mxu0
      %v494 = vadd.f32 0.0, %v493
      %495 = vmatprep.mubr.f32.mxu0 0.0
      %496 = vmatmul.mubr.f32.gmra.mrb[0].mxu0 %v291
      %v497 = vpop.f32.mrb[0].mxu0
      %v498 = vpop.f32.mrb[0].mxu0
      %v499 = vadd.f32 0.0, %v498
      %500 = vdwg.mxu0
      %501 = vmatprep.subr.mxu0 0.0
      %502 = vmatpush1.msra.mxu0 %v298
      %503 = vmatprep.subr.mxu0 0.0
      %504 = vmatpush1.msra.mxu0 0.0
      %505 = vmatprep.subr.mxu0 0.0
      %506 = vmatpush1.msra.mxu0 0.0
      %507 = vmatprep.subr.mxu0 0.0
      %508 = vmatpush1.msra.mxu0 0.0
      %509 = vmatprep.subr.mxu0 0.0
      %510 = vmatpush1.msra.mxu0 0.0
      %511 = vmatprep.subr.mxu0 0.0
      %512 = vmatpush1.msra.mxu0 0.0
      %513 = vmatprep.subr.mxu0 0.0
      %514 = vmatpush1.msra.mxu0 0.0
      %515 = vmatprep.subr.mxu0 0.0
      %516 = vmatpush1.msra.mxu0 0.0
      %517 = vmatprep.subr.mxu0 0.0
      %518 = vmatpush1.msra.mxu0 0.0
      %519 = vmatprep.subr.mxu0 0.0
      %520 = vmatpush1.msra.mxu0 0.0
      %521 = vmatprep.subr.mxu0 0.0
      %522 = vmatpush1.msra.mxu0 0.0
      %523 = vmatprep.subr.mxu0 0.0
      %524 = vmatpush1.msra.mxu0 0.0
      %525 = vmatprep.subr.mxu0 0.0
      %526 = vmatpush1.msra.mxu0 0.0
      %527 = vmatprep.subr.mxu0 0.0
      %528 = vmatpush1.msra.mxu0 0.0
      %529 = vmatprep.subr.mxu0 0.0
      %530 = vmatpush1.msra.mxu0 0.0
      %531 = vmatprep.subr.mxu0 0.0
      %532 = vmatpush1.msra.mxu0 0.0
      %533 = vmatprep.subr.mxu0 0.0
      %534 = vmatpush1.msra.mxu0 0.0
      %535 = vmatprep.subr.mxu0 0.0
      %536 = vmatpush1.msra.mxu0 0.0
      %537 = vmatprep.subr.mxu0 0.0
      %538 = vmatpush1.msra.mxu0 0.0
      %539 = vmatprep.subr.mxu0 0.0
      %540 = vmatpush1.msra.mxu0 0.0
      %541 = vmatprep.subr.mxu0 0.0
      %542 = vmatpush1.msra.mxu0 0.0
      %543 = vmatprep.subr.mxu0 0.0
      %544 = vmatpush1.msra.mxu0 0.0
      %545 = vmatprep.subr.mxu0 0.0
      %546 = vmatpush1.msra.mxu0 0.0
      %547 = vmatprep.subr.mxu0 0.0
      %548 = vmatpush1.msra.mxu0 0.0
      %549 = vmatprep.subr.mxu0 0.0
      %550 = vmatpush1.msra.mxu0 0.0
      %551 = vmatprep.subr.mxu0 0.0
      %552 = vmatpush1.msra.mxu0 0.0
      %553 = vmatprep.subr.mxu0 0.0
      %554 = vmatpush1.msra.mxu0 0.0
      %555 = vmatprep.subr.mxu0 0.0
      %556 = vmatpush1.msra.mxu0 0.0
      %557 = vmatprep.subr.mxu0 0.0
      %558 = vmatpush1.msra.mxu0 0.0
      %559 = vmatprep.subr.mxu0 0.0
      %560 = vmatpush1.msra.mxu0 0.0
      %561 = vmatprep.subr.mxu0 0.0
      %562 = vmatpush1.msra.mxu0 0.0
      %563 = vmatprep.subr.mxu0 0.0
      %564 = vmatpush1.msra.mxu0 0.0
      %565 = vmatprep.mubr.f32.mxu0 0.0
      %566 = vmatmul.mubr.f32.gmra.mrb[0].mxu0 %v222
      %v567 = vpop.f32.mrb[0].mxu0
      %v568 = vadd.f32 0.0, %v567
      %v569 = vpop.f32.mrb[0].mxu0
      %570 = vmatprep.mubr.f32.mxu0 0.0
      %571 = vmatmul.mubr.f32.gmra.mrb[0].mxu0 %v225
      %v572 = vpop.f32.mrb[0].mxu0
      %v573 = vadd.f32 0.0, %v572
      %v574 = vpop.f32.mrb[0].mxu0
      %575 = vmatprep.mubr.f32.mxu0 0.0
      %576 = vmatmul.mubr.f32.gmra.mrb[0].mxu0 %v228
      %v577 = vpop.f32.mrb[0].mxu0
      %v578 = vadd.f32 0.0, %v577
      %v579 = vpop.f32.mrb[0].mxu0
      %580 = vmatprep.mubr.f32.mxu0 0.0
      %581 = vmatmul.mubr.f32.gmra.mrb[0].mxu0 %v231
      %v582 = vpop.f32.mrb[0].mxu0
      %v583 = vadd.f32 0.0, %v582
      %v584 = vpop.f32.mrb[0].mxu0
      %585 = vmatprep.mubr.f32.mxu0 0.0
      %586 = vmatmul.mubr.f32.gmra.mrb[0].mxu0 %v234
      %v587 = vpop.f32.mrb[0].mxu0
      %v588 = vadd.f32 0.0, %v587
      %v589 = vpop.f32.mrb[0].mxu0
      %590 = vmatprep.mubr.f32.mxu0 0.0
      %591 = vmatmul.mubr.f32.gmra.mrb[0].mxu0 %v237
      %v592 = vpop.f32.mrb[0].mxu0
      %v593 = vadd.f32 0.0, %v592
      %v594 = vpop.f32.mrb[0].mxu0
      %595 = vmatprep.mubr.f32.mxu0 0.0
      %596 = vmatmul.mubr.f32.gmra.mrb[0].mxu0 %v240
      %v597 = vpop.f32.mrb[0].mxu0
      %v598 = vadd.f32 0.0, %v597
      %v599 = vpop.f32.mrb[0].mxu0
      %600 = vmatprep.mubr.f32.mxu0 0.0
      %601 = vmatmul.mubr.f32.gmra.mrb[0].mxu0 %v243
      %v602 = vpop.f32.mrb[0].mxu0
      %v603 = vadd.f32 0.0, %v602
      %v604 = vpop.f32.mrb[0].mxu0
      %605 = vmatprep.mubr.f32.mxu0 0.0
      %606 = vmatmul.mubr.f32.gmra.mrb[0].mxu0 %v246
      %v607 = vpop.f32.mrb[0].mxu0
      %v608 = vadd.f32 0.0, %v607
      %v609 = vpop.f32.mrb[0].mxu0
      %610 = vmatprep.mubr.f32.mxu0 0.0
      %611 = vmatmul.mubr.f32.gmra.mrb[0].mxu0 %v249
      %v612 = vpop.f32.mrb[0].mxu0
      %v613 = vadd.f32 0.0, %v612
      %v614 = vpop.f32.mrb[0].mxu0
      %615 = vmatprep.mubr.f32.mxu0 0.0
      %616 = vmatmul.mubr.f32.gmra.mrb[0].mxu0 %v252
      %v617 = vpop.f32.mrb[0].mxu0
      %v618 = vadd.f32 0.0, %v617
      %v619 = vpop.f32.mrb[0].mxu0
      %620 = vmatprep.mubr.f32.mxu0 0.0
      %621 = vmatmul.mubr.f32.gmra.mrb[0].mxu0 %v255
      %v622 = vpop.f32.mrb[0].mxu0
      %v623 = vadd.f32 0.0, %v622
      %v624 = vpop.f32.mrb[0].mxu0
      %625 = vmatprep.mubr.f32.mxu0 0.0
      %626 = vmatmul.mubr.f32.gmra.mrb[0].mxu0 %v258
      %v627 = vpop.f32.mrb[0].mxu0
      %v628 = vadd.f32 0.0, %v627
      %v629 = vpop.f32.mrb[0].mxu0
      %630 = vmatprep.mubr.f32.mxu0 0.0
      %631 = vmatmul.mubr.f32.gmra.mrb[0].mxu0 %v261
      %v632 = vpop.f32.mrb[0].mxu0
      %v633 = vadd.f32 0.0, %v632
      %v634 = vpop.f32.mrb[0].mxu0
      %635 = vmatprep.mubr.f32.mxu0 0.0
      %636 = vmatmul.mubr.f32.gmra.mrb[0].mxu0 %v264
      %v637 = vpop.f32.mrb[0].mxu0
      %v638 = vadd.f32 0.0, %v637
      %v639 = vpop.f32.mrb[0].mxu0
      %640 = vmatprep.mubr.f32.mxu0 0.0
      %641 = vmatmul.mubr.f32.gmra.mrb[0].mxu0 %v267
      %v642 = vpop.f32.mrb[0].mxu0
      %v643 = vadd.f32 0.0, %v642
      %v644 = vpop.f32.mrb[0].mxu0
      %645 = vmatprep.mubr.f32.mxu0 0.0
      %646 = vmatmul.mubr.f32.gmra.mrb[0].mxu0 %v270
      %v647 = vpop.f32.mrb[0].mxu0
      %v648 = vadd.f32 0.0, %v647
      %v649 = vpop.f32.mrb[0].mxu0
      %650 = vmatprep.mubr.f32.mxu0 0.0
      %651 = vmatmul.mubr.f32.gmra.mrb[0].mxu0 %v273
      %v652 = vpop.f32.mrb[0].mxu0
      %v653 = vadd.f32 0.0, %v652
      %v654 = vpop.f32.mrb[0].mxu0
      %655 = vmatprep.mubr.f32.mxu0 0.0
      %656 = vmatmul.mubr.f32.gmra.mrb[0].mxu0 %v276
      %v657 = vpop.f32.mrb[0].mxu0
      %v658 = vadd.f32 0.0, %v657
      %v659 = vpop.f32.mrb[0].mxu0
      %660 = vmatprep.mubr.f32.mxu0 0.0
      %661 = vmatmul.mubr.f32.gmra.mrb[0].mxu0 %v279
      %v662 = vpop.f32.mrb[0].mxu0
      %v663 = vadd.f32 0.0, %v662
      %v664 = vpop.f32.mrb[0].mxu0
      %665 = vmatprep.mubr.f32.mxu0 0.0
      %666 = vmatmul.mubr.f32.gmra.mrb[0].mxu0 %v282
      %v667 = vpop.f32.mrb[0].mxu0
      %v668 = vadd.f32 0.0, %v667
      %v669 = vpop.f32.mrb[0].mxu0
      %670 = vmatprep.mubr.f32.mxu0 0.0
      %671 = vmatmul.mubr.f32.gmra.mrb[0].mxu0 %v285
      %v672 = vpop.f32.mrb[0].mxu0
      %v673 = vadd.f32 0.0, %v672
      %v674 = vpop.f32.mrb[0].mxu0
      %675 = vmatprep.mubr.f32.mxu0 0.0
      %676 = vmatmul.mubr.f32.gmra.mrb[0].mxu0 %v288
      %v677 = vpop.f32.mrb[0].mxu0
      %v678 = vadd.f32 0.0, %v677
      %v679 = vpop.f32.mrb[0].mxu0
      %680 = vmatprep.mubr.f32.mxu0 0.0
      %681 = vmatmul.mubr.f32.gmra.mrb[0].mxu0 %v291
      %v682 = vpop.f32.mrb[0].mxu0
      %v683 = vadd.f32 0.0, %v682
      %v684 = vpop.f32.mrb[0].mxu0
      %685 = vdwg.mxu0
      %v688 = vcombine.high %v212, %v212
      %v690 = vsel %vm220, %v182, 0
      %v693 = vsel %vm220, %v183, 0
      %v696 = vsel %vm220, %v184, 0
      %v698 = vsel %vm293, %v212, 0
      %v700 = vsel %vm293, %v688, 0
      %v702 = vsel %vm293, %v213, 0
      %704 = vmatprep.subr.mxu0 %v700
      %705 = vmatpush1.msra.mxu0 %v698
      %706 = vmatprep.subr.mxu0 0.0
      %707 = vmatpush1.msra.mxu0 0.0
      %708 = vmatprep.subr.mxu0 0.0
      %709 = vmatpush1.msra.mxu0 0.0
      %710 = vmatprep.subr.mxu0 0.0
      %711 = vmatpush1.msra.mxu0 0.0
      %712 = vmatprep.subr.mxu0 0.0
      %713 = vmatpush1.msra.mxu0 0.0
      %714 = vmatprep.subr.mxu0 0.0
      %715 = vmatpush1.msra.mxu0 0.0
      %716 = vmatprep.subr.mxu0 0.0
      %717 = vmatpush1.msra.mxu0 0.0
      %718 = vmatprep.subr.mxu0 0.0
      %719 = vmatpush1.msra.mxu0 0.0
      %720 = vmatprep.subr.mxu0 0.0
      %721 = vmatpush1.msra.mxu0 0.0
      %722 = vmatprep.subr.mxu0 0.0
      %723 = vmatpush1.msra.mxu0 0.0
      %724 = vmatprep.subr.mxu0 0.0
      %725 = vmatpush1.msra.mxu0 0.0
      %726 = vmatprep.subr.mxu0 0.0
      %727 = vmatpush1.msra.mxu0 0.0
      %728 = vmatprep.subr.mxu0 0.0
      %729 = vmatpush1.msra.mxu0 0.0
      %730 = vmatprep.subr.mxu0 0.0
      %731 = vmatpush1.msra.mxu0 0.0
      %732 = vmatprep.subr.mxu0 0.0
      %733 = vmatpush1.msra.mxu0 0.0
      %734 = vmatprep.subr.mxu0 0.0
      %735 = vmatpush1.msra.mxu0 0.0
      %736 = vmatprep.subr.mxu0 0.0
      %737 = vmatpush1.msra.mxu0 0.0
      %738 = vmatprep.subr.mxu0 0.0
      %739 = vmatpush1.msra.mxu0 0.0
      %740 = vmatprep.subr.mxu0 0.0
      %741 = vmatpush1.msra.mxu0 0.0
      %742 = vmatprep.subr.mxu0 0.0
      %743 = vmatpush1.msra.mxu0 0.0
      %744 = vmatprep.subr.mxu0 0.0
      %745 = vmatpush1.msra.mxu0 0.0
      %746 = vmatprep.subr.mxu0 0.0
      %747 = vmatpush1.msra.mxu0 0.0
      %748 = vmatprep.subr.mxu0 0.0
      %749 = vmatpush1.msra.mxu0 0.0
      %750 = vmatprep.subr.mxu0 0.0
      %751 = vmatpush1.msra.mxu0 0.0
      %752 = vmatprep.subr.mxu0 0.0
      %753 = vmatpush1.msra.mxu0 0.0
      %754 = vmatprep.subr.mxu0 0.0
      %755 = vmatpush1.msra.mxu0 0.0
      %756 = vmatprep.subr.mxu0 0.0
      %757 = vmatpush1.msra.mxu0 0.0
      %758 = vmatprep.subr.mxu0 0.0
      %759 = vmatpush1.msra.mxu0 0.0
      %760 = vmatprep.subr.mxu0 0.0
      %761 = vmatpush1.msra.mxu0 0.0
      %762 = vmatprep.subr.mxu0 0.0
      %763 = vmatpush1.msra.mxu0 0.0
      %764 = vmatprep.subr.mxu0 0.0
      %765 = vmatpush1.msra.mxu0 0.0
      %766 = vmatprep.subr.mxu0 0.0
      %767 = vmatpush1.msra.mxu0 0.0
      %768 = vmatprep.mubr.f32.mxu0 0.0
      %769 = vmatmul.mubr.f32.gmra.mrb[0].mxu0 %v690
      %v770 = vpop.f32.mrb[0].mxu0
      %v771 = vadd.f32 %v367, %v770
      %v772 = vpop.f32.mrb[0].mxu0
      %v773 = vadd.f32 %v369, %v772
      %774 = vmatprep.mubr.f32.mxu0 0.0
      %775 = vmatmul.mubr.f32.gmra.mrb[0].mxu0 %v693
      %v776 = vpop.f32.mrb[0].mxu0
      %v777 = vadd.f32 %v373, %v776
      %v778 = vpop.f32.mrb[0].mxu0
      %v779 = vadd.f32 %v375, %v778
      %780 = vmatprep.mubr.f32.mxu0 0.0
      %781 = vmatmul.mubr.f32.gmra.mrb[0].mxu0 %v696
      %v782 = vpop.f32.mrb[0].mxu0
      %v783 = vpop.f32.mrb[0].mxu0
      %v784 = vadd.f32 %v380, %v783
      %785 = vmatprep.mubr.f32.mxu0 0.0
      %786 = vmatmul.mubr.f32.gmra.mrb[0].mxu0 %v222
      %v787 = vpop.f32.mrb[0].mxu0
      %v788 = vadd.f32 %v384, %v787
      %v789 = vpop.f32.mrb[0].mxu0
      %v790 = vadd.f32 %v386, %v789
      %791 = vmatprep.mubr.f32.mxu0 0.0
      %792 = vmatmul.mubr.f32.gmra.mrb[0].mxu0 %v225
      %v793 = vpop.f32.mrb[0].mxu0
      %v794 = vadd.f32 %v390, %v793
      %v795 = vpop.f32.mrb[0].mxu0
      %v796 = vadd.f32 %v392, %v795
      %797 = vmatprep.mubr.f32.mxu0 0.0
      %798 = vmatmul.mubr.f32.gmra.mrb[0].mxu0 %v228
      %v799 = vpop.f32.mrb[0].mxu0
      %v800 = vpop.f32.mrb[0].mxu0
      %v801 = vadd.f32 %v397, %v800
      %802 = vmatprep.mubr.f32.mxu0 0.0
      %803 = vmatmul.mubr.f32.gmra.mrb[0].mxu0 %v231
      %v804 = vpop.f32.mrb[0].mxu0
      %v805 = vadd.f32 %v401, %v804
      %v806 = vpop.f32.mrb[0].mxu0
      %v807 = vadd.f32 %v403, %v806
      %808 = vmatprep.mubr.f32.mxu0 0.0
      %809 = vmatmul.mubr.f32.gmra.mrb[0].mxu0 %v234
      %v810 = vpop.f32.mrb[0].mxu0
      %v811 = vadd.f32 %v407, %v810
      %v812 = vpop.f32.mrb[0].mxu0
      %v813 = vadd.f32 %v409, %v812
      %814 = vmatprep.mubr.f32.mxu0 0.0
      %815 = vmatmul.mubr.f32.gmra.mrb[0].mxu0 %v237
      %v816 = vpop.f32.mrb[0].mxu0
      %v817 = vpop.f32.mrb[0].mxu0
      %v818 = vadd.f32 %v414, %v817
      %819 = vmatprep.mubr.f32.mxu0 0.0
      %820 = vmatmul.mubr.f32.gmra.mrb[0].mxu0 %v240
      %v821 = vpop.f32.mrb[0].mxu0
      %v822 = vadd.f32 %v418, %v821
      %v823 = vpop.f32.mrb[0].mxu0
      %v824 = vadd.f32 %v420, %v823
      %825 = vmatprep.mubr.f32.mxu0 0.0
      %826 = vmatmul.mubr.f32.gmra.mrb[0].mxu0 %v243
      %v827 = vpop.f32.mrb[0].mxu0
      %v828 = vadd.f32 %v424, %v827
      %v829 = vpop.f32.mrb[0].mxu0
      %v830 = vadd.f32 %v426, %v829
      %831 = vmatprep.mubr.f32.mxu0 0.0
      %832 = vmatmul.mubr.f32.gmra.mrb[0].mxu0 %v246
      %v833 = vpop.f32.mrb[0].mxu0
      %v834 = vpop.f32.mrb[0].mxu0
      %v835 = vadd.f32 %v431, %v834
      %836 = vmatprep.mubr.f32.mxu0 0.0
      %837 = vmatmul.mubr.f32.gmra.mrb[0].mxu0 %v249
      %v838 = vpop.f32.mrb[0].mxu0
      %v839 = vadd.f32 %v435, %v838
      %v840 = vpop.f32.mrb[0].mxu0
      %v841 = vadd.f32 %v437, %v840
      %842 = vmatprep.mubr.f32.mxu0 0.0
      %843 = vmatmul.mubr.f32.gmra.mrb[0].mxu0 %v252
      %v844 = vpop.f32.mrb[0].mxu0
      %v845 = vadd.f32 %v441, %v844
      %v846 = vpop.f32.mrb[0].mxu0
      %v847 = vadd.f32 %v443, %v846
      %848 = vmatprep.mubr.f32.mxu0 0.0
      %849 = vmatmul.mubr.f32.gmra.mrb[0].mxu0 %v255
      %v850 = vpop.f32.mrb[0].mxu0
      %v851 = vpop.f32.mrb[0].mxu0
      %v852 = vadd.f32 %v448, %v851
      %853 = vmatprep.mubr.f32.mxu0 0.0
      %854 = vmatmul.mubr.f32.gmra.mrb[0].mxu0 %v258
      %v855 = vpop.f32.mrb[0].mxu0
      %v856 = vadd.f32 %v452, %v855
      %v857 = vpop.f32.mrb[0].mxu0
      %v858 = vadd.f32 %v454, %v857
      %859 = vmatprep.mubr.f32.mxu0 0.0
      %860 = vmatmul.mubr.f32.gmra.mrb[0].mxu0 %v261
      %v861 = vpop.f32.mrb[0].mxu0
      %v862 = vadd.f32 %v458, %v861
      %v863 = vpop.f32.mrb[0].mxu0
      %v864 = vadd.f32 %v460, %v863
      %865 = vmatprep.mubr.f32.mxu0 0.0
      %866 = vmatmul.mubr.f32.gmra.mrb[0].mxu0 %v264
      %v867 = vpop.f32.mrb[0].mxu0
      %v868 = vpop.f32.mrb[0].mxu0
      %v869 = vadd.f32 %v465, %v868
      %870 = vmatprep.mubr.f32.mxu0 0.0
      %871 = vmatmul.mubr.f32.gmra.mrb[0].mxu0 %v267
      %v872 = vpop.f32.mrb[0].mxu0
      %v873 = vadd.f32 %v469, %v872
      %v874 = vpop.f32.mrb[0].mxu0
      %v875 = vadd.f32 %v471, %v874
      %876 = vmatprep.mubr.f32.mxu0 0.0
      %877 = vmatmul.mubr.f32.gmra.mrb[0].mxu0 %v270
      %v878 = vpop.f32.mrb[0].mxu0
      %v879 = vadd.f32 %v475, %v878
      %v880 = vpop.f32.mrb[0].mxu0
      %v881 = vadd.f32 %v477, %v880
      %882 = vmatprep.mubr.f32.mxu0 0.0
      %883 = vmatmul.mubr.f32.gmra.mrb[0].mxu0 %v273
      %v884 = vpop.f32.mrb[0].mxu0
      %v885 = vpop.f32.mrb[0].mxu0
      %v886 = vadd.f32 %v482, %v885
      %887 = vmatprep.mubr.f32.mxu0 0.0
      %888 = vmatmul.mubr.f32.gmra.mrb[0].mxu0 %v276
      %v889 = vpop.f32.mrb[0].mxu0
      %v890 = vadd.f32 %v486, %v889
      %v891 = vpop.f32.mrb[0].mxu0
      %v892 = vadd.f32 %v488, %v891
      %893 = vmatprep.mubr.f32.mxu0 0.0
      %894 = vmatmul.mubr.f32.gmra.mrb[0].mxu0 %v279
      %v895 = vpop.f32.mrb[0].mxu0
      %v896 = vadd.f32 %v492, %v895
      %v897 = vpop.f32.mrb[0].mxu0
      %v898 = vadd.f32 %v494, %v897
      %899 = vmatprep.mubr.f32.mxu0 0.0
      %900 = vmatmul.mubr.f32.gmra.mrb[0].mxu0 %v282
      %v901 = vpop.f32.mrb[0].mxu0
      %v902 = vpop.f32.mrb[0].mxu0
      %v903 = vadd.f32 %v499, %v902
      %904 = vdwg.mxu0
      %905 = vmatprep.subr.mxu0 0.0
      %906 = vmatpush1.msra.mxu0 %v702
      %907 = vmatprep.subr.mxu0 0.0
      %908 = vmatpush1.msra.mxu0 0.0
      %909 = vmatprep.subr.mxu0 0.0
      %910 = vmatpush1.msra.mxu0 0.0
      %911 = vmatprep.subr.mxu0 0.0
      %912 = vmatpush1.msra.mxu0 0.0
      %913 = vmatprep.subr.mxu0 0.0
      %914 = vmatpush1.msra.mxu0 0.0
      %915 = vmatprep.subr.mxu0 0.0
      %916 = vmatpush1.msra.mxu0 0.0
      %917 = vmatprep.subr.mxu0 0.0
      %918 = vmatpush1.msra.mxu0 0.0
      %919 = vmatprep.subr.mxu0 0.0
      %920 = vmatpush1.msra.mxu0 0.0
      %921 = vmatprep.subr.mxu0 0.0
      %922 = vmatpush1.msra.mxu0 0.0
      %923 = vmatprep.subr.mxu0 0.0
      %924 = vmatpush1.msra.mxu0 0.0
      %925 = vmatprep.subr.mxu0 0.0
      %926 = vmatpush1.msra.mxu0 0.0
      %927 = vmatprep.subr.mxu0 0.0
      %928 = vmatpush1.msra.mxu0 0.0
      %929 = vmatprep.subr.mxu0 0.0
      %930 = vmatpush1.msra.mxu0 0.0
      %931 = vmatprep.subr.mxu0 0.0
      %932 = vmatpush1.msra.mxu0 0.0
      %933 = vmatprep.subr.mxu0 0.0
      %934 = vmatpush1.msra.mxu0 0.0
      %935 = vmatprep.subr.mxu0 0.0
      %936 = vmatpush1.msra.mxu0 0.0
      %937 = vmatprep.subr.mxu0 0.0
      %938 = vmatpush1.msra.mxu0 0.0
      %939 = vmatprep.subr.mxu0 0.0
      %940 = vmatpush1.msra.mxu0 0.0
      %941 = vmatprep.subr.mxu0 0.0
      %942 = vmatpush1.msra.mxu0 0.0
      %943 = vmatprep.subr.mxu0 0.0
      %944 = vmatpush1.msra.mxu0 0.0
      %945 = vmatprep.subr.mxu0 0.0
      %946 = vmatpush1.msra.mxu0 0.0
      %947 = vmatprep.subr.mxu0 0.0
      %948 = vmatpush1.msra.mxu0 0.0
      %949 = vmatprep.subr.mxu0 0.0
      %950 = vmatpush1.msra.mxu0 0.0
      %951 = vmatprep.subr.mxu0 0.0
      %952 = vmatpush1.msra.mxu0 0.0
      %953 = vmatprep.subr.mxu0 0.0
      %954 = vmatpush1.msra.mxu0 0.0
      %955 = vmatprep.subr.mxu0 0.0
      %956 = vmatpush1.msra.mxu0 0.0
      %957 = vmatprep.subr.mxu0 0.0
      %958 = vmatpush1.msra.mxu0 0.0
      %959 = vmatprep.subr.mxu0 0.0
      %960 = vmatpush1.msra.mxu0 0.0
      %961 = vmatprep.subr.mxu0 0.0
      %962 = vmatpush1.msra.mxu0 0.0
      %963 = vmatprep.subr.mxu0 0.0
      %964 = vmatpush1.msra.mxu0 0.0
      %965 = vmatprep.subr.mxu0 0.0
      %966 = vmatpush1.msra.mxu0 0.0
      %967 = vmatprep.subr.mxu0 0.0
      %968 = vmatpush1.msra.mxu0 0.0
      %969 = vmatprep.mubr.f32.mxu0 0.0
      %970 = vmatmul.mubr.f32.gmra.mrb[0].mxu0 %v690
      %v971 = vpop.f32.mrb[0].mxu0
      %v972 = vadd.f32 %v568, %v971
      %v973 = vpop.f32.mrb[0].mxu0
      %974 = vmatprep.mubr.f32.mxu0 0.0
      %975 = vmatmul.mubr.f32.gmra.mrb[0].mxu0 %v693
      %v976 = vpop.f32.mrb[0].mxu0
      %v977 = vadd.f32 %v573, %v976
      %v978 = vpop.f32.mrb[0].mxu0
      %979 = vmatprep.mubr.f32.mxu0 0.0
      %980 = vmatmul.mubr.f32.gmra.mrb[0].mxu0 %v696
      %v981 = vpop.f32.mrb[0].mxu0
      %v982 = vadd.f32 %v578, %v981
      %v983 = vpop.f32.mrb[0].mxu0
      %984 = vmatprep.mubr.f32.mxu0 0.0
      %985 = vmatmul.mubr.f32.gmra.mrb[0].mxu0 %v222
      %v986 = vpop.f32.mrb[0].mxu0
      %v987 = vadd.f32 %v583, %v986
      %v988 = vpop.f32.mrb[0].mxu0
      %989 = vmatprep.mubr.f32.mxu0 0.0
      %990 = vmatmul.mubr.f32.gmra.mrb[0].mxu0 %v225
      %v991 = vpop.f32.mrb[0].mxu0
      %v992 = vadd.f32 %v588, %v991
      %v993 = vpop.f32.mrb[0].mxu0
      %994 = vmatprep.mubr.f32.mxu0 0.0
      %995 = vmatmul.mubr.f32.gmra.mrb[0].mxu0 %v228
      %v996 = vpop.f32.mrb[0].mxu0
      %v997 = vadd.f32 %v593, %v996
      %v998 = vpop.f32.mrb[0].mxu0
      %999 = vmatprep.mubr.f32.mxu0 0.0
      %1000 = vmatmul.mubr.f32.gmra.mrb[0].mxu0 %v231
      %v1001 = vpop.f32.mrb[0].mxu0
      %v1002 = vadd.f32 %v598, %v1001
      %v1003 = vpop.f32.mrb[0].mxu0
      %1004 = vmatprep.mubr.f32.mxu0 0.0
      %1005 = vmatmul.mubr.f32.gmra.mrb[0].mxu0 %v234
      %v1006 = vpop.f32.mrb[0].mxu0
      %v1007 = vadd.f32 %v603, %v1006
      %v1008 = vpop.f32.mrb[0].mxu0
      %1009 = vmatprep.mubr.f32.mxu0 0.0
      %1010 = vmatmul.mubr.f32.gmra.mrb[0].mxu0 %v237
      %v1011 = vpop.f32.mrb[0].mxu0
      %v1012 = vadd.f32 %v608, %v1011
      %v1013 = vpop.f32.mrb[0].mxu0
      %1014 = vmatprep.mubr.f32.mxu0 0.0
      %1015 = vmatmul.mubr.f32.gmra.mrb[0].mxu0 %v240
      %v1016 = vpop.f32.mrb[0].mxu0
      %v1017 = vadd.f32 %v613, %v1016
      %v1018 = vpop.f32.mrb[0].mxu0
      %1019 = vmatprep.mubr.f32.mxu0 0.0
      %1020 = vmatmul.mubr.f32.gmra.mrb[0].mxu0 %v243
      %v1021 = vpop.f32.mrb[0].mxu0
      %v1022 = vadd.f32 %v618, %v1021
      %v1023 = vpop.f32.mrb[0].mxu0
      %1024 = vmatprep.mubr.f32.mxu0 0.0
      %1025 = vmatmul.mubr.f32.gmra.mrb[0].mxu0 %v246
      %v1026 = vpop.f32.mrb[0].mxu0
      %v1027 = vadd.f32 %v623, %v1026
      %v1028 = vpop.f32.mrb[0].mxu0
      %1029 = vmatprep.mubr.f32.mxu0 0.0
      %1030 = vmatmul.mubr.f32.gmra.mrb[0].mxu0 %v249
      %v1031 = vpop.f32.mrb[0].mxu0
      %v1032 = vadd.f32 %v628, %v1031
      %v1033 = vpop.f32.mrb[0].mxu0
      %1034 = vmatprep.mubr.f32.mxu0 0.0
      %1035 = vmatmul.mubr.f32.gmra.mrb[0].mxu0 %v252
      %v1036 = vpop.f32.mrb[0].mxu0
      %v1037 = vadd.f32 %v633, %v1036
      %v1038 = vpop.f32.mrb[0].mxu0
      %1039 = vmatprep.mubr.f32.mxu0 0.0
      %1040 = vmatmul.mubr.f32.gmra.mrb[0].mxu0 %v255
      %v1041 = vpop.f32.mrb[0].mxu0
      %v1042 = vadd.f32 %v638, %v1041
      %v1043 = vpop.f32.mrb[0].mxu0
      %1044 = vmatprep.mubr.f32.mxu0 0.0
      %1045 = vmatmul.mubr.f32.gmra.mrb[0].mxu0 %v258
      %v1046 = vpop.f32.mrb[0].mxu0
      %v1047 = vadd.f32 %v643, %v1046
      %v1048 = vpop.f32.mrb[0].mxu0
      %1049 = vmatprep.mubr.f32.mxu0 0.0
      %1050 = vmatmul.mubr.f32.gmra.mrb[0].mxu0 %v261
      %v1051 = vpop.f32.mrb[0].mxu0
      %v1052 = vadd.f32 %v648, %v1051
      %v1053 = vpop.f32.mrb[0].mxu0
      %1054 = vmatprep.mubr.f32.mxu0 0.0
      %1055 = vmatmul.mubr.f32.gmra.mrb[0].mxu0 %v264
      %v1056 = vpop.f32.mrb[0].mxu0
      %v1057 = vadd.f32 %v653, %v1056
      %v1058 = vpop.f32.mrb[0].mxu0
      %1059 = vmatprep.mubr.f32.mxu0 0.0
      %1060 = vmatmul.mubr.f32.gmra.mrb[0].mxu0 %v267
      %v1061 = vpop.f32.mrb[0].mxu0
      %v1062 = vadd.f32 %v658, %v1061
      %v1063 = vpop.f32.mrb[0].mxu0
      %1064 = vmatprep.mubr.f32.mxu0 0.0
      %1065 = vmatmul.mubr.f32.gmra.mrb[0].mxu0 %v270
      %v1066 = vpop.f32.mrb[0].mxu0
      %v1067 = vadd.f32 %v663, %v1066
      %v1068 = vpop.f32.mrb[0].mxu0
      %1069 = vmatprep.mubr.f32.mxu0 0.0
      %1070 = vmatmul.mubr.f32.gmra.mrb[0].mxu0 %v273
      %v1071 = vpop.f32.mrb[0].mxu0
      %v1072 = vadd.f32 %v668, %v1071
      %v1073 = vpop.f32.mrb[0].mxu0
      %1074 = vmatprep.mubr.f32.mxu0 0.0
      %1075 = vmatmul.mubr.f32.gmra.mrb[0].mxu0 %v276
      %v1076 = vpop.f32.mrb[0].mxu0
      %v1077 = vadd.f32 %v673, %v1076
      %v1078 = vpop.f32.mrb[0].mxu0
      %1079 = vmatprep.mubr.f32.mxu0 0.0
      %1080 = vmatmul.mubr.f32.gmra.mrb[0].mxu0 %v279
      %v1081 = vpop.f32.mrb[0].mxu0
      %v1082 = vadd.f32 %v678, %v1081
      %v1083 = vpop.f32.mrb[0].mxu0
      %1084 = vmatprep.mubr.f32.mxu0 0.0
      %1085 = vmatmul.mubr.f32.gmra.mrb[0].mxu0 %v282
      %v1086 = vpop.f32.mrb[0].mxu0
      %v1087 = vadd.f32 %v683, %v1086
      %v1088 = vpop.f32.mrb[0].mxu0
      %1089 = vdwg.mxu0
      %s1090 = scalar_lea.vmem %s1, 24
      %v1091 = vld [vmem:[%s1090] sm:$0xff]
      %v1092 = vld [vmem:[%s1090 + $0x8] sm:$0xf]
      %v1095 = vcombine.high %v1091, %v1091
      %v1097 = vsel %vm220, %v209, 0
      %v1100 = vsel %vm220, %v210, 0
      %v1103 = vsel %vm220, %v211, 0
      %v1105 = vsel %vm293, %v1091, 0
      %v1107 = vsel %vm293, %v1095, 0
      %v1109 = vsel %vm293, %v1092, 0
      %1111 = vmatprep.subr.mxu0 %v1107
      %1112 = vmatpush1.msra.mxu0 %v1105
      %1113 = vmatprep.subr.mxu0 0.0
      %1114 = vmatpush1.msra.mxu0 0.0
      %1115 = vmatprep.subr.mxu0 0.0
      %1116 = vmatpush1.msra.mxu0 0.0
      %1117 = vmatprep.subr.mxu0 0.0
      %1118 = vmatpush1.msra.mxu0 0.0
      %1119 = vmatprep.subr.mxu0 0.0
      %1120 = vmatpush1.msra.mxu0 0.0
      %1121 = vmatprep.subr.mxu0 0.0
      %1122 = vmatpush1.msra.mxu0 0.0
      %1123 = vmatprep.subr.mxu0 0.0
      %1124 = vmatpush1.msra.mxu0 0.0
      %1125 = vmatprep.subr.mxu0 0.0
      %1126 = vmatpush1.msra.mxu0 0.0
      %1127 = vmatprep.subr.mxu0 0.0
      %1128 = vmatpush1.msra.mxu0 0.0
      %1129 = vmatprep.subr.mxu0 0.0
      %1130 = vmatpush1.msra.mxu0 0.0
      %1131 = vmatprep.subr.mxu0 0.0
      %1132 = vmatpush1.msra.mxu0 0.0
      %1133 = vmatprep.subr.mxu0 0.0
      %1134 = vmatpush1.msra.mxu0 0.0
      %1135 = vmatprep.subr.mxu0 0.0
      %1136 = vmatpush1.msra.mxu0 0.0
      %1137 = vmatprep.subr.mxu0 0.0
      %1138 = vmatpush1.msra.mxu0 0.0
      %1139 = vmatprep.subr.mxu0 0.0
      %1140 = vmatpush1.msra.mxu0 0.0
      %1141 = vmatprep.subr.mxu0 0.0
      %1142 = vmatpush1.msra.mxu0 0.0
      %1143 = vmatprep.subr.mxu0 0.0
      %1144 = vmatpush1.msra.mxu0 0.0
      %1145 = vmatprep.subr.mxu0 0.0
      %1146 = vmatpush1.msra.mxu0 0.0
      %1147 = vmatprep.subr.mxu0 0.0
      %1148 = vmatpush1.msra.mxu0 0.0
      %1149 = vmatprep.subr.mxu0 0.0
      %1150 = vmatpush1.msra.mxu0 0.0
      %1151 = vmatprep.subr.mxu0 0.0
      %1152 = vmatpush1.msra.mxu0 0.0
      %1153 = vmatprep.subr.mxu0 0.0
      %1154 = vmatpush1.msra.mxu0 0.0
      %1155 = vmatprep.subr.mxu0 0.0
      %1156 = vmatpush1.msra.mxu0 0.0
      %1157 = vmatprep.subr.mxu0 0.0
      %1158 = vmatpush1.msra.mxu0 0.0
      %1159 = vmatprep.subr.mxu0 0.0
      %1160 = vmatpush1.msra.mxu0 0.0
      %1161 = vmatprep.subr.mxu0 0.0
      %1162 = vmatpush1.msra.mxu0 0.0
      %1163 = vmatprep.subr.mxu0 0.0
      %1164 = vmatpush1.msra.mxu0 0.0
      %1165 = vmatprep.subr.mxu0 0.0
      %1166 = vmatpush1.msra.mxu0 0.0
      %1167 = vmatprep.subr.mxu0 0.0
      %1168 = vmatpush1.msra.mxu0 0.0
      %1169 = vmatprep.subr.mxu0 0.0
      %1170 = vmatpush1.msra.mxu0 0.0
      %1171 = vmatprep.subr.mxu0 0.0
      %1172 = vmatpush1.msra.mxu0 0.0
      %1173 = vmatprep.subr.mxu0 0.0
      %1174 = vmatpush1.msra.mxu0 0.0
      %1175 = vmatprep.mubr.f32.mxu0 0.0
      %1176 = vmatmul.mubr.f32.gmra.mrb[0].mxu0 %v231
      %v1177 = vpop.f32.mrb[0].mxu0
      %v1178 = vadd.f32 0.0, %v1177
      %v1179 = vpop.f32.mrb[0].mxu0
      %v1180 = vadd.f32 0.0, %v1179
      %1181 = vmatprep.mubr.f32.mxu0 0.0
      %1182 = vmatmul.mubr.f32.gmra.mrb[0].mxu0 %v234
      %v1183 = vpop.f32.mrb[0].mxu0
      %v1184 = vadd.f32 0.0, %v1183
      %v1185 = vpop.f32.mrb[0].mxu0
      %v1186 = vadd.f32 0.0, %v1185
      %1187 = vmatprep.mubr.f32.mxu0 0.0
      %1188 = vmatmul.mubr.f32.gmra.mrb[0].mxu0 %v237
      %v1189 = vpop.f32.mrb[0].mxu0
      %v1190 = vpop.f32.mrb[0].mxu0
      %v1191 = vadd.f32 0.0, %v1190
      %1192 = vmatprep.mubr.f32.mxu0 0.0
      %1193 = vmatmul.mubr.f32.gmra.mrb[0].mxu0 %v240
      %v1194 = vpop.f32.mrb[0].mxu0
      %v1195 = vadd.f32 0.0, %v1194
      %v1196 = vpop.f32.mrb[0].mxu0
      %v1197 = vadd.f32 0.0, %v1196
      %1198 = vmatprep.mubr.f32.mxu0 0.0
      %1199 = vmatmul.mubr.f32.gmra.mrb[0].mxu0 %v243
      %v1200 = vpop.f32.mrb[0].mxu0
      %v1201 = vadd.f32 0.0, %v1200
      %v1202 = vpop.f32.mrb[0].mxu0
      %v1203 = vadd.f32 0.0, %v1202
      %1204 = vmatprep.mubr.f32.mxu0 0.0
      %1205 = vmatmul.mubr.f32.gmra.mrb[0].mxu0 %v246
      %v1206 = vpop.f32.mrb[0].mxu0
      %v1207 = vpop.f32.mrb[0].mxu0
      %v1208 = vadd.f32 0.0, %v1207
      %1209 = vmatprep.mubr.f32.mxu0 0.0
      %1210 = vmatmul.mubr.f32.gmra.mrb[0].mxu0 %v249
      %v1211 = vpop.f32.mrb[0].mxu0
      %v1212 = vadd.f32 0.0, %v1211
      %v1213 = vpop.f32.mrb[0].mxu0
      %v1214 = vadd.f32 0.0, %v1213
      %1215 = vmatprep.mubr.f32.mxu0 0.0
      %1216 = vmatmul.mubr.f32.gmra.mrb[0].mxu0 %v252
      %v1217 = vpop.f32.mrb[0].mxu0
      %v1218 = vadd.f32 0.0, %v1217
      %v1219 = vpop.f32.mrb[0].mxu0
      %v1220 = vadd.f32 0.0, %v1219
      %1221 = vmatprep.mubr.f32.mxu0 0.0
      %1222 = vmatmul.mubr.f32.gmra.mrb[0].mxu0 %v255
      %v1223 = vpop.f32.mrb[0].mxu0
      %v1224 = vpop.f32.mrb[0].mxu0
      %v1225 = vadd.f32 0.0, %v1224
      %1226 = vmatprep.mubr.f32.mxu0 0.0
      %1227 = vmatmul.mubr.f32.gmra.mrb[0].mxu0 %v258
      %v1228 = vpop.f32.mrb[0].mxu0
      %v1229 = vadd.f32 0.0, %v1228
      %v1230 = vpop.f32.mrb[0].mxu0
      %v1231 = vadd.f32 0.0, %v1230
      %1232 = vmatprep.mubr.f32.mxu0 0.0
      %1233 = vmatmul.mubr.f32.gmra.mrb[0].mxu0 %v261
      %v1234 = vpop.f32.mrb[0].mxu0
      %v1235 = vadd.f32 0.0, %v1234
      %v1236 = vpop.f32.mrb[0].mxu0
      %v1237 = vadd.f32 0.0, %v1236
      %1238 = vmatprep.mubr.f32.mxu0 0.0
      %1239 = vmatmul.mubr.f32.gmra.mrb[0].mxu0 %v264
      %v1240 = vpop.f32.mrb[0].mxu0
      %v1241 = vpop.f32.mrb[0].mxu0
      %v1242 = vadd.f32 0.0, %v1241
      %1243 = vmatprep.mubr.f32.mxu0 0.0
      %1244 = vmatmul.mubr.f32.gmra.mrb[0].mxu0 %v267
      %v1245 = vpop.f32.mrb[0].mxu0
      %v1246 = vadd.f32 0.0, %v1245
      %v1247 = vpop.f32.mrb[0].mxu0
      %v1248 = vadd.f32 0.0, %v1247
      %1249 = vmatprep.mubr.f32.mxu0 0.0
      %1250 = vmatmul.mubr.f32.gmra.mrb[0].mxu0 %v270
      %v1251 = vpop.f32.mrb[0].mxu0
      %v1252 = vadd.f32 0.0, %v1251
      %v1253 = vpop.f32.mrb[0].mxu0
      %v1254 = vadd.f32 0.0, %v1253
      %1255 = vmatprep.mubr.f32.mxu0 0.0
      %1256 = vmatmul.mubr.f32.gmra.mrb[0].mxu0 %v273
      %v1257 = vpop.f32.mrb[0].mxu0
      %v1258 = vpop.f32.mrb[0].mxu0
      %v1259 = vadd.f32 0.0, %v1258
      %1260 = vmatprep.mubr.f32.mxu0 0.0
      %1261 = vmatmul.mubr.f32.gmra.mrb[0].mxu0 %v276
      %v1262 = vpop.f32.mrb[0].mxu0
      %v1263 = vadd.f32 0.0, %v1262
      %v1264 = vpop.f32.mrb[0].mxu0
      %v1265 = vadd.f32 0.0, %v1264
      %1266 = vmatprep.mubr.f32.mxu0 0.0
      %1267 = vmatmul.mubr.f32.gmra.mrb[0].mxu0 %v279
      %v1268 = vpop.f32.mrb[0].mxu0
      %v1269 = vadd.f32 0.0, %v1268
      %v1270 = vpop.f32.mrb[0].mxu0
      %v1271 = vadd.f32 0.0, %v1270
      %1272 = vmatprep.mubr.f32.mxu0 0.0
      %1273 = vmatmul.mubr.f32.gmra.mrb[0].mxu0 %v282
      %v1274 = vpop.f32.mrb[0].mxu0
      %v1275 = vpop.f32.mrb[0].mxu0
      %v1276 = vadd.f32 0.0, %v1275
      %1277 = vmatprep.mubr.f32.mxu0 0.0
      %1278 = vmatmul.mubr.f32.gmra.mrb[0].mxu0 %v285
      %v1279 = vpop.f32.mrb[0].mxu0
      %v1280 = vadd.f32 0.0, %v1279
      %v1281 = vpop.f32.mrb[0].mxu0
      %v1282 = vadd.f32 0.0, %v1281
      %1283 = vmatprep.mubr.f32.mxu0 0.0
      %1284 = vmatmul.mubr.f32.gmra.mrb[0].mxu0 %v288
      %v1285 = vpop.f32.mrb[0].mxu0
      %v1286 = vadd.f32 0.0, %v1285
      %v1287 = vpop.f32.mrb[0].mxu0
      %v1288 = vadd.f32 0.0, %v1287
      %1289 = vmatprep.mubr.f32.mxu0 0.0
      %1290 = vmatmul.mubr.f32.gmra.mrb[0].mxu0 %v291
      %v1291 = vpop.f32.mrb[0].mxu0
      %v1292 = vpop.f32.mrb[0].mxu0
      %v1293 = vadd.f32 0.0, %v1292
      %1294 = vmatprep.mubr.f32.mxu0 0.0
      %1295 = vmatmul.mubr.f32.gmra.mrb[0].mxu0 %v1097
      %v1296 = vpop.f32.mrb[0].mxu0
      %v1297 = vadd.f32 0.0, %v1296
      %v1298 = vpop.f32.mrb[0].mxu0
      %v1299 = vadd.f32 0.0, %v1298
      %1300 = vmatprep.mubr.f32.mxu0 0.0
      %1301 = vmatmul.mubr.f32.gmra.mrb[0].mxu0 %v1100
      %v1302 = vpop.f32.mrb[0].mxu0
      %v1303 = vadd.f32 0.0, %v1302
      %v1304 = vpop.f32.mrb[0].mxu0
      %v1305 = vadd.f32 0.0, %v1304
      %1306 = vmatprep.mubr.f32.mxu0 0.0
      %1307 = vmatmul.mubr.f32.gmra.mrb[0].mxu0 %v1103
      %v1308 = vpop.f32.mrb[0].mxu0
      %v1309 = vpop.f32.mrb[0].mxu0
      %v1310 = vadd.f32 0.0, %v1309
      %1311 = vdwg.mxu0
      %1312 = vmatprep.subr.mxu0 0.0
      %1313 = vmatpush1.msra.mxu0 %v1109
      %1314 = vmatprep.subr.mxu0 0.0
      %1315 = vmatpush1.msra.mxu0 0.0
      %1316 = vmatprep.subr.mxu0 0.0
      %1317 = vmatpush1.msra.mxu0 0.0
      %1318 = vmatprep.subr.mxu0 0.0
      %1319 = vmatpush1.msra.mxu0 0.0
      %1320 = vmatprep.subr.mxu0 0.0
      %1321 = vmatpush1.msra.mxu0 0.0
      %1322 = vmatprep.subr.mxu0 0.0
      %1323 = vmatpush1.msra.mxu0 0.0
      %1324 = vmatprep.subr.mxu0 0.0
      %1325 = vmatpush1.msra.mxu0 0.0
      %1326 = vmatprep.subr.mxu0 0.0
      %1327 = vmatpush1.msra.mxu0 0.0
      %1328 = vmatprep.subr.mxu0 0.0
      %1329 = vmatpush1.msra.mxu0 0.0
      %1330 = vmatprep.subr.mxu0 0.0
      %1331 = vmatpush1.msra.mxu0 0.0
      %1332 = vmatprep.subr.mxu0 0.0
      %1333 = vmatpush1.msra.mxu0 0.0
      %1334 = vmatprep.subr.mxu0 0.0
      %1335 = vmatpush1.msra.mxu0 0.0
      %1336 = vmatprep.subr.mxu0 0.0
      %1337 = vmatpush1.msra.mxu0 0.0
      %1338 = vmatprep.subr.mxu0 0.0
      %1339 = vmatpush1.msra.mxu0 0.0
      %1340 = vmatprep.subr.mxu0 0.0
      %1341 = vmatpush1.msra.mxu0 0.0
      %1342 = vmatprep.subr.mxu0 0.0
      %1343 = vmatpush1.msra.mxu0 0.0
      %1344 = vmatprep.subr.mxu0 0.0
      %1345 = vmatpush1.msra.mxu0 0.0
      %1346 = vmatprep.subr.mxu0 0.0
      %1347 = vmatpush1.msra.mxu0 0.0
      %1348 = vmatprep.subr.mxu0 0.0
      %1349 = vmatpush1.msra.mxu0 0.0
      %1350 = vmatprep.subr.mxu0 0.0
      %1351 = vmatpush1.msra.mxu0 0.0
      %1352 = vmatprep.subr.mxu0 0.0
      %1353 = vmatpush1.msra.mxu0 0.0
      %1354 = vmatprep.subr.mxu0 0.0
      %1355 = vmatpush1.msra.mxu0 0.0
      %1356 = vmatprep.subr.mxu0 0.0
      %1357 = vmatpush1.msra.mxu0 0.0
      %1358 = vmatprep.subr.mxu0 0.0
      %1359 = vmatpush1.msra.mxu0 0.0
      %1360 = vmatprep.subr.mxu0 0.0
      %1361 = vmatpush1.msra.mxu0 0.0
      %1362 = vmatprep.subr.mxu0 0.0
      %1363 = vmatpush1.msra.mxu0 0.0
      %1364 = vmatprep.subr.mxu0 0.0
      %1365 = vmatpush1.msra.mxu0 0.0
      %1366 = vmatprep.subr.mxu0 0.0
      %1367 = vmatpush1.msra.mxu0 0.0
      %1368 = vmatprep.subr.mxu0 0.0
      %1369 = vmatpush1.msra.mxu0 0.0
      %1370 = vmatprep.subr.mxu0 0.0
      %1371 = vmatpush1.msra.mxu0 0.0
      %1372 = vmatprep.subr.mxu0 0.0
      %1373 = vmatpush1.msra.mxu0 0.0
      %1374 = vmatprep.subr.mxu0 0.0
      %1375 = vmatpush1.msra.mxu0 0.0
      %1376 = vmatprep.mubr.f32.mxu0 0.0
      %1377 = vmatmul.mubr.f32.gmra.mrb[0].mxu0 %v231
      %v1378 = vpop.f32.mrb[0].mxu0
      %v1379 = vadd.f32 0.0, %v1378
      %v1380 = vpop.f32.mrb[0].mxu0
      %1381 = vmatprep.mubr.f32.mxu0 0.0
      %1382 = vmatmul.mubr.f32.gmra.mrb[0].mxu0 %v234
      %v1383 = vpop.f32.mrb[0].mxu0
      %v1384 = vadd.f32 0.0, %v1383
      %v1385 = vpop.f32.mrb[0].mxu0
      %1386 = vmatprep.mubr.f32.mxu0 0.0
      %1387 = vmatmul.mubr.f32.gmra.mrb[0].mxu0 %v237
      %v1388 = vpop.f32.mrb[0].mxu0
      %v1389 = vadd.f32 0.0, %v1388
      %v1390 = vpop.f32.mrb[0].mxu0
      %1391 = vmatprep.mubr.f32.mxu0 0.0
      %1392 = vmatmul.mubr.f32.gmra.mrb[0].mxu0 %v240
      %v1393 = vpop.f32.mrb[0].mxu0
      %v1394 = vadd.f32 0.0, %v1393
      %v1395 = vpop.f32.mrb[0].mxu0
      %1396 = vmatprep.mubr.f32.mxu0 0.0
      %1397 = vmatmul.mubr.f32.gmra.mrb[0].mxu0 %v243
      %v1398 = vpop.f32.mrb[0].mxu0
      %v1399 = vadd.f32 0.0, %v1398
      %v1400 = vpop.f32.mrb[0].mxu0
      %1401 = vmatprep.mubr.f32.mxu0 0.0
      %1402 = vmatmul.mubr.f32.gmra.mrb[0].mxu0 %v246
      %v1403 = vpop.f32.mrb[0].mxu0
      %v1404 = vadd.f32 0.0, %v1403
      %v1405 = vpop.f32.mrb[0].mxu0
      %1406 = vmatprep.mubr.f32.mxu0 0.0
      %1407 = vmatmul.mubr.f32.gmra.mrb[0].mxu0 %v249
      %v1408 = vpop.f32.mrb[0].mxu0
      %v1409 = vadd.f32 0.0, %v1408
      %v1410 = vpop.f32.mrb[0].mxu0
      %1411 = vmatprep.mubr.f32.mxu0 0.0
      %1412 = vmatmul.mubr.f32.gmra.mrb[0].mxu0 %v252
      %v1413 = vpop.f32.mrb[0].mxu0
      %v1414 = vadd.f32 0.0, %v1413
      %v1415 = vpop.f32.mrb[0].mxu0
      %1416 = vmatprep.mubr.f32.mxu0 0.0
      %1417 = vmatmul.mubr.f32.gmra.mrb[0].mxu0 %v255
      %v1418 = vpop.f32.mrb[0].mxu0
      %v1419 = vadd.f32 0.0, %v1418
      %v1420 = vpop.f32.mrb[0].mxu0
      %1421 = vmatprep.mubr.f32.mxu0 0.0
      %1422 = vmatmul.mubr.f32.gmra.mrb[0].mxu0 %v258
      %v1423 = vpop.f32.mrb[0].mxu0
      %v1424 = vadd.f32 0.0, %v1423
      %v1425 = vpop.f32.mrb[0].mxu0
      %1426 = vmatprep.mubr.f32.mxu0 0.0
      %1427 = vmatmul.mubr.f32.gmra.mrb[0].mxu0 %v261
      %v1428 = vpop.f32.mrb[0].mxu0
      %v1429 = vadd.f32 0.0, %v1428
      %v1430 = vpop.f32.mrb[0].mxu0
      %1431 = vmatprep.mubr.f32.mxu0 0.0
      %1432 = vmatmul.mubr.f32.gmra.mrb[0].mxu0 %v264
      %v1433 = vpop.f32.mrb[0].mxu0
      %v1434 = vadd.f32 0.0, %v1433
      %v1435 = vpop.f32.mrb[0].mxu0
      %1436 = vmatprep.mubr.f32.mxu0 0.0
      %1437 = vmatmul.mubr.f32.gmra.mrb[0].mxu0 %v267
      %v1438 = vpop.f32.mrb[0].mxu0
      %v1439 = vadd.f32 0.0, %v1438
      %v1440 = vpop.f32.mrb[0].mxu0
      %1441 = vmatprep.mubr.f32.mxu0 0.0
      %1442 = vmatmul.mubr.f32.gmra.mrb[0].mxu0 %v270
      %v1443 = vpop.f32.mrb[0].mxu0
      %v1444 = vadd.f32 0.0, %v1443
      %v1445 = vpop.f32.mrb[0].mxu0
      %1446 = vmatprep.mubr.f32.mxu0 0.0
      %1447 = vmatmul.mubr.f32.gmra.mrb[0].mxu0 %v273
      %v1448 = vpop.f32.mrb[0].mxu0
      %v1449 = vadd.f32 0.0, %v1448
      %v1450 = vpop.f32.mrb[0].mxu0
      %1451 = vmatprep.mubr.f32.mxu0 0.0
      %1452 = vmatmul.mubr.f32.gmra.mrb[0].mxu0 %v276
      %v1453 = vpop.f32.mrb[0].mxu0
      %v1454 = vadd.f32 0.0, %v1453
      %v1455 = vpop.f32.mrb[0].mxu0
      %1456 = vmatprep.mubr.f32.mxu0 0.0
      %1457 = vmatmul.mubr.f32.gmra.mrb[0].mxu0 %v279
      %v1458 = vpop.f32.mrb[0].mxu0
      %v1459 = vadd.f32 0.0, %v1458
      %v1460 = vpop.f32.mrb[0].mxu0
      %1461 = vmatprep.mubr.f32.mxu0 0.0
      %1462 = vmatmul.mubr.f32.gmra.mrb[0].mxu0 %v282
      %v1463 = vpop.f32.mrb[0].mxu0
      %v1464 = vadd.f32 0.0, %v1463
      %v1465 = vpop.f32.mrb[0].mxu0
      %1466 = vmatprep.mubr.f32.mxu0 0.0
      %1467 = vmatmul.mubr.f32.gmra.mrb[0].mxu0 %v285
      %v1468 = vpop.f32.mrb[0].mxu0
      %v1469 = vadd.f32 0.0, %v1468
      %v1470 = vpop.f32.mrb[0].mxu0
      %1471 = vmatprep.mubr.f32.mxu0 0.0
      %1472 = vmatmul.mubr.f32.gmra.mrb[0].mxu0 %v288
      %v1473 = vpop.f32.mrb[0].mxu0
      %v1474 = vadd.f32 0.0, %v1473
      %v1475 = vpop.f32.mrb[0].mxu0
      %1476 = vmatprep.mubr.f32.mxu0 0.0
      %1477 = vmatmul.mubr.f32.gmra.mrb[0].mxu0 %v291
      %v1478 = vpop.f32.mrb[0].mxu0
      %v1479 = vadd.f32 0.0, %v1478
      %v1480 = vpop.f32.mrb[0].mxu0
      %1481 = vmatprep.mubr.f32.mxu0 0.0
      %1482 = vmatmul.mubr.f32.gmra.mrb[0].mxu0 %v1097
      %v1483 = vpop.f32.mrb[0].mxu0
      %v1484 = vadd.f32 0.0, %v1483
      %v1485 = vpop.f32.mrb[0].mxu0
      %1486 = vmatprep.mubr.f32.mxu0 0.0
      %1487 = vmatmul.mubr.f32.gmra.mrb[0].mxu0 %v1100
      %v1488 = vpop.f32.mrb[0].mxu0
      %v1489 = vadd.f32 0.0, %v1488
      %v1490 = vpop.f32.mrb[0].mxu0
      %1491 = vmatprep.mubr.f32.mxu0 0.0
      %1492 = vmatmul.mubr.f32.gmra.mrb[0].mxu0 %v1103
      %v1493 = vpop.f32.mrb[0].mxu0
      %v1494 = vadd.f32 0.0, %v1493
      %v1495 = vpop.f32.mrb[0].mxu0
      %1496 = vdwg.mxu0
      %v1497 = vadd.f32 %v771, %v1178
      %v1498 = vadd.f32 %v773, %v1180
      %v1499 = vadd.f32 %v972, %v1379
      %v1500 = vadd.f32 %v777, %v1184
      %v1501 = vadd.f32 %v779, %v1186
      %v1502 = vadd.f32 %v977, %v1384
      %v1503 = vadd.f32 %v784, %v1191
      %v1504 = vadd.f32 %v982, %v1389
      %v1505 = vadd.f32 %v788, %v1195
      %v1506 = vadd.f32 %v790, %v1197
      %v1507 = vadd.f32 %v987, %v1394
      %v1508 = vadd.f32 %v794, %v1201
      %v1509 = vadd.f32 %v796, %v1203
      %v1510 = vadd.f32 %v992, %v1399
      %v1511 = vadd.f32 %v801, %v1208
      %v1512 = vadd.f32 %v997, %v1404
      %v1513 = vadd.f32 %v805, %v1212
      %v1514 = vadd.f32 %v807, %v1214
      %v1515 = vadd.f32 %v1002, %v1409
      %v1516 = vadd.f32 %v811, %v1218
      %v1517 = vadd.f32 %v813, %v1220
      %v1518 = vadd.f32 %v1007, %v1414
      %v1519 = vadd.f32 %v818, %v1225
      %v1520 = vadd.f32 %v1012, %v1419
      %v1521 = vadd.f32 %v822, %v1229
      %v1522 = vadd.f32 %v824, %v1231
      %v1523 = vadd.f32 %v1017, %v1424
      %v1524 = vadd.f32 %v828, %v1235
      %v1525 = vadd.f32 %v830, %v1237
      %v1526 = vadd.f32 %v1022, %v1429
      %v1527 = vadd.f32 %v835, %v1242
      %v1528 = vadd.f32 %v1027, %v1434
      %v1529 = vadd.f32 %v839, %v1246
      %v1530 = vadd.f32 %v841, %v1248
      %v1531 = vadd.f32 %v1032, %v1439
      %v1532 = vadd.f32 %v845, %v1252
      %v1533 = vadd.f32 %v847, %v1254
      %v1534 = vadd.f32 %v1037, %v1444
      %v1535 = vadd.f32 %v852, %v1259
      %v1536 = vadd.f32 %v1042, %v1449
      %v1537 = vadd.f32 %v856, %v1263
      %v1538 = vadd.f32 %v858, %v1265
      %v1539 = vadd.f32 %v1047, %v1454
      %v1540 = vadd.f32 %v862, %v1269
      %v1541 = vadd.f32 %v864, %v1271
      %v1542 = vadd.f32 %v1052, %v1459
      %v1543 = vadd.f32 %v869, %v1276
      %v1544 = vadd.f32 %v1057, %v1464
      %v1545 = vadd.f32 %v873, %v1280
      %v1546 = vadd.f32 %v875, %v1282
      %v1547 = vadd.f32 %v1062, %v1469
      %v1548 = vadd.f32 %v879, %v1286
      %v1549 = vadd.f32 %v881, %v1288
      %v1550 = vadd.f32 %v1067, %v1474
      %v1551 = vadd.f32 %v886, %v1293
      %v1552 = vadd.f32 %v1072, %v1479
      %v1553 = vadd.f32 %v890, %v1297
      %v1554 = vadd.f32 %v892, %v1299
      %v1555 = vadd.f32 %v1077, %v1484
      %v1556 = vadd.f32 %v896, %v1303
      %v1557 = vadd.f32 %v898, %v1305
      %v1558 = vadd.f32 %v1082, %v1489
      %v1559 = vadd.f32 %v903, %v1310
      %v1560 = vadd.f32 %v1087, %v1494
      %vm1585 = vcmask 1046528
      %v1586 = vrot.slane %v1498, 1
      %v1587 = vrot.slane %v1501, 1
      %v1588 = vsel %vm1585, %v1586, %v1587
      %v1589 = vrot.slane %v1503, 1
      %v1590 = vsel %vm1585, %v1587, %v1589
      %v1591 = vrot.slane %v1506, 1
      %v1592 = vrot.slane %v1509, 1
      %v1593 = vsel %vm1585, %v1591, %v1592
      %v1594 = vrot.slane %v1511, 1
      %v1595 = vsel %vm1585, %v1592, %v1594
      %v1596 = vrot.slane %v1514, 1
      %v1597 = vrot.slane %v1517, 1
      %v1598 = vsel %vm1585, %v1596, %v1597
      %v1599 = vrot.slane %v1519, 1
      %v1600 = vsel %vm1585, %v1597, %v1599
      %v1601 = vrot.slane %v1522, 1
      %v1602 = vrot.slane %v1525, 1
      %v1603 = vsel %vm1585, %v1601, %v1602
      %v1604 = vrot.slane %v1527, 1
      %v1605 = vsel %vm1585, %v1602, %v1604
      %v1606 = vrot.slane %v1530, 1
      %v1607 = vrot.slane %v1533, 1
      %v1608 = vsel %vm1585, %v1606, %v1607
      %v1609 = vrot.slane %v1535, 1
      %v1610 = vsel %vm1585, %v1607, %v1609
      %v1611 = vrot.slane %v1538, 1
      %v1612 = vrot.slane %v1541, 1
      %v1613 = vsel %vm1585, %v1611, %v1612
      %v1614 = vrot.slane %v1543, 1
      %v1615 = vsel %vm1585, %v1612, %v1614
      %v1616 = vrot.slane %v1546, 1
      %v1617 = vrot.slane %v1549, 1
      %v1618 = vsel %vm1585, %v1616, %v1617
      %v1619 = vrot.slane %v1551, 1
      %v1620 = vsel %vm1585, %v1617, %v1619
      %v1621 = vrot.slane %v1554, 1
      %v1622 = vrot.slane %v1557, 1
      %v1623 = vsel %vm1585, %v1621, %v1622
      %v1624 = vrot.slane %v1559, 1
      %v1625 = vsel %vm1585, %v1622, %v1624
      %v1642 = vadd.f32 %v1497, %v1588
      %v1643 = vadd.f32 %v1500, %v1590
      %v1644 = vadd.f32 %v1505, %v1593
      %v1645 = vadd.f32 %v1508, %v1595
      %v1646 = vadd.f32 %v1513, %v1598
      %v1647 = vadd.f32 %v1516, %v1600
      %v1648 = vadd.f32 %v1521, %v1603
      %v1649 = vadd.f32 %v1524, %v1605
      %v1650 = vadd.f32 %v1529, %v1608
      %v1651 = vadd.f32 %v1532, %v1610
      %v1652 = vadd.f32 %v1537, %v1613
      %v1653 = vadd.f32 %v1540, %v1615
      %v1654 = vadd.f32 %v1545, %v1618
      %v1655 = vadd.f32 %v1548, %v1620
      %v1656 = vadd.f32 %v1553, %v1623
      %v1657 = vadd.f32 %v1556, %v1625
      %vm1682 = vcmask 1045504
      %v1683 = vrot.slane %v1499, 2
      %v1684 = vrot.slane %v1502, 2
      %v1685 = vsel %vm1682, %v1683, %v1684
      %v1686 = vrot.slane %v1504, 2
      %v1687 = vsel %vm1682, %v1684, %v1686
      %v1688 = vrot.slane %v1507, 2
      %v1689 = vrot.slane %v1510, 2
      %v1690 = vsel %vm1682, %v1688, %v1689
      %v1691 = vrot.slane %v1512, 2
      %v1692 = vsel %vm1682, %v1689, %v1691
      %v1693 = vrot.slane %v1515, 2
      %v1694 = vrot.slane %v1518, 2
      %v1695 = vsel %vm1682, %v1693, %v1694
      %v1696 = vrot.slane %v1520, 2
      %v1697 = vsel %vm1682, %v1694, %v1696
      %v1698 = vrot.slane %v1523, 2
      %v1699 = vrot.slane %v1526, 2
      %v1700 = vsel %vm1682, %v1698, %v1699
      %v1701 = vrot.slane %v1528, 2
      %v1702 = vsel %vm1682, %v1699, %v1701
      %v1703 = vrot.slane %v1531, 2
      %v1704 = vrot.slane %v1534, 2
      %v1705 = vsel %vm1682, %v1703, %v1704
      %v1706 = vrot.slane %v1536, 2
      %v1707 = vsel %vm1682, %v1704, %v1706
      %v1708 = vrot.slane %v1539, 2
      %v1709 = vrot.slane %v1542, 2
      %v1710 = vsel %vm1682, %v1708, %v1709
      %v1711 = vrot.slane %v1544, 2
      %v1712 = vsel %vm1682, %v1709, %v1711
      %v1713 = vrot.slane %v1547, 2
      %v1714 = vrot.slane %v1550, 2
      %v1715 = vsel %vm1682, %v1713, %v1714
      %v1716 = vrot.slane %v1552, 2
      %v1717 = vsel %vm1682, %v1714, %v1716
      %v1718 = vrot.slane %v1555, 2
      %v1719 = vrot.slane %v1558, 2
      %v1720 = vsel %vm1682, %v1718, %v1719
      %v1721 = vrot.slane %v1560, 2
      %v1722 = vsel %vm1682, %v1719, %v1721
      %v1739 = vadd.f32 %v1642, %v1685
      %v1740 = vadd.f32 %v1643, %v1687
      %v1741 = vadd.f32 %v1644, %v1690
      %v1742 = vadd.f32 %v1645, %v1692
      %v1743 = vadd.f32 %v1646, %v1695
      %v1744 = vadd.f32 %v1647, %v1697
      %v1745 = vadd.f32 %v1648, %v1700
      %v1746 = vadd.f32 %v1649, %v1702
      %v1747 = vadd.f32 %v1650, %v1705
      %v1748 = vadd.f32 %v1651, %v1707
      %v1749 = vadd.f32 %v1652, %v1710
      %v1750 = vadd.f32 %v1653, %v1712
      %v1751 = vadd.f32 %v1654, %v1715
      %v1752 = vadd.f32 %v1655, %v1717
      %v1753 = vadd.f32 %v1656, %v1720
      %v1754 = vadd.f32 %v1657, %v1722
      %1755 = vst [vmem:[%s177] sm:$0xff] %v1739
      %1756 = vst [vmem:[%s177 + $0x8] sm:$0xff] %v1740
      %1757 = vst [vmem:[%s177 + $0x10] sm:$0xff] %v1741
      %1758 = vst [vmem:[%s177 + $0x18] sm:$0xff] %v1742
      %1759 = vst [vmem:[%s177 + $0x20] sm:$0xff] %v1743
      %1760 = vst [vmem:[%s177 + $0x28] sm:$0xff] %v1744
      %1761 = vst [vmem:[%s177 + $0x30] sm:$0xff] %v1745
      %1762 = vst [vmem:[%s177 + $0x38] sm:$0xff] %v1746
      %1763 = vst [vmem:[%s177 + $0x40] sm:$0xff] %v1747
      %1764 = vst [vmem:[%s177 + $0x48] sm:$0xff] %v1748
      %1765 = vst [vmem:[%s177 + $0x50] sm:$0xff] %v1749
      %1766 = vst [vmem:[%s177 + $0x58] sm:$0xff] %v1750
      %1767 = vst [vmem:[%s177 + $0x60] sm:$0xff] %v1751
      %1768 = vst [vmem:[%s177 + $0x68] sm:$0xff] %v1752
      %1769 = vst [vmem:[%s177 + $0x70] sm:$0xff] %v1753
      %1770 = vst [vmem:[%s177 + $0x78] sm:$0xff] %v1754
      %v1771 = vadd.f32 %v1739, %v1740
      %v1772 = vadd.f32 %v1771, %v1741
      %v1773 = vadd.f32 %v1772, %v1742
      %v1774 = vadd.f32 %v1773, %v1743
      %v1775 = vadd.f32 %v1774, %v1744
      %v1776 = vadd.f32 %v1775, %v1745
      %v1777 = vadd.f32 %v1776, %v1746
      %v1778 = vadd.f32 %v1777, %v1747
      %v1779 = vadd.f32 %v1778, %v1748
      %v1780 = vadd.f32 %v1779, %v1749
      %v1781 = vadd.f32 %v1780, %v1750
      %v1782 = vadd.f32 %v1781, %v1751
      %v1783 = vadd.f32 %v1782, %v1752
      %v1784 = vadd.f32 %v1783, %v1753
      %v1785 = vadd.f32 %v1784, %v1754
      %v1786 = vrot.slane %v1785, 4
      %v1787 = vadd.f32 %v1785, %v1786
      %v1788 = vrot.slane %v1787, 2
      %v1789 = vadd.f32 %v1787, %v1788
      %v1790 = vrot.slane %v1789, 1
      %v1791 = vadd.f32 %v1789, %v1790
      %1792 = vst [vmem:[%s181] sm:$0x1] %v1791
      %v1793 = vmul.f32 %v1739, %v1739
      %v1794 = vmul.f32 %v1740, %v1740
      %v1795 = vmul.f32 %v1741, %v1741
      %v1796 = vmul.f32 %v1742, %v1742
      %v1797 = vmul.f32 %v1743, %v1743
      %v1798 = vmul.f32 %v1744, %v1744
      %v1799 = vmul.f32 %v1745, %v1745
      %v1800 = vmul.f32 %v1746, %v1746
      %v1801 = vmul.f32 %v1747, %v1747
      %v1802 = vmul.f32 %v1748, %v1748
      %v1803 = vmul.f32 %v1749, %v1749
      %v1804 = vmul.f32 %v1750, %v1750
      %v1805 = vmul.f32 %v1751, %v1751
      %v1806 = vmul.f32 %v1752, %v1752
      %v1807 = vmul.f32 %v1753, %v1753
      %v1808 = vmul.f32 %v1754, %v1754
      %v1809 = vadd.f32 %v1793, %v1794
      %v1810 = vadd.f32 %v1809, %v1795
      %v1811 = vadd.f32 %v1810, %v1796
      %v1812 = vadd.f32 %v1811, %v1797
      %v1813 = vadd.f32 %v1812, %v1798
      %v1814 = vadd.f32 %v1813, %v1799
      %v1815 = vadd.f32 %v1814, %v1800
      %v1816 = vadd.f32 %v1815, %v1801
      %v1817 = vadd.f32 %v1816, %v1802
      %v1818 = vadd.f32 %v1817, %v1803
      %v1819 = vadd.f32 %v1818, %v1804
      %v1820 = vadd.f32 %v1819, %v1805
      %v1821 = vadd.f32 %v1820, %v1806
      %v1822 = vadd.f32 %v1821, %v1807
      %v1823 = vadd.f32 %v1822, %v1808
      %v1824 = vrot.slane %v1823, 4
      %v1825 = vadd.f32 %v1823, %v1824
      %v1826 = vrot.slane %v1825, 2
      %v1827 = vadd.f32 %v1825, %v1826
      %v1828 = vrot.slane %v1827, 1
      %v1829 = vadd.f32 %v1827, %v1828
      %1830 = vst [vmem:[%s181 + $0x1] sm:$0x1] %v1829
      %p1831 = scmp.lt.s32.totalorder %s15, 3
      %s1832 = scalar_select %p1831, %s15, 3
      %s1833 = smul.addr %s1832, 16
      %s1834 = smul.addr %s1833, 8
      %s1835 = scalar_lea.vmem %s2, %s1834
      %p1836 = scmp.lt.s32.totalorder %s15, 3
      %s1837 = scalar_select %p1836, %s15, 3
      %s1838 = smul.addr %s1837, 8
      %s1839 = scalar_lea.vmem %s3, %s1838
      // Predicated region
      $region29: #{_lambda_.3} parent=27 // pred_check
        %p1840 = pneg %p80
      $region30: #{_lambda_.3} parent=27 // pred_check_branch
        %1842 = sbr.rel (%p1840) target = $region32
      $region31: #{_lambda_.3} parent=27 // pred_region
        _
      $region32: #{_lambda_.3} parent=27 // pred_fallthru
        _
      // Predicated region
      $region33: #{_lambda_.3} parent=27 // pred_check
        %p1843 = pneg %p106
      $region34: #{_lambda_.3} parent=27 // pred_check_branch
        %1845 = sbr.rel (%p1843) target = $region36
      $region35: #{_lambda_.3} parent=27 // pred_region
        _
      $region36: #{_lambda_.3} parent=27 // pred_fallthru
        _
    $region28: #{_lambda_.3} parent=5 // pred_fallthru
      _
    %p1846 = scmp.le.s32.totalorder 2, %s10
    // Predicated region
    $region37: #{_lambda_.3} parent=5 // pred_check
      %p1847 = pneg %p1846
    $region38: #{_lambda_.3} parent=5 // pred_check_branch
      %1849 = sbr.rel (%p1847) target = $region40
    $region39: #{_lambda_.3} parent=5 // pred_region
      %s1850 = ssub.s32 %s10, 2
      // Predicated region
      $region41: #{_lambda_.3} parent=39 // pred_check
        %p1851 = pneg %p86
      $region42: #{_lambda_.3} parent=39 // pred_check_branch
        %1853 = sbr.rel (%p1851) target = $region44
      $region43: #{_lambda_.3} parent=39 // pred_region
        %p1854 = scmp.lt.s32.totalorder %s16, 3
        %s1855 = scalar_select %p1854, %s16, 3
        %s1856 = smul.addr %s1855, 16
        %s1857 = smul.addr %s1856, 8
        %s1858 = scalar_lea.vmem %s2, %s1857
      $region44: #{_lambda_.3} parent=39 // pred_fallthru
        _
      // Predicated region
      $region45: #{_lambda_.3} parent=39 // pred_check
        %p1859 = pneg %p112
      $region46: #{_lambda_.3} parent=39 // pred_check_branch
        %1861 = sbr.rel (%p1859) target = $region48
      $region47: #{_lambda_.3} parent=39 // pred_region
        %p1862 = scmp.lt.s32.totalorder %s16, 3
        %s1863 = scalar_select %p1862, %s16, 3
        %s1864 = smul.addr %s1863, 8
        %s1865 = scalar_lea.vmem %s3, %s1864
      $region48: #{_lambda_.3} parent=39 // pred_fallthru
        _
    $region40: #{_lambda_.3} parent=5 // pred_fallthru
      _
  $region6: #{_lambda_.3} parent=0 // loop_footer
    %s14 = sadd.s32 1, %s10
  $region7: #{_lambda_.3} parent=0 // loop_footer_branch
    %9 = sbr.rel target = $region3
  $region8: #{_lambda_.3} parent=0 // loop_exit
    _

// kernel: _lambda_.5
$region0: #{_lambda_.5}
  #allocation0 [shape = 'u32[]', space=smem, size = 0x4, offset = 0x4, fixed_abs, tag = 'smem constant byte address 0x4 - core index']
  #allocation1 [shape = 'u32[144,128]{1,0:T(1,128)}', space=vmem, size = 0x12000, scoped, tag = 'internal scratch']
  %s0 = inlined_call_operand.vmem [shape: f32[4,8,16,128], index: 0, kind: input, shape index: {}]
  %s1 = inlined_call_operand.vmem [shape: f32[1,128], index: 1, kind: input, shape index: {}]
  %s2 = inlined_call_operand.vmem [shape: f32[1,128], index: 2, kind: input, shape index: {}]
  %s3 = inlined_call_operand.vmem [shape: f32[4,8,16,128], index: 3, kind: output, shape index: {}]
  %s4 = sld [smem:[#allocation0]]
  $region45: #{_lambda_.5} parent=0
    _
  %s6 = ssub.s32 1, %s4
  %s7 = scalar_select 0, %s6, %s4
  loop: start=0, step=1, limit=6
  $region2: #{_lambda_.5} parent=0 // loop_pre_header
    _
  $region3: #{_lambda_.5} parent=0 // loop_header
    %s9 = sphi 0, %s13
    %p10 = scmp.ge.s32.totalorder %s9, 6
    %s19 = sphi 0, %s21
    %s22 = sphi 0, %s19
    %s23 = sphi 0, %s22
    %s39 = sphi 0, %s23
    %s43 = sphi 0, %s43
    %s45 = sphi 0, %s43
    %s46 = sphi 0, %s45
    %s60 = sphi 0, %s46
    %s64 = sphi 0, %s64
    %s66 = sphi 0, %s64
    %s67 = sphi 0, %s66
    %s81 = sphi 0, %s67
    %s87 = sphi 0, %s89
    %s90 = sphi 0, %s87
    %s91 = sphi 0, %s90
    %s107 = sphi 0, %s91
  $region4: #{_lambda_.5} parent=0 // loop_header_branch
    %12 = sbr.rel (%p10) target = $region8
  $region5: #{_lambda_.5} parent=0 // loop_body
    %s14 = ssub.s32 %s9, 1
    %s15 = ssub.s32 %s9, 2
    %s16 = sadd.s32 %s9, 1
    %s17 = ssub.s32 %s9, %s16
    %p18 = scmp.eq.s32.totalorder %s17, 0
    %s20 = sadd.s32 %s19, 1
    %s21 = scalar_select %p18, %s19, %s20
    %p24 = pneg %p18
    %p25 = scmp.eq.s32.totalorder %s9, 3
    %p26 = por %p24, %p25
    %p27 = scmp.ne.s32.totalorder %s19, %s22
    %p28 = scmp.eq.s32.totalorder %s9, 0
    %p29 = por %p27, %p28
    %p30 = scmp.ne.s32.totalorder %s19, %s22
    %p31 = scmp.eq.s32.totalorder %s14, 3
    %p32 = por %p30, %p31
    %p33 = scmp.ne.s32.totalorder %s22, %s23
    %p34 = scmp.eq.s32.totalorder %s14, 0
    %p35 = por %p33, %p34
    %p36 = scmp.ne.s32.totalorder %s22, %s23
    %p37 = scmp.eq.s32.totalorder %s15, 3
    %p38 = por %p36, %p37
    %p40 = scmp.ne.s32.totalorder %s23, %s39
    %p41 = scmp.eq.s32.totalorder %s15, 0
    %p42 = por %p40, %p41
    %s44 = sadd.s32 %s43, 1
    %p47 = scmp.eq.s32.totalorder %s9, 3
    %p48 = scmp.ne.s32.totalorder %s43, %s45
    %p49 = scmp.eq.s32.totalorder %s9, 0
    %p50 = por %p48, %p49
    %p51 = scmp.ne.s32.totalorder %s43, %s45
    %p52 = scmp.eq.s32.totalorder %s14, 3
    %p53 = por %p51, %p52
    %p54 = scmp.ne.s32.totalorder %s45, %s46
    %p55 = scmp.eq.s32.totalorder %s14, 0
    %p56 = por %p54, %p55
    %p57 = scmp.ne.s32.totalorder %s45, %s46
    %p58 = scmp.eq.s32.totalorder %s15, 3
    %p59 = por %p57, %p58
    %p61 = scmp.ne.s32.totalorder %s46, %s60
    %p62 = scmp.eq.s32.totalorder %s15, 0
    %p63 = por %p61, %p62
    %s65 = sadd.s32 %s64, 1
    %p68 = scmp.eq.s32.totalorder %s9, 3
    %p69 = scmp.ne.s32.totalorder %s64, %s66
    %p70 = scmp.eq.s32.totalorder %s9, 0
    %p71 = por %p69, %p70
    %p72 = scmp.ne.s32.totalorder %s64, %s66
    %p73 = scmp.eq.s32.totalorder %s14, 3
    %p74 = por %p72, %p73
    %p75 = scmp.ne.s32.totalorder %s66, %s67
    %p76 = scmp.eq.s32.totalorder %s14, 0
    %p77 = por %p75, %p76
    %p78 = scmp.ne.s32.totalorder %s66, %s67
    %p79 = scmp.eq.s32.totalorder %s15, 3
    %p80 = por %p78, %p79
    %p82 = scmp.ne.s32.totalorder %s67, %s81
    %p83 = scmp.eq.s32.totalorder %s15, 0
    %p84 = por %p82, %p83
    %s85 = ssub.s32 %s9, %s16
    %p86 = scmp.eq.s32.totalorder %s85, 0
    %s88 = sadd.s32 %s87, 1
    %s89 = scalar_select %p86, %s87, %s88
    %p92 = pneg %p86
    %p93 = scmp.eq.s32.totalorder %s9, 3
    %p94 = por %p92, %p93
    %p95 = scmp.ne.s32.totalorder %s87, %s90
    %p96 = scmp.eq.s32.totalorder %s9, 0
    %p97 = por %p95, %p96
    %p98 = scmp.ne.s32.totalorder %s87, %s90
    %p99 = scmp.eq.s32.totalorder %s14, 3
    %p100 = por %p98, %p99
    %p101 = scmp.ne.s32.totalorder %s90, %s91
    %p102 = scmp.eq.s32.totalorder %s14, 0
    %p103 = por %p101, %p102
    %p104 = scmp.ne.s32.totalorder %s90, %s91
    %p105 = scmp.eq.s32.totalorder %s15, 3
    %p106 = por %p104, %p105
    %p108 = scmp.ne.s32.totalorder %s91, %s107
    %p109 = scmp.eq.s32.totalorder %s15, 0
    %p110 = por %p108, %p109
    %p111 = scmp.le.s32.totalorder 1, %s9
    %p112 = scmp.lt.s32.totalorder %s9, 5
    %p113 = pnand %p111, %p112
    %p114 = pneg %p113
    // Predicated region
    $region9: #{_lambda_.5} parent=5 // pred_check
      _
    $region10: #{_lambda_.5} parent=5 // pred_check_branch
      %116 = sbr.rel (%p113) target = $region12
    $region11: #{_lambda_.5} parent=5 // pred_region
      %s117 = ssub.s32 %s9, 1
      // Predicated region
      $region13: #{_lambda_.5} parent=11 // pred_check
        %p118 = pneg %p56
      $region14: #{_lambda_.5} parent=11 // pred_check_branch
        %120 = sbr.rel (%p118) target = $region16
      $region15: #{_lambda_.5} parent=11 // pred_region
        _
      $region16: #{_lambda_.5} parent=11 // pred_fallthru
        _
      // Predicated region
      $region17: #{_lambda_.5} parent=11 // pred_check
        %p121 = pneg %p77
      $region18: #{_lambda_.5} parent=11 // pred_check_branch
        %123 = sbr.rel (%p121) target = $region20
      $region19: #{_lambda_.5} parent=11 // pred_region
        _
      $region20: #{_lambda_.5} parent=11 // pred_fallthru
        _
    $region12: #{_lambda_.5} parent=5 // pred_fallthru
      _
    %p124 = scmp.lt.s32.totalorder %s9, 4
    // Predicated region
    $region21: #{_lambda_.5} parent=5 // pred_check
      %p125 = pneg %p124
    $region22: #{_lambda_.5} parent=5 // pred_check_branch
      %127 = sbr.rel (%p125) target = $region24
    $region23: #{_lambda_.5} parent=5 // pred_region
      // Predicated region
      $region25: #{_lambda_.5} parent=23 // pred_check
        %p128 = pneg %p29
      $region26: #{_lambda_.5} parent=23 // pred_check_branch
        %130 = sbr.rel (%p128) target = $region28
      $region27: #{_lambda_.5} parent=23 // pred_region
        %p131 = scmp.lt.s32.totalorder %s9, 3
        %s132 = scalar_select %p131, %s9, 3
        %s133 = smul.addr %s132, 16
        %s134 = smul.addr %s133, 8
        %s135 = scalar_lea.vmem %s0, %s134
      $region28: #{_lambda_.5} parent=23 // pred_fallthru
        _
    $region24: #{_lambda_.5} parent=5 // pred_fallthru
      _
    %p136 = scmp.le.s32.totalorder 1, %s9
    %p137 = scmp.lt.s32.totalorder %s9, 5
    %p138 = pnand %p136, %p137
    %p139 = pneg %p138
    // Predicated region
    $region29: #{_lambda_.5} parent=5 // pred_check
      _
    $region30: #{_lambda_.5} parent=5 // pred_check_branch
      %141 = sbr.rel (%p138) target = $region32
    $region31: #{_lambda_.5} parent=5 // pred_region
      %s142 = ssub.s32 %s9, 1
      %p143 = scmp.lt.s32.totalorder %s14, 3
      %s144 = scalar_select %p143, %s14, 3
      %s145 = smul.addr %s144, 16
      %s146 = smul.addr %s145, 8
      %s147 = scalar_lea.vmem %s0, %s146
      %p148 = pneg %p35
      %p149 = pneg %p32
      %p150 = pneg %p56
      %p151 = pneg %p53
      %p152 = pneg %p77
      %p153 = pneg %p74
      %p154 = pneg %p103
      %p155 = pneg %p100
      %p156 = scmp.lt.s32.totalorder %s14, 3
      %s157 = scalar_select %p156, %s14, 3
      %s158 = smul.addr %s157, 16
      %s159 = smul.addr %s158, 8
      %s160 = scalar_lea.vmem %s3, %s159
      %p161 = scmp.lt.s32.totalorder %s14, 3
      %s162 = scalar_select %p161, %s14, 3
      %s163 = smul.addr %s162, 16
      %s164 = smul.addr %s163, 8
      %s165 = scalar_lea.vmem %s0, %s164
      %p166 = scmp.lt.s32.totalorder %s14, 3
      %s167 = scalar_select %p166, %s14, 3
      %s168 = smul.addr %s167, 16
      %s169 = smul.addr %s168, 8
      %s170 = scalar_lea.vmem %s3, %s169
      %v171 = vld [vmem:[%s165] sm:$0xff]
      %v172 = vld [vmem:[%s165 + $0x8] sm:$0xff]
      %v173 = vld [vmem:[%s165 + $0x10] sm:$0xff]
      %v174 = vld [vmem:[%s165 + $0x18] sm:$0xff]
      %v175 = vld [vmem:[%s165 + $0x20] sm:$0xff]
      %v176 = vld [vmem:[%s165 + $0x28] sm:$0xff]
      %v177 = vld [vmem:[%s165 + $0x30] sm:$0xff]
      %v178 = vld [vmem:[%s165 + $0x38] sm:$0xff]
      %v179 = vld [vmem:[%s165 + $0x40] sm:$0xff]
      %v180 = vld [vmem:[%s165 + $0x48] sm:$0xff]
      %v181 = vld [vmem:[%s165 + $0x50] sm:$0xff]
      %v182 = vld [vmem:[%s165 + $0x58] sm:$0xff]
      %v183 = vld [vmem:[%s165 + $0x60] sm:$0xff]
      %v184 = vld [vmem:[%s165 + $0x68] sm:$0xff]
      %v185 = vld [vmem:[%s165 + $0x70] sm:$0xff]
      %v186 = vld [vmem:[%s165 + $0x78] sm:$0xff]
      %v187 = vld [vmem:[%s1] sm:$0x1]
      %v189 = vlaneseq
      %v190 = vshrl.u32 %v189, 7
      %v191 = vsub.s32 0, %v190
      %v192 = vrot.slane %v187, %v191
      %v194 = vmul.f32 %v171, %v192
      %v195 = vmul.f32 %v172, %v192
      %v196 = vmul.f32 %v173, %v192
      %v197 = vmul.f32 %v174, %v192
      %v198 = vmul.f32 %v175, %v192
      %v199 = vmul.f32 %v176, %v192
      %v200 = vmul.f32 %v177, %v192
      %v201 = vmul.f32 %v178, %v192
      %v202 = vmul.f32 %v179, %v192
      %v203 = vmul.f32 %v180, %v192
      %v204 = vmul.f32 %v181, %v192
      %v205 = vmul.f32 %v182, %v192
      %v206 = vmul.f32 %v183, %v192
      %v207 = vmul.f32 %v184, %v192
      %v208 = vmul.f32 %v185, %v192
      %v209 = vmul.f32 %v186, %v192
      %v210 = vld [vmem:[%s2] sm:$0x1]
      %v212 = vlaneseq
      %v213 = vshrl.u32 %v212, 7
      %v214 = vsub.s32 0, %v213
      %v215 = vrot.slane %v210, %v214
      %v217 = vadd.f32 %v194, %v215
      %v218 = vadd.f32 %v195, %v215
      %v219 = vadd.f32 %v196, %v215
      %v220 = vadd.f32 %v197, %v215
      %v221 = vadd.f32 %v198, %v215
      %v222 = vadd.f32 %v199, %v215
      %v223 = vadd.f32 %v200, %v215
      %v224 = vadd.f32 %v201, %v215
      %v225 = vadd.f32 %v202, %v215
      %v226 = vadd.f32 %v203, %v215
      %v227 = vadd.f32 %v204, %v215
      %v228 = vadd.f32 %v205, %v215
      %v229 = vadd.f32 %v206, %v215
      %v230 = vadd.f32 %v207, %v215
      %v231 = vadd.f32 %v208, %v215
      %v232 = vadd.f32 %v209, %v215
      %vm233 = vcmp.gt.f32.partialorder %v217, 0.0
      %vm234 = vcmp.gt.f32.partialorder %v218, 0.0
      %vm235 = vcmp.gt.f32.partialorder %v219, 0.0
      %vm236 = vcmp.gt.f32.partialorder %v220, 0.0
      %vm237 = vcmp.gt.f32.partialorder %v221, 0.0
      %vm238 = vcmp.gt.f32.partialorder %v222, 0.0
      %vm239 = vcmp.gt.f32.partialorder %v223, 0.0
      %vm240 = vcmp.gt.f32.partialorder %v224, 0.0
      %vm241 = vcmp.gt.f32.partialorder %v225, 0.0
      %vm242 = vcmp.gt.f32.partialorder %v226, 0.0
      %vm243 = vcmp.gt.f32.partialorder %v227, 0.0
      %vm244 = vcmp.gt.f32.partialorder %v228, 0.0
      %vm245 = vcmp.gt.f32.partialorder %v229, 0.0
      %vm246 = vcmp.gt.f32.partialorder %v230, 0.0
      %vm247 = vcmp.gt.f32.partialorder %v231, 0.0
      %vm248 = vcmp.gt.f32.partialorder %v232, 0.0
      %v249 = vmul.f32 %v217, 0.2
      %v250 = vmul.f32 %v218, 0.2
      %v251 = vmul.f32 %v219, 0.2
      %v252 = vmul.f32 %v220, 0.2
      %v253 = vmul.f32 %v221, 0.2
      %v254 = vmul.f32 %v222, 0.2
      %v255 = vmul.f32 %v223, 0.2
      %v256 = vmul.f32 %v224, 0.2
      %v257 = vmul.f32 %v225, 0.2
      %v258 = vmul.f32 %v226, 0.2
      %v259 = vmul.f32 %v227, 0.2
      %v260 = vmul.f32 %v228, 0.2
      %v261 = vmul.f32 %v229, 0.2
      %v262 = vmul.f32 %v230, 0.2
      %v263 = vmul.f32 %v231, 0.2
      %v264 = vmul.f32 %v232, 0.2
      %v265 = vsel %vm233, %v217, %v249
      %v266 = vsel %vm234, %v218, %v250
      %v267 = vsel %vm235, %v219, %v251
      %v268 = vsel %vm236, %v220, %v252
      %v269 = vsel %vm237, %v221, %v253
      %v270 = vsel %vm238, %v222, %v254
      %v271 = vsel %vm239, %v223, %v255
      %v272 = vsel %vm240, %v224, %v256
      %v273 = vsel %vm241, %v225, %v257
      %v274 = vsel %vm242, %v226, %v258
      %v275 = vsel %vm243, %v227, %v259
      %v276 = vsel %vm244, %v228, %v260
      %v277 = vsel %vm245, %v229, %v261
      %v278 = vsel %vm246, %v230, %v262
      %v279 = vsel %vm247, %v231, %v263
      %v280 = vsel %vm248, %v232, %v264
      %281 = vst [vmem:[%s170] sm:$0xff] %v265
      %282 = vst [vmem:[%s170 + $0x8] sm:$0xff] %v266
      %283 = vst [vmem:[%s170 + $0x10] sm:$0xff] %v267
      %284 = vst [vmem:[%s170 + $0x18] sm:$0xff] %v268
      %285 = vst [vmem:[%s170 + $0x20] sm:$0xff] %v269
      %286 = vst [vmem:[%s170 + $0x28] sm:$0xff] %v270
      %287 = vst [vmem:[%s170 + $0x30] sm:$0xff] %v271
      %288 = vst [vmem:[%s170 + $0x38] sm:$0xff] %v272
      %289 = vst [vmem:[%s170 + $0x40] sm:$0xff] %v273
      %290 = vst [vmem:[%s170 + $0x48] sm:$0xff] %v274
      %291 = vst [vmem:[%s170 + $0x50] sm:$0xff] %v275
      %292 = vst [vmem:[%s170 + $0x58] sm:$0xff] %v276
      %293 = vst [vmem:[%s170 + $0x60] sm:$0xff] %v277
      %294 = vst [vmem:[%s170 + $0x68] sm:$0xff] %v278
      %295 = vst [vmem:[%s170 + $0x70] sm:$0xff] %v279
      %296 = vst [vmem:[%s170 + $0x78] sm:$0xff] %v280
      %p297 = scmp.lt.s32.totalorder %s14, 3
      %s298 = scalar_select %p297, %s14, 3
      %s299 = smul.addr %s298, 16
      %s300 = smul.addr %s299, 8
      %s301 = scalar_lea.vmem %s3, %s300
      // Predicated region
      $region33: #{_lambda_.5} parent=31 // pred_check
        %p302 = pneg %p100
      $region34: #{_lambda_.5} parent=31 // pred_check_branch
        %304 = sbr.rel (%p302) target = $region36
      $region35: #{_lambda_.5} parent=31 // pred_region
        _
      $region36: #{_lambda_.5} parent=31 // pred_fallthru
        _
    $region32: #{_lambda_.5} parent=5 // pred_fallthru
      _
    %p305 = scmp.le.s32.totalorder 2, %s9
    // Predicated region
    $region37: #{_lambda_.5} parent=5 // pred_check
      %p306 = pneg %p305
    $region38: #{_lambda_.5} parent=5 // pred_check_branch
      %308 = sbr.rel (%p306) target = $region40
    $region39: #{_lambda_.5} parent=5 // pred_region
      %s309 = ssub.s32 %s9, 2
      // Predicated region
      $region41: #{_lambda_.5} parent=39 // pred_check
        %p310 = pneg %p106
      $region42: #{_lambda_.5} parent=39 // pred_check_branch
        %312 = sbr.rel (%p310) target = $region44
      $region43: #{_lambda_.5} parent=39 // pred_region
        %p313 = scmp.lt.s32.totalorder %s15, 3
        %s314 = scalar_select %p313, %s15, 3
        %s315 = smul.addr %s314, 16
        %s316 = smul.addr %s315, 8
        %s317 = scalar_lea.vmem %s3, %s316
      $region44: #{_lambda_.5} parent=39 // pred_fallthru
        _
    $region40: #{_lambda_.5} parent=5 // pred_fallthru
      _
  $region6: #{_lambda_.5} parent=0 // loop_footer
    %s13 = sadd.s32 1, %s9
  $region7: #{_lambda_.5} parent=0 // loop_footer_branch
    %8 = sbr.rel target = $region3
  $region8: #{_lambda_.5} parent=0 // loop_exit
    _

// kernel: _lambda_.4
$region0: #{_lambda_.4}
  #allocation0 [shape = 'u32[]', space=smem, size = 0x4, offset = 0x4, fixed_abs, tag = 'smem constant byte address 0x4 - core index']
  #allocation1 [shape = 'u32[144,128]{1,0:T(1,128)}', space=vmem, size = 0x12000, scoped, tag = 'internal scratch']
  %s0 = inlined_call_operand.vmem [shape: f32[4,10,24,128], index: 0, kind: input, shape index: {}]
  %s1 = inlined_call_operand.vmem [shape: f32[1,128], index: 1, kind: input, shape index: {}]
  %s2 = inlined_call_operand.vmem [shape: f32[1,128], index: 2, kind: input, shape index: {}]
  %s3 = inlined_call_operand.vmem [shape: f32[3,128,384], index: 3, kind: input, shape index: {}]
  %s4 = inlined_call_operand.vmem [shape: f32[4,8,16,128], index: 4, kind: output, shape index: {0}]
  %s5 = inlined_call_operand.vmem [shape: f32[4,8,128], index: 5, kind: output, shape index: {1}]
  %6 = xla_tuple %s4, %s5
  %s7 = sld [smem:[#allocation0]]
  $region57: #{_lambda_.4} parent=0
    _
  %s9 = ssub.s32 1, %s7
  %s10 = scalar_select 0, %s9, %s7
  loop: start=0, step=1, limit=6
  $region2: #{_lambda_.4} parent=0 // loop_pre_header
    _
  $region3: #{_lambda_.4} parent=0 // loop_header
    %s12 = sphi 0, %s16
    %p13 = scmp.ge.s32.totalorder %s12, 6
    %s22 = sphi 0, %s24
    %s25 = sphi 0, %s22
    %s26 = sphi 0, %s25
    %s42 = sphi 0, %s26
    %s46 = sphi 0, %s46
    %s48 = sphi 0, %s46
    %s49 = sphi 0, %s48
    %s63 = sphi 0, %s49
    %s67 = sphi 0, %s67
    %s69 = sphi 0, %s67
    %s70 = sphi 0, %s69
    %s84 = sphi 0, %s70
    %s88 = sphi 0, %s88
    %s90 = sphi 0, %s88
    %s91 = sphi 0, %s90
    %s105 = sphi 0, %s91
    %s111 = sphi 0, %s113
    %s114 = sphi 0, %s111
    %s115 = sphi 0, %s114
    %s131 = sphi 0, %s115
    %s137 = sphi 0, %s139
    %s140 = sphi 0, %s137
    %s141 = sphi 0, %s140
    %s157 = sphi 0, %s141
  $region4: #{_lambda_.4} parent=0 // loop_header_branch
    %15 = sbr.rel (%p13) target = $region8
  $region5: #{_lambda_.4} parent=0 // loop_body
    %s17 = ssub.s32 %s12, 1
    %s18 = ssub.s32 %s12, 2
    %s19 = sadd.s32 %s12, 1
    %s20 = ssub.s32 %s12, %s19
    %p21 = scmp.eq.s32.totalorder %s20, 0
    %s23 = sadd.s32 %s22, 1
    %s24 = scalar_select %p21, %s22, %s23
    %p27 = pneg %p21
    %p28 = scmp.eq.s32.totalorder %s12, 3
    %p29 = por %p27, %p28
    %p30 = scmp.ne.s32.totalorder %s22, %s25
    %p31 = scmp.eq.s32.totalorder %s12, 0
    %p32 = por %p30, %p31
    %p33 = scmp.ne.s32.totalorder %s22, %s25
    %p34 = scmp.eq.s32.totalorder %s17, 3
    %p35 = por %p33, %p34
    %p36 = scmp.ne.s32.totalorder %s25, %s26
    %p37 = scmp.eq.s32.totalorder %s17, 0
    %p38 = por %p36, %p37
    %p39 = scmp.ne.s32.totalorder %s25, %s26
    %p40 = scmp.eq.s32.totalorder %s18, 3
    %p41 = por %p39, %p40
    %p43 = scmp.ne.s32.totalorder %s26, %s42
    %p44 = scmp.eq.s32.totalorder %s18, 0
    %p45 = por %p43, %p44
    %s47 = sadd.s32 %s46, 1
    %p50 = scmp.eq.s32.totalorder %s12, 3
    %p51 = scmp.ne.s32.totalorder %s46, %s48
    %p52 = scmp.eq.s32.totalorder %s12, 0
    %p53 = por %p51, %p52
    %p54 = scmp.ne.s32.totalorder %s46, %s48
    %p55 = scmp.eq.s32.totalorder %s17, 3
    %p56 = por %p54, %p55
    %p57 = scmp.ne.s32.totalorder %s48, %s49
    %p58 = scmp.eq.s32.totalorder %s17, 0
    %p59 = por %p57, %p58
    %p60 = scmp.ne.s32.totalorder %s48, %s49
    %p61 = scmp.eq.s32.totalorder %s18, 3
    %p62 = por %p60, %p61
    %p64 = scmp.ne.s32.totalorder %s49, %s63
    %p65 = scmp.eq.s32.totalorder %s18, 0
    %p66 = por %p64, %p65
    %s68 = sadd.s32 %s67, 1
    %p71 = scmp.eq.s32.totalorder %s12, 3
    %p72 = scmp.ne.s32.totalorder %s67, %s69
    %p73 = scmp.eq.s32.totalorder %s12, 0
    %p74 = por %p72, %p73
    %p75 = scmp.ne.s32.totalorder %s67, %s69
    %p76 = scmp.eq.s32.totalorder %s17, 3
    %p77 = por %p75, %p76
    %p78 = scmp.ne.s32.totalorder %s69, %s70
    %p79 = scmp.eq.s32.totalorder %s17, 0
    %p80 = por %p78, %p79
    %p81 = scmp.ne.s32.totalorder %s69, %s70
    %p82 = scmp.eq.s32.totalorder %s18, 3
    %p83 = por %p81, %p82
    %p85 = scmp.ne.s32.totalorder %s70, %s84
    %p86 = scmp.eq.s32.totalorder %s18, 0
    %p87 = por %p85, %p86
    %s89 = sadd.s32 %s88, 1
    %p92 = scmp.eq.s32.totalorder %s12, 3
    %p93 = scmp.ne.s32.totalorder %s88, %s90
    %p94 = scmp.eq.s32.totalorder %s12, 0
    %p95 = por %p93, %p94
    %p96 = scmp.ne.s32.totalorder %s88, %s90
    %p97 = scmp.eq.s32.totalorder %s17, 3
    %p98 = por %p96, %p97
    %p99 = scmp.ne.s32.totalorder %s90, %s91
    %p100 = scmp.eq.s32.totalorder %s17, 0
    %p101 = por %p99, %p100
    %p102 = scmp.ne.s32.totalorder %s90, %s91
    %p103 = scmp.eq.s32.totalorder %s18, 3
    %p104 = por %p102, %p103
    %p106 = scmp.ne.s32.totalorder %s91, %s105
    %p107 = scmp.eq.s32.totalorder %s18, 0
    %p108 = por %p106, %p107
    %s109 = ssub.s32 %s12, %s19
    %p110 = scmp.eq.s32.totalorder %s109, 0
    %s112 = sadd.s32 %s111, 1
    %s113 = scalar_select %p110, %s111, %s112
    %p116 = pneg %p110
    %p117 = scmp.eq.s32.totalorder %s12, 3
    %p118 = por %p116, %p117
    %p119 = scmp.ne.s32.totalorder %s111, %s114
    %p120 = scmp.eq.s32.totalorder %s12, 0
    %p121 = por %p119, %p120
    %p122 = scmp.ne.s32.totalorder %s111, %s114
    %p123 = scmp.eq.s32.totalorder %s17, 3
    %p124 = por %p122, %p123
    %p125 = scmp.ne.s32.totalorder %s114, %s115
    %p126 = scmp.eq.s32.totalorder %s17, 0
    %p127 = por %p125, %p126
    %p128 = scmp.ne.s32.totalorder %s114, %s115
    %p129 = scmp.eq.s32.totalorder %s18, 3
    %p130 = por %p128, %p129
    %p132 = scmp.ne.s32.totalorder %s115, %s131
    %p133 = scmp.eq.s32.totalorder %s18, 0
    %p134 = por %p132, %p133
    %s135 = ssub.s32 %s12, %s19
    %p136 = scmp.eq.s32.totalorder %s135, 0
    %s138 = sadd.s32 %s137, 1
    %s139 = scalar_select %p136, %s137, %s138
    %p142 = pneg %p136
    %p143 = scmp.eq.s32.totalorder %s12, 3
    %p144 = por %p142, %p143
    %p145 = scmp.ne.s32.totalorder %s137, %s140
    %p146 = scmp.eq.s32.totalorder %s12, 0
    %p147 = por %p145, %p146
    %p148 = scmp.ne.s32.totalorder %s137, %s140
    %p149 = scmp.eq.s32.totalorder %s17, 3
    %p150 = por %p148, %p149
    %p151 = scmp.ne.s32.totalorder %s140, %s141
    %p152 = scmp.eq.s32.totalorder %s17, 0
    %p153 = por %p151, %p152
    %p154 = scmp.ne.s32.totalorder %s140, %s141
    %p155 = scmp.eq.s32.totalorder %s18, 3
    %p156 = por %p154, %p155
    %p158 = scmp.ne.s32.totalorder %s141, %s157
    %p159 = scmp.eq.s32.totalorder %s18, 0
    %p160 = por %p158, %p159
    %p161 = scmp.le.s32.totalorder 1, %s12
    %p162 = scmp.lt.s32.totalorder %s12, 5
    %p163 = pnand %p161, %p162
    %p164 = pneg %p163
    // Predicated region
    $region9: #{_lambda_.4} parent=5 // pred_check
      _
    $region10: #{_lambda_.4} parent=5 // pred_check_branch
      %166 = sbr.rel (%p163) target = $region12
    $region11: #{_lambda_.4} parent=5 // pred_region
      %s167 = ssub.s32 %s12, 1
      // Predicated region
      $region13: #{_lambda_.4} parent=11 // pred_check
        %p168 = pneg %p59
      $region14: #{_lambda_.4} parent=11 // pred_check_branch
        %170 = sbr.rel (%p168) target = $region16
      $region15: #{_lambda_.4} parent=11 // pred_region
        _
      $region16: #{_lambda_.4} parent=11 // pred_fallthru
        _
      // Predicated region
      $region17: #{_lambda_.4} parent=11 // pred_check
        %p171 = pneg %p80
      $region18: #{_lambda_.4} parent=11 // pred_check_branch
        %173 = sbr.rel (%p171) target = $region20
      $region19: #{_lambda_.4} parent=11 // pred_region
        _
      $region20: #{_lambda_.4} parent=11 // pred_fallthru
        _
      // Predicated region
      $region21: #{_lambda_.4} parent=11 // pred_check
        %p174 = pneg %p101
      $region22: #{_lambda_.4} parent=11 // pred_check_branch
        %176 = sbr.rel (%p174) target = $region24
      $region23: #{_lambda_.4} parent=11 // pred_region
        _
      $region24: #{_lambda_.4} parent=11 // pred_fallthru
        _
    $region12: #{_lambda_.4} parent=5 // pred_fallthru
      _
    %p177 = scmp.lt.s32.totalorder %s12, 4
    // Predicated region
    $region25: #{_lambda_.4} parent=5 // pred_check
      %p178 = pneg %p177
    $region26: #{_lambda_.4} parent=5 // pred_check_branch
      %180 = sbr.rel (%p178) target = $region28
    $region27: #{_lambda_.4} parent=5 // pred_region
      // Predicated region
      $region29: #{_lambda_.4} parent=27 // pred_check
        %p181 = pneg %p32
      $region30: #{_lambda_.4} parent=27 // pred_check_branch
        %183 = sbr.rel (%p181) target = $region32
      $region31: #{_lambda_.4} parent=27 // pred_region
        %p184 = scmp.lt.s32.totalorder %s12, 3
        %s185 = scalar_select %p184, %s12, 3
        %s186 = smul.addr %s185, 30
        %s187 = smul.addr %s186, 8
        %s188 = scalar_lea.vmem %s0, %s187
      $region32: #{_lambda_.4} parent=27 // pred_fallthru
        _
    $region28: #{_lambda_.4} parent=5 // pred_fallthru
      _
    %p189 = scmp.le.s32.totalorder 1, %s12
    %p190 = scmp.lt.s32.totalorder %s12, 5
    %p191 = pnand %p189, %p190
    %p192 = pneg %p191
    // Predicated region
    $region33: #{_lambda_.4} parent=5 // pred_check
      _
    $region34: #{_lambda_.4} parent=5 // pred_check_branch
      %194 = sbr.rel (%p191) target = $region36
    $region35: #{_lambda_.4} parent=5 // pred_region
      %s195 = ssub.s32 %s12, 1
      %p196 = scmp.lt.s32.totalorder %s17, 3
      %s197 = scalar_select %p196, %s17, 3
      %s198 = smul.addr %s197, 30
      %s199 = smul.addr %s198, 8
      %s200 = scalar_lea.vmem %s0, %s199
      %p201 = pneg %p38
      %p202 = pneg %p35
      %p203 = pneg %p59
      %p204 = pneg %p56
      %p205 = pneg %p80
      %p206 = pneg %p77
      %p207 = pneg %p101
      %p208 = pneg %p98
      %p209 = pneg %p127
      %p210 = pneg %p124
      %p211 = scmp.lt.s32.totalorder %s17, 3
      %s212 = scalar_select %p211, %s17, 3
      %s213 = smul.addr %s212, 16
      %s214 = smul.addr %s213, 8
      %s215 = scalar_lea.vmem %s4, %s214
      %p216 = pneg %p153
      %p217 = pneg %p150
      %p218 = scmp.lt.s32.totalorder %s17, 3
      %s219 = scalar_select %p218, %s17, 3
      %s220 = smul.addr %s219, 8
      %s221 = scalar_lea.vmem %s5, %s220
      %p222 = scmp.lt.s32.totalorder %s17, 3
      %s223 = scalar_select %p222, %s17, 3
      %s224 = smul.addr %s223, 30
      %s225 = smul.addr %s224, 8
      %s226 = scalar_lea.vmem %s0, %s225
      %p227 = scmp.lt.s32.totalorder %s17, 3
      %s228 = scalar_select %p227, %s17, 3
      %s229 = smul.addr %s228, 16
      %s230 = smul.addr %s229, 8
      %s231 = scalar_lea.vmem %s4, %s230
      %p232 = scmp.lt.s32.totalorder %s17, 3
      %s233 = scalar_select %p232, %s17, 3
      %s234 = smul.addr %s233, 8
      %s235 = scalar_lea.vmem %s5, %s234
      %p236 = scmp.lt.s32.totalorder %s17, 0
      %s237 = ssub.s32 0, %s17
      %s238 = scalar_select %p236, %s237, %s17
      %s239 = sand.u32 %s238, 1
      %s240 = ssub.s32 0, %s239
      %s241 = scalar_select %p236, %s240, %s239
      %p242 = scmp.ne.s32.totalorder %s241, 0
      %p243 = scmp.lt.s32.totalorder %s241, 0
      %p244 = pnand %p243, %p242
      %p245 = pneg %p244
      %s246 = sadd.s32 %s241, 2
      %s247 = scalar_select %p245, %s246, %s241
      %v248 = vld [vmem:[%s226] sm:$0xff]
      %v249 = vld [vmem:[%s226 + $0x8] sm:$0xff]
      %v250 = vld [vmem:[%s226 + $0x10] sm:$0xff]
      %v251 = vld [vmem:[%s226 + $0x18] sm:$0xff]
      %v252 = vld [vmem:[%s226 + $0x20] sm:$0xff]
      %v253 = vld [vmem:[%s226 + $0x28] sm:$0xff]
      %v254 = vld [vmem:[%s226 + $0x30] sm:$0xff]
      %v255 = vld [vmem:[%s226 + $0x38] sm:$0xff]
      %v256 = vld [vmem:[%s226 + $0x40] sm:$0xff]
      %v257 = vld [vmem:[%s226 + $0x48] sm:$0xff]
      %v258 = vld [vmem:[%s226 + $0x50] sm:$0xff]
      %v259 = vld [vmem:[%s226 + $0x58] sm:$0xff]
      %v260 = vld [vmem:[%s226 + $0x60] sm:$0xff]
      %v261 = vld [vmem:[%s226 + $0x68] sm:$0xff]
      %v262 = vld [vmem:[%s226 + $0x70] sm:$0xff]
      %v263 = vld [vmem:[%s226 + $0x78] sm:$0xff]
      %v264 = vld [vmem:[%s226 + $0x80] sm:$0xff]
      %v265 = vld [vmem:[%s226 + $0x88] sm:$0xff]
      %v266 = vld [vmem:[%s226 + $0x90] sm:$0xff]
      %v267 = vld [vmem:[%s226 + $0x98] sm:$0xff]
      %v268 = vld [vmem:[%s226 + $0xa0] sm:$0xff]
      %v269 = vld [vmem:[%s226 + $0xa8] sm:$0xff]
      %v270 = vld [vmem:[%s226 + $0xb0] sm:$0xff]
      %v271 = vld [vmem:[%s226 + $0xb8] sm:$0xff]
      %v272 = vld [vmem:[%s226 + $0xc0] sm:$0xff]
      %v273 = vld [vmem:[%s226 + $0xc8] sm:$0xff]
      %v274 = vld [vmem:[%s226 + $0xd0] sm:$0xff]
      %v275 = vld [vmem:[%s226 + $0xd8] sm:$0xff]
      %v276 = vld [vmem:[%s226 + $0xe0] sm:$0xff]
      %v277 = vld [vmem:[%s226 + $0xe8] sm:$0xff]
      %v278 = vld [vmem:[%s1] sm:$0x1]
      %v280 = vlaneseq
      %v281 = vshrl.u32 %v280, 7
      %v282 = vsub.s32 0, %v281
      %v283 = vrot.slane %v278, %v282
      %v285 = vmul.f32 %v248, %v283
      %v286 = vmul.f32 %v249, %v283
      %v287 = vmul.f32 %v250, %v283
      %v288 = vmul.f32 %v251, %v283
      %v289 = vmul.f32 %v252, %v283
      %v290 = vmul.f32 %v253, %v283
      %v291 = vmul.f32 %v254, %v283
      %v292 = vmul.f32 %v255, %v283
      %v293 = vmul.f32 %v256, %v283
      %v294 = vmul.f32 %v257, %v283
      %v295 = vmul.f32 %v258, %v283
      %v296 = vmul.f32 %v259, %v283
      %v297 = vmul.f32 %v260, %v283
      %v298 = vmul.f32 %v261, %v283
      %v299 = vmul.f32 %v262, %v283
      %v300 = vmul.f32 %v263, %v283
      %v301 = vmul.f32 %v264, %v283
      %v302 = vmul.f32 %v265, %v283
      %v303 = vmul.f32 %v266, %v283
      %v304 = vmul.f32 %v267, %v283
      %v305 = vmul.f32 %v268, %v283
      %v306 = vmul.f32 %v269, %v283
      %v307 = vmul.f32 %v270, %v283
      %v308 = vmul.f32 %v271, %v283
      %v309 = vmul.f32 %v272, %v283
      %v310 = vmul.f32 %v273, %v283
      %v311 = vmul.f32 %v274, %v283
      %v312 = vmul.f32 %v275, %v283
      %v313 = vmul.f32 %v276, %v283
      %v314 = vmul.f32 %v277, %v283
      %v315 = vld [vmem:[%s2] sm:$0x1]
      %v317 = vlaneseq
      %v318 = vshrl.u32 %v317, 7
      %v319 = vsub.s32 0, %v318
      %v320 = vrot.slane %v315, %v319
      %v322 = vadd.f32 %v285, %v320
      %v323 = vadd.f32 %v286, %v320
      %v324 = vadd.f32 %v287, %v320
      %v325 = vadd.f32 %v288, %v320
      %v326 = vadd.f32 %v289, %v320
      %v327 = vadd.f32 %v290, %v320
      %v328 = vadd.f32 %v291, %v320
      %v329 = vadd.f32 %v292, %v320
      %v330 = vadd.f32 %v293, %v320
      %v331 = vadd.f32 %v294, %v320
      %v332 = vadd.f32 %v295, %v320
      %v333 = vadd.f32 %v296, %v320
      %v334 = vadd.f32 %v297, %v320
      %v335 = vadd.f32 %v298, %v320
      %v336 = vadd.f32 %v299, %v320
      %v337 = vadd.f32 %v300, %v320
      %v338 = vadd.f32 %v301, %v320
      %v339 = vadd.f32 %v302, %v320
      %v340 = vadd.f32 %v303, %v320
      %v341 = vadd.f32 %v304, %v320
      %v342 = vadd.f32 %v305, %v320
      %v343 = vadd.f32 %v306, %v320
      %v344 = vadd.f32 %v307, %v320
      %v345 = vadd.f32 %v308, %v320
      %v346 = vadd.f32 %v309, %v320
      %v347 = vadd.f32 %v310, %v320
      %v348 = vadd.f32 %v311, %v320
      %v349 = vadd.f32 %v312, %v320
      %v350 = vadd.f32 %v313, %v320
      %v351 = vadd.f32 %v314, %v320
      %vm352 = vcmp.gt.f32.partialorder %v322, 0.0
      %vm353 = vcmp.gt.f32.partialorder %v323, 0.0
      %vm354 = vcmp.gt.f32.partialorder %v324, 0.0
      %vm355 = vcmp.gt.f32.partialorder %v325, 0.0
      %vm356 = vcmp.gt.f32.partialorder %v326, 0.0
      %vm357 = vcmp.gt.f32.partialorder %v327, 0.0
      %vm358 = vcmp.gt.f32.partialorder %v328, 0.0
      %vm359 = vcmp.gt.f32.partialorder %v329, 0.0
      %vm360 = vcmp.gt.f32.partialorder %v330, 0.0
      %vm361 = vcmp.gt.f32.partialorder %v331, 0.0
      %vm362 = vcmp.gt.f32.partialorder %v332, 0.0
      %vm363 = vcmp.gt.f32.partialorder %v333, 0.0
      %vm364 = vcmp.gt.f32.partialorder %v334, 0.0
      %vm365 = vcmp.gt.f32.partialorder %v335, 0.0
      %vm366 = vcmp.gt.f32.partialorder %v336, 0.0
      %vm367 = vcmp.gt.f32.partialorder %v337, 0.0
      %vm368 = vcmp.gt.f32.partialorder %v338, 0.0
      %vm369 = vcmp.gt.f32.partialorder %v339, 0.0
      %vm370 = vcmp.gt.f32.partialorder %v340, 0.0
      %vm371 = vcmp.gt.f32.partialorder %v341, 0.0
      %vm372 = vcmp.gt.f32.partialorder %v342, 0.0
      %vm373 = vcmp.gt.f32.partialorder %v343, 0.0
      %vm374 = vcmp.gt.f32.partialorder %v344, 0.0
      %vm375 = vcmp.gt.f32.partialorder %v345, 0.0
      %vm376 = vcmp.gt.f32.partialorder %v346, 0.0
      %vm377 = vcmp.gt.f32.partialorder %v347, 0.0
      %vm378 = vcmp.gt.f32.partialorder %v348, 0.0
      %vm379 = vcmp.gt.f32.partialorder %v349, 0.0
      %vm380 = vcmp.gt.f32.partialorder %v350, 0.0
      %vm381 = vcmp.gt.f32.partialorder %v351, 0.0
      %v382 = vmul.f32 %v322, 0.2
      %v383 = vmul.f32 %v323, 0.2
      %v384 = vmul.f32 %v324, 0.2
      %v385 = vmul.f32 %v325, 0.2
      %v386 = vmul.f32 %v326, 0.2
      %v387 = vmul.f32 %v327, 0.2
      %v388 = vmul.f32 %v328, 0.2
      %v389 = vmul.f32 %v329, 0.2
      %v390 = vmul.f32 %v330, 0.2
      %v391 = vmul.f32 %v331, 0.2
      %v392 = vmul.f32 %v332, 0.2
      %v393 = vmul.f32 %v333, 0.2
      %v394 = vmul.f32 %v334, 0.2
      %v395 = vmul.f32 %v335, 0.2
      %v396 = vmul.f32 %v336, 0.2
      %v397 = vmul.f32 %v337, 0.2
      %v398 = vmul.f32 %v338, 0.2
      %v399 = vmul.f32 %v339, 0.2
      %v400 = vmul.f32 %v340, 0.2
      %v401 = vmul.f32 %v341, 0.2
      %v402 = vmul.f32 %v342, 0.2
      %v403 = vmul.f32 %v343, 0.2
      %v404 = vmul.f32 %v344, 0.2
      %v405 = vmul.f32 %v345, 0.2
      %v406 = vmul.f32 %v346, 0.2
      %v407 = vmul.f32 %v347, 0.2
      %v408 = vmul.f32 %v348, 0.2
      %v409 = vmul.f32 %v349, 0.2
      %v410 = vmul.f32 %v350, 0.2
      %v411 = vmul.f32 %v351, 0.2
      %v412 = vsel %vm352, %v322, %v382
      %v413 = vsel %vm353, %v323, %v383
      %v414 = vsel %vm354, %v324, %v384
      %v415 = vsel %vm355, %v325, %v385
      %v416 = vsel %vm356, %v326, %v386
      %v417 = vsel %vm357, %v327, %v387
      %v418 = vsel %vm358, %v328, %v388
      %v419 = vsel %vm359, %v329, %v389
      %v420 = vsel %vm360, %v330, %v390
      %v421 = vsel %vm361, %v331, %v391
      %v422 = vsel %vm362, %v332, %v392
      %v423 = vsel %vm363, %v333, %v393
      %v424 = vsel %vm364, %v334, %v394
      %v425 = vsel %vm365, %v335, %v395
      %v426 = vsel %vm366, %v336, %v396
      %v427 = vsel %vm367, %v337, %v397
      %v428 = vsel %vm368, %v338, %v398
      %v429 = vsel %vm369, %v339, %v399
      %v430 = vsel %vm370, %v340, %v400
      %v431 = vsel %vm371, %v341, %v401
      %v432 = vsel %vm372, %v342, %v402
      %v433 = vsel %vm373, %v343, %v403
      %v434 = vsel %vm374, %v344, %v404
      %v435 = vsel %vm375, %v345, %v405
      %v436 = vsel %vm376, %v346, %v406
      %v437 = vsel %vm377, %v347, %v407
      %v438 = vsel %vm378, %v348, %v408
      %v439 = vsel %vm379, %v349, %v409
      %v440 = vsel %vm380, %v350, %v410
      %v441 = vsel %vm381, %v351, %v411
      %v442 = vlaneseq
      %v443 = vshrl.u32 %v442, 7
      %v444 = vadd.s32 %v443, 8
      %v445 = vadd.s32 %v443, 16
      %vm446 = vcmp.ge.s32.totalorder %v443, 1
      %vm447 = vcmp.ge.s32.totalorder %v444, 1
      %vm448 = vcmp.ge.s32.totalorder %v445, 1
      %vm449 = vcmp.le.s32.totalorder %v443, 16
      %vm450 = vcmp.le.s32.totalorder %v444, 16
      %vm451 = vcmp.le.s32.totalorder %v445, 16
      %vm452 = vmand %vm446, %vm449
      %vm453 = vmand %vm447, %vm450
      %vm454 = vmand %vm448, %vm451
      %p455 = scmp.gt.s32.totalorder %s247, 0
      %s456 = scalar_select %p455, 1, 0
      %v457 = vstv %s456
      %vm458 = vcmp.eq.s32.totalorder %v457, 1
      %vm459 = vmand %vm452, %vm458
      %vm460 = vmand %vm453, %vm458
      %vm461 = vmand %vm454, %vm458
      %vm462 = vmand %vm452, 1
      %vm463 = vmand %vm453, 1
      %vm464 = vmand %vm454, 1
      %p465 = scmp.lt.s32.totalorder %s247, 1
      %s466 = scalar_select %p465, 1, 0
      %v467 = vstv %s466
      %vm468 = vcmp.eq.s32.totalorder %v467, 1
      %vm469 = vmand %vm459, 1
      %vm470 = vmand %vm460, 1
      %vm471 = vmand %vm461, 1
      %vm472 = vmand %vm462, %vm468
      %vm473 = vmand %vm463, %vm468
      %vm474 = vmand %vm464, %vm468
      %v475 = vsel %vm469, 1, 0
      %v476 = vsel %vm470, 1, 0
      %v477 = vsel %vm471, 1, 0
      %v478 = vsel %vm462, 1, 0
      %v479 = vsel %vm463, 1, 0
      %v480 = vsel %vm464, 1, 0
      %v481 = vsel %vm472, 1, 0
      %v482 = vsel %vm473, 1, 0
      %v483 = vsel %vm474, 1, 0
      %vm484 = vcmp.eq.s32.totalorder %v475, 1
      %vm485 = vcmp.eq.s32.totalorder %v476, 1
      %vm486 = vcmp.eq.s32.totalorder %v477, 1
      %vm487 = vcmp.eq.s32.totalorder %v478, 1
      %vm488 = vcmp.eq.s32.totalorder %v479, 1
      %vm489 = vcmp.eq.s32.totalorder %v480, 1
      %vm490 = vcmp.eq.s32.totalorder %v481, 1
      %vm491 = vcmp.eq.s32.totalorder %v482, 1
      %vm492 = vcmp.eq.s32.totalorder %v483, 1
      %v493 = vsel %vm484, %v412, 0.0
      %v494 = vsel %vm485, %v413, 0.0
      %v495 = vsel %vm486, %v414, 0.0
      %v496 = vsel %vm487, %v415, 0.0
      %v497 = vsel %vm488, %v416, 0.0
      %v498 = vsel %vm489, %v417, 0.0
      %v499 = vsel %vm487, %v418, 0.0
      %v500 = vsel %vm488, %v419, 0.0
      %v501 = vsel %vm489, %v420, 0.0
      %v502 = vsel %vm487, %v421, 0.0
      %v503 = vsel %vm488, %v422, 0.0
      %v504 = vsel %vm489, %v423, 0.0
      %v505 = vsel %vm487, %v424, 0.0
      %v506 = vsel %vm488, %v425, 0.0
      %v507 = vsel %vm489, %v426, 0.0
      %v508 = vsel %vm487, %v427, 0.0
      %v509 = vsel %vm488, %v428, 0.0
      %v510 = vsel %vm489, %v429, 0.0
      %v511 = vsel %vm487, %v430, 0.0
      %v512 = vsel %vm488, %v431, 0.0
      %v513 = vsel %vm489, %v432, 0.0
      %v514 = vsel %vm487, %v433, 0.0
      %v515 = vsel %vm488, %v434, 0.0
      %v516 = vsel %vm489, %v435, 0.0
      %v517 = vsel %vm487, %v436, 0.0
      %v518 = vsel %vm488, %v437, 0.0
      %v519 = vsel %vm489, %v438, 0.0
      %v520 = vsel %vm490, %v439, 0.0
      %v521 = vsel %vm491, %v440, 0.0
      %v522 = vsel %vm492, %v441, 0.0
      %v523 = vld [vmem:[%s3] sm:$0xff]
      %v524 = vld [vmem:[%s3 + $0x8] sm:$0xff]
      %v525 = vld [vmem:[%s3 + $0x10] sm:$0xff]
      %v526 = vld [vmem:[%s3 + $0x18] sm:$0xff]
      %v527 = vld [vmem:[%s3 + $0x20] sm:$0xff]
      %v528 = vld [vmem:[%s3 + $0x28] sm:$0xff]
      %v529 = vld [vmem:[%s3 + $0x30] sm:$0xff]
      %v530 = vld [vmem:[%s3 + $0x38] sm:$0xff]
      %v531 = vld [vmem:[%s3 + $0x40] sm:$0xff]
      %v532 = vld [vmem:[%s3 + $0x48] sm:$0xff]
      %v533 = vld [vmem:[%s3 + $0x50] sm:$0xff]
      %v534 = vld [vmem:[%s3 + $0x58] sm:$0xff]
      %v535 = vld [vmem:[%s3 + $0x60] sm:$0xff]
      %v536 = vld [vmem:[%s3 + $0x68] sm:$0xff]
      %v537 = vld [vmem:[%s3 + $0x70] sm:$0xff]
      %v538 = vld [vmem:[%s3 + $0x78] sm:$0xff]
      %v539 = vld [vmem:[%s3 + $0x80] sm:$0xff]
      %v540 = vld [vmem:[%s3 + $0x88] sm:$0xff]
      %v541 = vld [vmem:[%s3 + $0x90] sm:$0xff]
      %v542 = vld [vmem:[%s3 + $0x98] sm:$0xff]
      %v543 = vld [vmem:[%s3 + $0xa0] sm:$0xff]
      %v544 = vld [vmem:[%s3 + $0xa8] sm:$0xff]
      %v545 = vld [vmem:[%s3 + $0xb0] sm:$0xff]
      %v546 = vld [vmem:[%s3 + $0xb8] sm:$0xff]
      %v547 = vld [vmem:[%s3 + $0xc0] sm:$0xff]
      %v548 = vld [vmem:[%s3 + $0xc8] sm:$0xff]
      %v549 = vld [vmem:[%s3 + $0xd0] sm:$0xff]
      %v550 = vld [vmem:[%s3 + $0xd8] sm:$0xff]
      %v551 = vld [vmem:[%s3 + $0xe0] sm:$0xff]
      %v552 = vld [vmem:[%s3 + $0xe8] sm:$0xff]
      %v553 = vld [vmem:[%s3 + $0xf0] sm:$0xff]
      %v554 = vld [vmem:[%s3 + $0xf8] sm:$0xff]
      %v555 = vld [vmem:[%s3 + $0x100] sm:$0xff]
      %v556 = vld [vmem:[%s3 + $0x108] sm:$0xff]
      %v557 = vld [vmem:[%s3 + $0x110] sm:$0xff]
      %v558 = vld [vmem:[%s3 + $0x118] sm:$0xff]
      %v559 = vld [vmem:[%s3 + $0x120] sm:$0xff]
      %v560 = vld [vmem:[%s3 + $0x128] sm:$0xff]
      %v561 = vld [vmem:[%s3 + $0x130] sm:$0xff]
      %v562 = vld [vmem:[%s3 + $0x138] sm:$0xff]
      %v563 = vld [vmem:[%s3 + $0x140] sm:$0xff]
      %v564 = vld [vmem:[%s3 + $0x148] sm:$0xff]
      %v565 = vld [vmem:[%s3 + $0x150] sm:$0xff]
      %v566 = vld [vmem:[%s3 + $0x158] sm:$0xff]
      %v567 = vld [vmem:[%s3 + $0x160] sm:$0xff]
      %v568 = vld [vmem:[%s3 + $0x168] sm:$0xff]
      %v569 = vld [vmem:[%s3 + $0x170] sm:$0xff]
      %v570 = vld [vmem:[%s3 + $0x178] sm:$0xff]
      %s571 = scalar_lea.vmem %s3, 384
      %v572 = vld [vmem:[%s571] sm:$0xff]
      %v573 = vld [vmem:[%s571 + $0x8] sm:$0xff]
      %v574 = vld [vmem:[%s571 + $0x10] sm:$0xff]
      %v575 = vld [vmem:[%s571 + $0x18] sm:$0xff]
      %v576 = vld [vmem:[%s571 + $0x20] sm:$0xff]
      %v577 = vld [vmem:[%s571 + $0x28] sm:$0xff]
      %v578 = vld [vmem:[%s571 + $0x30] sm:$0xff]
      %v579 = vld [vmem:[%s571 + $0x38] sm:$0xff]
      %v580 = vld [vmem:[%s571 + $0x40] sm:$0xff]
      %v581 = vld [vmem:[%s571 + $0x48] sm:$0xff]
      %v582 = vld [vmem:[%s571 + $0x50] sm:$0xff]
      %v583 = vld [vmem:[%s571 + $0x58] sm:$0xff]
      %v584 = vld [vmem:[%s571 + $0x60] sm:$0xff]
      %v585 = vld [vmem:[%s571 + $0x68] sm:$0xff]
      %v586 = vld [vmem:[%s571 + $0x70] sm:$0xff]
      %v587 = vld [vmem:[%s571 + $0x78] sm:$0xff]
      %v588 = vld [vmem:[%s571 + $0x80] sm:$0xff]
      %v589 = vld [vmem:[%s571 + $0x88] sm:$0xff]
      %v590 = vld [vmem:[%s571 + $0x90] sm:$0xff]
      %v591 = vld [vmem:[%s571 + $0x98] sm:$0xff]
      %v592 = vld [vmem:[%s571 + $0xa0] sm:$0xff]
      %v593 = vld [vmem:[%s571 + $0xa8] sm:$0xff]
      %v594 = vld [vmem:[%s571 + $0xb0] sm:$0xff]
      %v595 = vld [vmem:[%s571 + $0xb8] sm:$0xff]
      %v596 = vld [vmem:[%s571 + $0xc0] sm:$0xff]
      %v597 = vld [vmem:[%s571 + $0xc8] sm:$0xff]
      %v598 = vld [vmem:[%s571 + $0xd0] sm:$0xff]
      %v599 = vld [vmem:[%s571 + $0xd8] sm:$0xff]
      %v600 = vld [vmem:[%s571 + $0xe0] sm:$0xff]
      %v601 = vld [vmem:[%s571 + $0xe8] sm:$0xff]
      %v602 = vld [vmem:[%s571 + $0xf0] sm:$0xff]
      %v603 = vld [vmem:[%s571 + $0xf8] sm:$0xff]
      %v604 = vld [vmem:[%s571 + $0x100] sm:$0xff]
      %v605 = vld [vmem:[%s571 + $0x108] sm:$0xff]
      %v606 = vld [vmem:[%s571 + $0x110] sm:$0xff]
      %v607 = vld [vmem:[%s571 + $0x118] sm:$0xff]
      %v608 = vld [vmem:[%s571 + $0x120] sm:$0xff]
      %v609 = vld [vmem:[%s571 + $0x128] sm:$0xff]
      %v610 = vld [vmem:[%s571 + $0x130] sm:$0xff]
      %v611 = vld [vmem:[%s571 + $0x138] sm:$0xff]
      %v612 = vld [vmem:[%s571 + $0x140] sm:$0xff]
      %v613 = vld [vmem:[%s571 + $0x148] sm:$0xff]
      %v614 = vld [vmem:[%s571 + $0x150] sm:$0xff]
      %v615 = vld [vmem:[%s571 + $0x158] sm:$0xff]
      %v616 = vld [vmem:[%s571 + $0x160] sm:$0xff]
      %v617 = vld [vmem:[%s571 + $0x168] sm:$0xff]
      %v618 = vld [vmem:[%s571 + $0x170] sm:$0xff]
      %v619 = vld [vmem:[%s571 + $0x178] sm:$0xff]
      %620 = vmatprep.subr.mxu0 %v573
      %621 = vmatpush1.msra.mxu0 %v572
      %622 = vmatprep.subr.mxu0 %v576
      %623 = vmatpush1.msra.mxu0 %v575
      %624 = vmatprep.subr.mxu0 %v579
      %625 = vmatpush1.msra.mxu0 %v578
      %626 = vmatprep.subr.mxu0 %v582
      %627 = vmatpush1.msra.mxu0 %v581
      %628 = vmatprep.subr.mxu0 %v585
      %629 = vmatpush1.msra.mxu0 %v584
      %630 = vmatprep.subr.mxu0 %v588
      %631 = vmatpush1.msra.mxu0 %v587
      %632 = vmatprep.subr.mxu0 %v591
      %633 = vmatpush1.msra.mxu0 %v590
      %634 = vmatprep.subr.mxu0 %v594
      %635 = vmatpush1.msra.mxu0 %v593
      %636 = vmatprep.subr.mxu0 %v597
      %637 = vmatpush1.msra.mxu0 %v596
      %638 = vmatprep.subr.mxu0 %v600
      %639 = vmatpush1.msra.mxu0 %v599
      %640 = vmatprep.subr.mxu0 %v603
      %641 = vmatpush1.msra.mxu0 %v602
      %642 = vmatprep.subr.mxu0 %v606
      %643 = vmatpush1.msra.mxu0 %v605
      %644 = vmatprep.subr.mxu0 %v609
      %645 = vmatpush1.msra.mxu0 %v608
      %646 = vmatprep.subr.mxu0 %v612
      %647 = vmatpush1.msra.mxu0 %v611
      %648 = vmatprep.subr.mxu0 %v615
      %649 = vmatpush1.msra.mxu0 %v614
      %650 = vmatprep.subr.mxu0 %v618
      %651 = vmatpush1.msra.mxu0 %v617
      %652 = vmatprep.subr.mxu0 0.0
      %653 = vmatpush1.msra.mxu0 0.0
      %654 = vmatprep.subr.mxu0 0.0
      %655 = vmatpush1.msra.mxu0 0.0
      %656 = vmatprep.subr.mxu0 0.0
      %657 = vmatpush1.msra.mxu0 0.0
      %658 = vmatprep.subr.mxu0 0.0
      %659 = vmatpush1.msra.mxu0 0.0
      %660 = vmatprep.subr.mxu0 0.0
      %661 = vmatpush1.msra.mxu0 0.0
      %662 = vmatprep.subr.mxu0 0.0
      %663 = vmatpush1.msra.mxu0 0.0
      %664 = vmatprep.subr.mxu0 0.0
      %665 = vmatpush1.msra.mxu0 0.0
      %666 = vmatprep.subr.mxu0 0.0
      %667 = vmatpush1.msra.mxu0 0.0
      %668 = vmatprep.subr.mxu0 0.0
      %669 = vmatpush1.msra.mxu0 0.0
      %670 = vmatprep.subr.mxu0 0.0
      %671 = vmatpush1.msra.mxu0 0.0
      %672 = vmatprep.subr.mxu0 0.0
      %673 = vmatpush1.msra.mxu0 0.0
      %674 = vmatprep.subr.mxu0 0.0
      %675 = vmatpush1.msra.mxu0 0.0
      %676 = vmatprep.subr.mxu0 0.0
      %677 = vmatpush1.msra.mxu0 0.0
      %678 = vmatprep.subr.mxu0 0.0
      %679 = vmatpush1.msra.mxu0 0.0
      %680 = vmatprep.subr.mxu0 0.0
      %681 = vmatpush1.msra.mxu0 0.0
      %682 = vmatprep.subr.mxu0 0.0
      %683 = vmatpush1.msra.mxu0 0.0
      %684 = vmatprep.mubr.f32.mxu0 0.0
      %685 = vmatmul.mubr.f32.gmra.mrb[0].mxu0 %v496
      %v686 = vpop.f32.mrb[0].mxu0
      %v687 = vadd.f32 0.0, %v686
      %v688 = vpop.f32.mrb[0].mxu0
      %v689 = vadd.f32 0.0, %v688
      %690 = vmatprep.mubr.f32.mxu0 0.0
      %691 = vmatmul.mubr.f32.gmra.mrb[0].mxu0 %v497
      %v692 = vpop.f32.mrb[0].mxu0
      %v693 = vadd.f32 0.0, %v692
      %v694 = vpop.f32.mrb[0].mxu0
      %v695 = vadd.f32 0.0, %v694
      %696 = vmatprep.mubr.f32.mxu0 0.0
      %697 = vmatmul.mubr.f32.gmra.mrb[0].mxu0 %v498
      %v698 = vpop.f32.mrb[0].mxu0
      %v699 = vpop.f32.mrb[0].mxu0
      %v700 = vadd.f32 0.0, %v699
      %701 = vmatprep.mubr.f32.mxu0 0.0
      %702 = vmatmul.mubr.f32.gmra.mrb[0].mxu0 %v499
      %v703 = vpop.f32.mrb[0].mxu0
      %v704 = vadd.f32 0.0, %v703
      %v705 = vpop.f32.mrb[0].mxu0
      %v706 = vadd.f32 0.0, %v705
      %707 = vmatprep.mubr.f32.mxu0 0.0
      %708 = vmatmul.mubr.f32.gmra.mrb[0].mxu0 %v500
      %v709 = vpop.f32.mrb[0].mxu0
      %v710 = vadd.f32 0.0, %v709
      %v711 = vpop.f32.mrb[0].mxu0
      %v712 = vadd.f32 0.0, %v711
      %713 = vmatprep.mubr.f32.mxu0 0.0
      %714 = vmatmul.mubr.f32.gmra.mrb[0].mxu0 %v501
      %v715 = vpop.f32.mrb[0].mxu0
      %v716 = vpop.f32.mrb[0].mxu0
      %v717 = vadd.f32 0.0, %v716
      %718 = vmatprep.mubr.f32.mxu0 0.0
      %719 = vmatmul.mubr.f32.gmra.mrb[0].mxu0 %v502
      %v720 = vpop.f32.mrb[0].mxu0
      %v721 = vadd.f32 0.0, %v720
      %v722 = vpop.f32.mrb[0].mxu0
      %v723 = vadd.f32 0.0, %v722
      %724 = vmatprep.mubr.f32.mxu0 0.0
      %725 = vmatmul.mubr.f32.gmra.mrb[0].mxu0 %v503
      %v726 = vpop.f32.mrb[0].mxu0
      %v727 = vadd.f32 0.0, %v726
      %v728 = vpop.f32.mrb[0].mxu0
      %v729 = vadd.f32 0.0, %v728
      %730 = vmatprep.mubr.f32.mxu0 0.0
      %731 = vmatmul.mubr.f32.gmra.mrb[0].mxu0 %v504
      %v732 = vpop.f32.mrb[0].mxu0
      %v733 = vpop.f32.mrb[0].mxu0
      %v734 = vadd.f32 0.0, %v733
      %735 = vmatprep.mubr.f32.mxu0 0.0
      %736 = vmatmul.mubr.f32.gmra.mrb[0].mxu0 %v505
      %v737 = vpop.f32.mrb[0].mxu0
      %v738 = vadd.f32 0.0, %v737
      %v739 = vpop.f32.mrb[0].mxu0
      %v740 = vadd.f32 0.0, %v739
      %741 = vmatprep.mubr.f32.mxu0 0.0
      %742 = vmatmul.mubr.f32.gmra.mrb[0].mxu0 %v506
      %v743 = vpop.f32.mrb[0].mxu0
      %v744 = vadd.f32 0.0, %v743
      %v745 = vpop.f32.mrb[0].mxu0
      %v746 = vadd.f32 0.0, %v745
      %747 = vmatprep.mubr.f32.mxu0 0.0
      %748 = vmatmul.mubr.f32.gmra.mrb[0].mxu0 %v507
      %v749 = vpop.f32.mrb[0].mxu0
      %v750 = vpop.f32.mrb[0].mxu0
      %v751 = vadd.f32 0.0, %v750
      %752 = vmatprep.mubr.f32.mxu0 0.0
      %753 = vmatmul.mubr.f32.gmra.mrb[0].mxu0 %v508
      %v754 = vpop.f32.mrb[0].mxu0
      %v755 = vadd.f32 0.0, %v754
      %v756 = vpop.f32.mrb[0].mxu0
      %v757 = vadd.f32 0.0, %v756
      %758 = vmatprep.mubr.f32.mxu0 0.0
      %759 = vmatmul.mubr.f32.gmra.mrb[0].mxu0 %v509
      %v760 = vpop.f32.mrb[0].mxu0
      %v761 = vadd.f32 0.0, %v760
      %v762 = vpop.f32.mrb[0].mxu0
      %v763 = vadd.f32 0.0, %v762
      %764 = vmatprep.mubr.f32.mxu0 0.0
      %765 = vmatmul.mubr.f32.gmra.mrb[0].mxu0 %v510
      %v766 = vpop.f32.mrb[0].mxu0
      %v767 = vpop.f32.mrb[0].mxu0
      %v768 = vadd.f32 0.0, %v767
      %769 = vmatprep.mubr.f32.mxu0 0.0
      %770 = vmatmul.mubr.f32.gmra.mrb[0].mxu0 %v511
      %v771 = vpop.f32.mrb[0].mxu0
      %v772 = vadd.f32 0.0, %v771
      %v773 = vpop.f32.mrb[0].mxu0
      %v774 = vadd.f32 0.0, %v773
      %775 = vmatprep.mubr.f32.mxu0 0.0
      %776 = vmatmul.mubr.f32.gmra.mrb[0].mxu0 %v512
      %v777 = vpop.f32.mrb[0].mxu0
      %v778 = vadd.f32 0.0, %v777
      %v779 = vpop.f32.mrb[0].mxu0
      %v780 = vadd.f32 0.0, %v779
      %781 = vmatprep.mubr.f32.mxu0 0.0
      %782 = vmatmul.mubr.f32.gmra.mrb[0].mxu0 %v513
      %v783 = vpop.f32.mrb[0].mxu0
      %v784 = vpop.f32.mrb[0].mxu0
      %v785 = vadd.f32 0.0, %v784
      %786 = vmatprep.mubr.f32.mxu0 0.0
      %787 = vmatmul.mubr.f32.gmra.mrb[0].mxu0 %v514
      %v788 = vpop.f32.mrb[0].mxu0
      %v789 = vadd.f32 0.0, %v788
      %v790 = vpop.f32.mrb[0].mxu0
      %v791 = vadd.f32 0.0, %v790
      %792 = vmatprep.mubr.f32.mxu0 0.0
      %793 = vmatmul.mubr.f32.gmra.mrb[0].mxu0 %v515
      %v794 = vpop.f32.mrb[0].mxu0
      %v795 = vadd.f32 0.0, %v794
      %v796 = vpop.f32.mrb[0].mxu0
      %v797 = vadd.f32 0.0, %v796
      %798 = vmatprep.mubr.f32.mxu0 0.0
      %799 = vmatmul.mubr.f32.gmra.mrb[0].mxu0 %v516
      %v800 = vpop.f32.mrb[0].mxu0
      %v801 = vpop.f32.mrb[0].mxu0
      %v802 = vadd.f32 0.0, %v801
      %803 = vmatprep.mubr.f32.mxu0 0.0
      %804 = vmatmul.mubr.f32.gmra.mrb[0].mxu0 %v517
      %v805 = vpop.f32.mrb[0].mxu0
      %v806 = vadd.f32 0.0, %v805
      %v807 = vpop.f32.mrb[0].mxu0
      %v808 = vadd.f32 0.0, %v807
      %809 = vmatprep.mubr.f32.mxu0 0.0
      %810 = vmatmul.mubr.f32.gmra.mrb[0].mxu0 %v518
      %v811 = vpop.f32.mrb[0].mxu0
      %v812 = vadd.f32 0.0, %v811
      %v813 = vpop.f32.mrb[0].mxu0
      %v814 = vadd.f32 0.0, %v813
      %815 = vmatprep.mubr.f32.mxu0 0.0
      %816 = vmatmul.mubr.f32.gmra.mrb[0].mxu0 %v519
      %v817 = vpop.f32.mrb[0].mxu0
      %v818 = vpop.f32.mrb[0].mxu0
      %v819 = vadd.f32 0.0, %v818
      %820 = vdwg.mxu0
      %821 = vmatprep.subr.mxu0 0.0
      %822 = vmatpush1.msra.mxu0 %v574
      %823 = vmatprep.subr.mxu0 0.0
      %824 = vmatpush1.msra.mxu0 %v577
      %825 = vmatprep.subr.mxu0 0.0
      %826 = vmatpush1.msra.mxu0 %v580
      %827 = vmatprep.subr.mxu0 0.0
      %828 = vmatpush1.msra.mxu0 %v583
      %829 = vmatprep.subr.mxu0 0.0
      %830 = vmatpush1.msra.mxu0 %v586
      %831 = vmatprep.subr.mxu0 0.0
      %832 = vmatpush1.msra.mxu0 %v589
      %833 = vmatprep.subr.mxu0 0.0
      %834 = vmatpush1.msra.mxu0 %v592
      %835 = vmatprep.subr.mxu0 0.0
      %836 = vmatpush1.msra.mxu0 %v595
      %837 = vmatprep.subr.mxu0 0.0
      %838 = vmatpush1.msra.mxu0 %v598
      %839 = vmatprep.subr.mxu0 0.0
      %840 = vmatpush1.msra.mxu0 %v601
      %841 = vmatprep.subr.mxu0 0.0
      %842 = vmatpush1.msra.mxu0 %v604
      %843 = vmatprep.subr.mxu0 0.0
      %844 = vmatpush1.msra.mxu0 %v607
      %845 = vmatprep.subr.mxu0 0.0
      %846 = vmatpush1.msra.mxu0 %v610
      %847 = vmatprep.subr.mxu0 0.0
      %848 = vmatpush1.msra.mxu0 %v613
      %849 = vmatprep.subr.mxu0 0.0
      %850 = vmatpush1.msra.mxu0 %v616
      %851 = vmatprep.subr.mxu0 0.0
      %852 = vmatpush1.msra.mxu0 %v619
      %853 = vmatprep.subr.mxu0 0.0
      %854 = vmatpush1.msra.mxu0 0.0
      %855 = vmatprep.subr.mxu0 0.0
      %856 = vmatpush1.msra.mxu0 0.0
      %857 = vmatprep.subr.mxu0 0.0
      %858 = vmatpush1.msra.mxu0 0.0
      %859 = vmatprep.subr.mxu0 0.0
      %860 = vmatpush1.msra.mxu0 0.0
      %861 = vmatprep.subr.mxu0 0.0
      %862 = vmatpush1.msra.mxu0 0.0
      %863 = vmatprep.subr.mxu0 0.0
      %864 = vmatpush1.msra.mxu0 0.0
      %865 = vmatprep.subr.mxu0 0.0
      %866 = vmatpush1.msra.mxu0 0.0
      %867 = vmatprep.subr.mxu0 0.0
      %868 = vmatpush1.msra.mxu0 0.0
      %869 = vmatprep.subr.mxu0 0.0
      %870 = vmatpush1.msra.mxu0 0.0
      %871 = vmatprep.subr.mxu0 0.0
      %872 = vmatpush1.msra.mxu0 0.0
      %873 = vmatprep.subr.mxu0 0.0
      %874 = vmatpush1.msra.mxu0 0.0
      %875 = vmatprep.subr.mxu0 0.0
      %876 = vmatpush1.msra.mxu0 0.0
      %877 = vmatprep.subr.mxu0 0.0
      %878 = vmatpush1.msra.mxu0 0.0
      %879 = vmatprep.subr.mxu0 0.0
      %880 = vmatpush1.msra.mxu0 0.0
      %881 = vmatprep.subr.mxu0 0.0
      %882 = vmatpush1.msra.mxu0 0.0
      %883 = vmatprep.subr.mxu0 0.0
      %884 = vmatpush1.msra.mxu0 0.0
      %885 = vmatprep.mubr.f32.mxu0 0.0
      %886 = vmatmul.mubr.f32.gmra.mrb[0].mxu0 %v496
      %v887 = vpop.f32.mrb[0].mxu0
      %v888 = vadd.f32 0.0, %v887
      %v889 = vpop.f32.mrb[0].mxu0
      %890 = vmatprep.mubr.f32.mxu0 0.0
      %891 = vmatmul.mubr.f32.gmra.mrb[0].mxu0 %v497
      %v892 = vpop.f32.mrb[0].mxu0
      %v893 = vadd.f32 0.0, %v892
      %v894 = vpop.f32.mrb[0].mxu0
      %895 = vmatprep.mubr.f32.mxu0 0.0
      %896 = vmatmul.mubr.f32.gmra.mrb[0].mxu0 %v498
      %v897 = vpop.f32.mrb[0].mxu0
      %v898 = vadd.f32 0.0, %v897
      %v899 = vpop.f32.mrb[0].mxu0
      %900 = vmatprep.mubr.f32.mxu0 0.0
      %901 = vmatmul.mubr.f32.gmra.mrb[0].mxu0 %v499
      %v902 = vpop.f32.mrb[0].mxu0
      %v903 = vadd.f32 0.0, %v902
      %v904 = vpop.f32.mrb[0].mxu0
      %905 = vmatprep.mubr.f32.mxu0 0.0
      %906 = vmatmul.mubr.f32.gmra.mrb[0].mxu0 %v500
      %v907 = vpop.f32.mrb[0].mxu0
      %v908 = vadd.f32 0.0, %v907
      %v909 = vpop.f32.mrb[0].mxu0
      %910 = vmatprep.mubr.f32.mxu0 0.0
      %911 = vmatmul.mubr.f32.gmra.mrb[0].mxu0 %v501
      %v912 = vpop.f32.mrb[0].mxu0
      %v913 = vadd.f32 0.0, %v912
      %v914 = vpop.f32.mrb[0].mxu0
      %915 = vmatprep.mubr.f32.mxu0 0.0
      %916 = vmatmul.mubr.f32.gmra.mrb[0].mxu0 %v502
      %v917 = vpop.f32.mrb[0].mxu0
      %v918 = vadd.f32 0.0, %v917
      %v919 = vpop.f32.mrb[0].mxu0
      %920 = vmatprep.mubr.f32.mxu0 0.0
      %921 = vmatmul.mubr.f32.gmra.mrb[0].mxu0 %v503
      %v922 = vpop.f32.mrb[0].mxu0
      %v923 = vadd.f32 0.0, %v922
      %v924 = vpop.f32.mrb[0].mxu0
      %925 = vmatprep.mubr.f32.mxu0 0.0
      %926 = vmatmul.mubr.f32.gmra.mrb[0].mxu0 %v504
      %v927 = vpop.f32.mrb[0].mxu0
      %v928 = vadd.f32 0.0, %v927
      %v929 = vpop.f32.mrb[0].mxu0
      %930 = vmatprep.mubr.f32.mxu0 0.0
      %931 = vmatmul.mubr.f32.gmra.mrb[0].mxu0 %v505
      %v932 = vpop.f32.mrb[0].mxu0
      %v933 = vadd.f32 0.0, %v932
      %v934 = vpop.f32.mrb[0].mxu0
      %935 = vmatprep.mubr.f32.mxu0 0.0
      %936 = vmatmul.mubr.f32.gmra.mrb[0].mxu0 %v506
      %v937 = vpop.f32.mrb[0].mxu0
      %v938 = vadd.f32 0.0, %v937
      %v939 = vpop.f32.mrb[0].mxu0
      %940 = vmatprep.mubr.f32.mxu0 0.0
      %941 = vmatmul.mubr.f32.gmra.mrb[0].mxu0 %v507
      %v942 = vpop.f32.mrb[0].mxu0
      %v943 = vadd.f32 0.0, %v942
      %v944 = vpop.f32.mrb[0].mxu0
      %945 = vmatprep.mubr.f32.mxu0 0.0
      %946 = vmatmul.mubr.f32.gmra.mrb[0].mxu0 %v508
      %v947 = vpop.f32.mrb[0].mxu0
      %v948 = vadd.f32 0.0, %v947
      %v949 = vpop.f32.mrb[0].mxu0
      %950 = vmatprep.mubr.f32.mxu0 0.0
      %951 = vmatmul.mubr.f32.gmra.mrb[0].mxu0 %v509
      %v952 = vpop.f32.mrb[0].mxu0
      %v953 = vadd.f32 0.0, %v952
      %v954 = vpop.f32.mrb[0].mxu0
      %955 = vmatprep.mubr.f32.mxu0 0.0
      %956 = vmatmul.mubr.f32.gmra.mrb[0].mxu0 %v510
      %v957 = vpop.f32.mrb[0].mxu0
      %v958 = vadd.f32 0.0, %v957
      %v959 = vpop.f32.mrb[0].mxu0
      %960 = vmatprep.mubr.f32.mxu0 0.0
      %961 = vmatmul.mubr.f32.gmra.mrb[0].mxu0 %v511
      %v962 = vpop.f32.mrb[0].mxu0
      %v963 = vadd.f32 0.0, %v962
      %v964 = vpop.f32.mrb[0].mxu0
      %965 = vmatprep.mubr.f32.mxu0 0.0
      %966 = vmatmul.mubr.f32.gmra.mrb[0].mxu0 %v512
      %v967 = vpop.f32.mrb[0].mxu0
      %v968 = vadd.f32 0.0, %v967
      %v969 = vpop.f32.mrb[0].mxu0
      %970 = vmatprep.mubr.f32.mxu0 0.0
      %971 = vmatmul.mubr.f32.gmra.mrb[0].mxu0 %v513
      %v972 = vpop.f32.mrb[0].mxu0
      %v973 = vadd.f32 0.0, %v972
      %v974 = vpop.f32.mrb[0].mxu0
      %975 = vmatprep.mubr.f32.mxu0 0.0
      %976 = vmatmul.mubr.f32.gmra.mrb[0].mxu0 %v514
      %v977 = vpop.f32.mrb[0].mxu0
      %v978 = vadd.f32 0.0, %v977
      %v979 = vpop.f32.mrb[0].mxu0
      %980 = vmatprep.mubr.f32.mxu0 0.0
      %981 = vmatmul.mubr.f32.gmra.mrb[0].mxu0 %v515
      %v982 = vpop.f32.mrb[0].mxu0
      %v983 = vadd.f32 0.0, %v982
      %v984 = vpop.f32.mrb[0].mxu0
      %985 = vmatprep.mubr.f32.mxu0 0.0
      %986 = vmatmul.mubr.f32.gmra.mrb[0].mxu0 %v516
      %v987 = vpop.f32.mrb[0].mxu0
      %v988 = vadd.f32 0.0, %v987
      %v989 = vpop.f32.mrb[0].mxu0
      %990 = vmatprep.mubr.f32.mxu0 0.0
      %991 = vmatmul.mubr.f32.gmra.mrb[0].mxu0 %v517
      %v992 = vpop.f32.mrb[0].mxu0
      %v993 = vadd.f32 0.0, %v992
      %v994 = vpop.f32.mrb[0].mxu0
      %995 = vmatprep.mubr.f32.mxu0 0.0
      %996 = vmatmul.mubr.f32.gmra.mrb[0].mxu0 %v518
      %v997 = vpop.f32.mrb[0].mxu0
      %v998 = vadd.f32 0.0, %v997
      %v999 = vpop.f32.mrb[0].mxu0
      %1000 = vmatprep.mubr.f32.mxu0 0.0
      %1001 = vmatmul.mubr.f32.gmra.mrb[0].mxu0 %v519
      %v1002 = vpop.f32.mrb[0].mxu0
      %v1003 = vadd.f32 0.0, %v1002
      %v1004 = vpop.f32.mrb[0].mxu0
      %1005 = vdwg.mxu0
      %1006 = vmatprep.subr.mxu0 %v524
      %1007 = vmatpush1.msra.mxu0 %v523
      %1008 = vmatprep.subr.mxu0 %v527
      %1009 = vmatpush1.msra.mxu0 %v526
      %1010 = vmatprep.subr.mxu0 %v530
      %1011 = vmatpush1.msra.mxu0 %v529
      %1012 = vmatprep.subr.mxu0 %v533
      %1013 = vmatpush1.msra.mxu0 %v532
      %1014 = vmatprep.subr.mxu0 %v536
      %1015 = vmatpush1.msra.mxu0 %v535
      %1016 = vmatprep.subr.mxu0 %v539
      %1017 = vmatpush1.msra.mxu0 %v538
      %1018 = vmatprep.subr.mxu0 %v542
      %1019 = vmatpush1.msra.mxu0 %v541
      %1020 = vmatprep.subr.mxu0 %v545
      %1021 = vmatpush1.msra.mxu0 %v544
      %1022 = vmatprep.subr.mxu0 %v548
      %1023 = vmatpush1.msra.mxu0 %v547
      %1024 = vmatprep.subr.mxu0 %v551
      %1025 = vmatpush1.msra.mxu0 %v550
      %1026 = vmatprep.subr.mxu0 %v554
      %1027 = vmatpush1.msra.mxu0 %v553
      %1028 = vmatprep.subr.mxu0 %v557
      %1029 = vmatpush1.msra.mxu0 %v556
      %1030 = vmatprep.subr.mxu0 %v560
      %1031 = vmatpush1.msra.mxu0 %v559
      %1032 = vmatprep.subr.mxu0 %v563
      %1033 = vmatpush1.msra.mxu0 %v562
      %1034 = vmatprep.subr.mxu0 %v566
      %1035 = vmatpush1.msra.mxu0 %v565
      %1036 = vmatprep.subr.mxu0 %v569
      %1037 = vmatpush1.msra.mxu0 %v568
      %1038 = vmatprep.subr.mxu0 0.0
      %1039 = vmatpush1.msra.mxu0 0.0
      %1040 = vmatprep.subr.mxu0 0.0
      %1041 = vmatpush1.msra.mxu0 0.0
      %1042 = vmatprep.subr.mxu0 0.0
      %1043 = vmatpush1.msra.mxu0 0.0
      %1044 = vmatprep.subr.mxu0 0.0
      %1045 = vmatpush1.msra.mxu0 0.0
      %1046 = vmatprep.subr.mxu0 0.0
      %1047 = vmatpush1.msra.mxu0 0.0
      %1048 = vmatprep.subr.mxu0 0.0
      %1049 = vmatpush1.msra.mxu0 0.0
      %1050 = vmatprep.subr.mxu0 0.0
      %1051 = vmatpush1.msra.mxu0 0.0
      %1052 = vmatprep.subr.mxu0 0.0
      %1053 = vmatpush1.msra.mxu0 0.0
      %1054 = vmatprep.subr.mxu0 0.0
      %1055 = vmatpush1.msra.mxu0 0.0
      %1056 = vmatprep.subr.mxu0 0.0
      %1057 = vmatpush1.msra.mxu0 0.0
      %1058 = vmatprep.subr.mxu0 0.0
      %1059 = vmatpush1.msra.mxu0 0.0
      %1060 = vmatprep.subr.mxu0 0.0
      %1061 = vmatpush1.msra.mxu0 0.0
      %1062 = vmatprep.subr.mxu0 0.0
      %1063 = vmatpush1.msra.mxu0 0.0
      %1064 = vmatprep.subr.mxu0 0.0
      %1065 = vmatpush1.msra.mxu0 0.0
      %1066 = vmatprep.subr.mxu0 0.0
      %1067 = vmatpush1.msra.mxu0 0.0
      %1068 = vmatprep.subr.mxu0 0.0
      %1069 = vmatpush1.msra.mxu0 0.0
      %1070 = vmatprep.mubr.f32.mxu0 0.0
      %1071 = vmatmul.mubr.f32.gmra.mrb[0].mxu0 %v493
      %v1072 = vpop.f32.mrb[0].mxu0
      %v1073 = vadd.f32 %v687, %v1072
      %v1074 = vpop.f32.mrb[0].mxu0
      %v1075 = vadd.f32 %v689, %v1074
      %1076 = vmatprep.mubr.f32.mxu0 0.0
      %1077 = vmatmul.mubr.f32.gmra.mrb[0].mxu0 %v494
      %v1078 = vpop.f32.mrb[0].mxu0
      %v1079 = vadd.f32 %v693, %v1078
      %v1080 = vpop.f32.mrb[0].mxu0
      %v1081 = vadd.f32 %v695, %v1080
      %1082 = vmatprep.mubr.f32.mxu0 0.0
      %1083 = vmatmul.mubr.f32.gmra.mrb[0].mxu0 %v495
      %v1084 = vpop.f32.mrb[0].mxu0
      %v1085 = vpop.f32.mrb[0].mxu0
      %v1086 = vadd.f32 %v700, %v1085
      %1087 = vmatprep.mubr.f32.mxu0 0.0
      %1088 = vmatmul.mubr.f32.gmra.mrb[0].mxu0 %v496
      %v1089 = vpop.f32.mrb[0].mxu0
      %v1090 = vadd.f32 %v704, %v1089
      %v1091 = vpop.f32.mrb[0].mxu0
      %v1092 = vadd.f32 %v706, %v1091
      %1093 = vmatprep.mubr.f32.mxu0 0.0
      %1094 = vmatmul.mubr.f32.gmra.mrb[0].mxu0 %v497
      %v1095 = vpop.f32.mrb[0].mxu0
      %v1096 = vadd.f32 %v710, %v1095
      %v1097 = vpop.f32.mrb[0].mxu0
      %v1098 = vadd.f32 %v712, %v1097
      %1099 = vmatprep.mubr.f32.mxu0 0.0
      %1100 = vmatmul.mubr.f32.gmra.mrb[0].mxu0 %v498
      %v1101 = vpop.f32.mrb[0].mxu0
      %v1102 = vpop.f32.mrb[0].mxu0
      %v1103 = vadd.f32 %v717, %v1102
      %1104 = vmatprep.mubr.f32.mxu0 0.0
      %1105 = vmatmul.mubr.f32.gmra.mrb[0].mxu0 %v499
      %v1106 = vpop.f32.mrb[0].mxu0
      %v1107 = vadd.f32 %v721, %v1106
      %v1108 = vpop.f32.mrb[0].mxu0
      %v1109 = vadd.f32 %v723, %v1108
      %1110 = vmatprep.mubr.f32.mxu0 0.0
      %1111 = vmatmul.mubr.f32.gmra.mrb[0].mxu0 %v500
      %v1112 = vpop.f32.mrb[0].mxu0
      %v1113 = vadd.f32 %v727, %v1112
      %v1114 = vpop.f32.mrb[0].mxu0
      %v1115 = vadd.f32 %v729, %v1114
      %1116 = vmatprep.mubr.f32.mxu0 0.0
      %1117 = vmatmul.mubr.f32.gmra.mrb[0].mxu0 %v501
      %v1118 = vpop.f32.mrb[0].mxu0
      %v1119 = vpop.f32.mrb[0].mxu0
      %v1120 = vadd.f32 %v734, %v1119
      %1121 = vmatprep.mubr.f32.mxu0 0.0
      %1122 = vmatmul.mubr.f32.gmra.mrb[0].mxu0 %v502
      %v1123 = vpop.f32.mrb[0].mxu0
      %v1124 = vadd.f32 %v738, %v1123
      %v1125 = vpop.f32.mrb[0].mxu0
      %v1126 = vadd.f32 %v740, %v1125
      %1127 = vmatprep.mubr.f32.mxu0 0.0
      %1128 = vmatmul.mubr.f32.gmra.mrb[0].mxu0 %v503
      %v1129 = vpop.f32.mrb[0].mxu0
      %v1130 = vadd.f32 %v744, %v1129
      %v1131 = vpop.f32.mrb[0].mxu0
      %v1132 = vadd.f32 %v746, %v1131
      %1133 = vmatprep.mubr.f32.mxu0 0.0
      %1134 = vmatmul.mubr.f32.gmra.mrb[0].mxu0 %v504
      %v1135 = vpop.f32.mrb[0].mxu0
      %v1136 = vpop.f32.mrb[0].mxu0
      %v1137 = vadd.f32 %v751, %v1136
      %1138 = vmatprep.mubr.f32.mxu0 0.0
      %1139 = vmatmul.mubr.f32.gmra.mrb[0].mxu0 %v505
      %v1140 = vpop.f32.mrb[0].mxu0
      %v1141 = vadd.f32 %v755, %v1140
      %v1142 = vpop.f32.mrb[0].mxu0
      %v1143 = vadd.f32 %v757, %v1142
      %1144 = vmatprep.mubr.f32.mxu0 0.0
      %1145 = vmatmul.mubr.f32.gmra.mrb[0].mxu0 %v506
      %v1146 = vpop.f32.mrb[0].mxu0
      %v1147 = vadd.f32 %v761, %v1146
      %v1148 = vpop.f32.mrb[0].mxu0
      %v1149 = vadd.f32 %v763, %v1148
      %1150 = vmatprep.mubr.f32.mxu0 0.0
      %1151 = vmatmul.mubr.f32.gmra.mrb[0].mxu0 %v507
      %v1152 = vpop.f32.mrb[0].mxu0
      %v1153 = vpop.f32.mrb[0].mxu0
      %v1154 = vadd.f32 %v768, %v1153
      %1155 = vmatprep.mubr.f32.mxu0 0.0
      %1156 = vmatmul.mubr.f32.gmra.mrb[0].mxu0 %v508
      %v1157 = vpop.f32.mrb[0].mxu0
      %v1158 = vadd.f32 %v772, %v1157
      %v1159 = vpop.f32.mrb[0].mxu0
      %v1160 = vadd.f32 %v774, %v1159
      %1161 = vmatprep.mubr.f32.mxu0 0.0
      %1162 = vmatmul.mubr.f32.gmra.mrb[0].mxu0 %v509
      %v1163 = vpop.f32.mrb[0].mxu0
      %v1164 = vadd.f32 %v778, %v1163
      %v1165 = vpop.f32.mrb[0].mxu0
      %v1166 = vadd.f32 %v780, %v1165
      %1167 = vmatprep.mubr.f32.mxu0 0.0
      %1168 = vmatmul.mubr.f32.gmra.mrb[0].mxu0 %v510
      %v1169 = vpop.f32.mrb[0].mxu0
      %v1170 = vpop.f32.mrb[0].mxu0
      %v1171 = vadd.f32 %v785, %v1170
      %1172 = vmatprep.mubr.f32.mxu0 0.0
      %1173 = vmatmul.mubr.f32.gmra.mrb[0].mxu0 %v511
      %v1174 = vpop.f32.mrb[0].mxu0
      %v1175 = vadd.f32 %v789, %v1174
      %v1176 = vpop.f32.mrb[0].mxu0
      %v1177 = vadd.f32 %v791, %v1176
      %1178 = vmatprep.mubr.f32.mxu0 0.0
      %1179 = vmatmul.mubr.f32.gmra.mrb[0].mxu0 %v512
      %v1180 = vpop.f32.mrb[0].mxu0
      %v1181 = vadd.f32 %v795, %v1180
      %v1182 = vpop.f32.mrb[0].mxu0
      %v1183 = vadd.f32 %v797, %v1182
      %1184 = vmatprep.mubr.f32.mxu0 0.0
      %1185 = vmatmul.mubr.f32.gmra.mrb[0].mxu0 %v513
      %v1186 = vpop.f32.mrb[0].mxu0
      %v1187 = vpop.f32.mrb[0].mxu0
      %v1188 = vadd.f32 %v802, %v1187
      %1189 = vmatprep.mubr.f32.mxu0 0.0
      %1190 = vmatmul.mubr.f32.gmra.mrb[0].mxu0 %v514
      %v1191 = vpop.f32.mrb[0].mxu0
      %v1192 = vadd.f32 %v806, %v1191
      %v1193 = vpop.f32.mrb[0].mxu0
      %v1194 = vadd.f32 %v808, %v1193
      %1195 = vmatprep.mubr.f32.mxu0 0.0
      %1196 = vmatmul.mubr.f32.gmra.mrb[0].mxu0 %v515
      %v1197 = vpop.f32.mrb[0].mxu0
      %v1198 = vadd.f32 %v812, %v1197
      %v1199 = vpop.f32.mrb[0].mxu0
      %v1200 = vadd.f32 %v814, %v1199
      %1201 = vmatprep.mubr.f32.mxu0 0.0
      %1202 = vmatmul.mubr.f32.gmra.mrb[0].mxu0 %v516
      %v1203 = vpop.f32.mrb[0].mxu0
      %v1204 = vpop.f32.mrb[0].mxu0
      %v1205 = vadd.f32 %v819, %v1204
      %1206 = vdwg.mxu0
      %1207 = vmatprep.subr.mxu0 0.0
      %1208 = vmatpush1.msra.mxu0 %v525
      %1209 = vmatprep.subr.mxu0 0.0
      %1210 = vmatpush1.msra.mxu0 %v528
      %1211 = vmatprep.subr.mxu0 0.0
      %1212 = vmatpush1.msra.mxu0 %v531
      %1213 = vmatprep.subr.mxu0 0.0
      %1214 = vmatpush1.msra.mxu0 %v534
      %1215 = vmatprep.subr.mxu0 0.0
      %1216 = vmatpush1.msra.mxu0 %v537
      %1217 = vmatprep.subr.mxu0 0.0
      %1218 = vmatpush1.msra.mxu0 %v540
      %1219 = vmatprep.subr.mxu0 0.0
      %1220 = vmatpush1.msra.mxu0 %v543
      %1221 = vmatprep.subr.mxu0 0.0
      %1222 = vmatpush1.msra.mxu0 %v546
      %1223 = vmatprep.subr.mxu0 0.0
      %1224 = vmatpush1.msra.mxu0 %v549
      %1225 = vmatprep.subr.mxu0 0.0
      %1226 = vmatpush1.msra.mxu0 %v552
      %1227 = vmatprep.subr.mxu0 0.0
      %1228 = vmatpush1.msra.mxu0 %v555
      %1229 = vmatprep.subr.mxu0 0.0
      %1230 = vmatpush1.msra.mxu0 %v558
      %1231 = vmatprep.subr.mxu0 0.0
      %1232 = vmatpush1.msra.mxu0 %v561
      %1233 = vmatprep.subr.mxu0 0.0
      %1234 = vmatpush1.msra.mxu0 %v564
      %1235 = vmatprep.subr.mxu0 0.0
      %1236 = vmatpush1.msra.mxu0 %v567
      %1237 = vmatprep.subr.mxu0 0.0
      %1238 = vmatpush1.msra.mxu0 %v570
      %1239 = vmatprep.subr.mxu0 0.0
      %1240 = vmatpush1.msra.mxu0 0.0
      %1241 = vmatprep.subr.mxu0 0.0
      %1242 = vmatpush1.msra.mxu0 0.0
      %1243 = vmatprep.subr.mxu0 0.0
      %1244 = vmatpush1.msra.mxu0 0.0
      %1245 = vmatprep.subr.mxu0 0.0
      %1246 = vmatpush1.msra.mxu0 0.0
      %1247 = vmatprep.subr.mxu0 0.0
      %1248 = vmatpush1.msra.mxu0 0.0
      %1249 = vmatprep.subr.mxu0 0.0
      %1250 = vmatpush1.msra.mxu0 0.0
      %1251 = vmatprep.subr.mxu0 0.0
      %1252 = vmatpush1.msra.mxu0 0.0
      %1253 = vmatprep.subr.mxu0 0.0
      %1254 = vmatpush1.msra.mxu0 0.0
      %1255 = vmatprep.subr.mxu0 0.0
      %1256 = vmatpush1.msra.mxu0 0.0
      %1257 = vmatprep.subr.mxu0 0.0
      %1258 = vmatpush1.msra.mxu0 0.0
      %1259 = vmatprep.subr.mxu0 0.0
      %1260 = vmatpush1.msra.mxu0 0.0
      %1261 = vmatprep.subr.mxu0 0.0
      %1262 = vmatpush1.msra.mxu0 0.0
      %1263 = vmatprep.subr.mxu0 0.0
      %1264 = vmatpush1.msra.mxu0 0.0
      %1265 = vmatprep.subr.mxu0 0.0
      %1266 = vmatpush1.msra.mxu0 0.0
      %1267 = vmatprep.subr.mxu0 0.0
      %1268 = vmatpush1.msra.mxu0 0.0
      %1269 = vmatprep.subr.mxu0 0.0
      %1270 = vmatpush1.msra.mxu0 0.0
      %1271 = vmatprep.mubr.f32.mxu0 0.0
      %1272 = vmatmul.mubr.f32.gmra.mrb[0].mxu0 %v493
      %v1273 = vpop.f32.mrb[0].mxu0
      %v1274 = vadd.f32 %v888, %v1273
      %v1275 = vpop.f32.mrb[0].mxu0
      %1276 = vmatprep.mubr.f32.mxu0 0.0
      %1277 = vmatmul.mubr.f32.gmra.mrb[0].mxu0 %v494
      %v1278 = vpop.f32.mrb[0].mxu0
      %v1279 = vadd.f32 %v893, %v1278
      %v1280 = vpop.f32.mrb[0].mxu0
      %1281 = vmatprep.mubr.f32.mxu0 0.0
      %1282 = vmatmul.mubr.f32.gmra.mrb[0].mxu0 %v495
      %v1283 = vpop.f32.mrb[0].mxu0
      %v1284 = vadd.f32 %v898, %v1283
      %v1285 = vpop.f32.mrb[0].mxu0
      %1286 = vmatprep.mubr.f32.mxu0 0.0
      %1287 = vmatmul.mubr.f32.gmra.mrb[0].mxu0 %v496
      %v1288 = vpop.f32.mrb[0].mxu0
      %v1289 = vadd.f32 %v903, %v1288
      %v1290 = vpop.f32.mrb[0].mxu0
      %1291 = vmatprep.mubr.f32.mxu0 0.0
      %1292 = vmatmul.mubr.f32.gmra.mrb[0].mxu0 %v497
      %v1293 = vpop.f32.mrb[0].mxu0
      %v1294 = vadd.f32 %v908, %v1293
      %v1295 = vpop.f32.mrb[0].mxu0
      %1296 = vmatprep.mubr.f32.mxu0 0.0
      %1297 = vmatmul.mubr.f32.gmra.mrb[0].mxu0 %v498
      %v1298 = vpop.f32.mrb[0].mxu0
      %v1299 = vadd.f32 %v913, %v1298
      %v1300 = vpop.f32.mrb[0].mxu0
      %1301 = vmatprep.mubr.f32.mxu0 0.0
      %1302 = vmatmul.mubr.f32.gmra.mrb[0].mxu0 %v499
      %v1303 = vpop.f32.mrb[0].mxu0
      %v1304 = vadd.f32 %v918, %v1303
      %v1305 = vpop.f32.mrb[0].mxu0
      %1306 = vmatprep.mubr.f32.mxu0 0.0
      %1307 = vmatmul.mubr.f32.gmra.mrb[0].mxu0 %v500
      %v1308 = vpop.f32.mrb[0].mxu0
      %v1309 = vadd.f32 %v923, %v1308
      %v1310 = vpop.f32.mrb[0].mxu0
      %1311 = vmatprep.mubr.f32.mxu0 0.0
      %1312 = vmatmul.mubr.f32.gmra.mrb[0].mxu0 %v501
      %v1313 = vpop.f32.mrb[0].mxu0
      %v1314 = vadd.f32 %v928, %v1313
      %v1315 = vpop.f32.mrb[0].mxu0
      %1316 = vmatprep.mubr.f32.mxu0 0.0
      %1317 = vmatmul.mubr.f32.gmra.mrb[0].mxu0 %v502
      %v1318 = vpop.f32.mrb[0].mxu0
      %v1319 = vadd.f32 %v933, %v1318
      %v1320 = vpop.f32.mrb[0].mxu0
      %1321 = vmatprep.mubr.f32.mxu0 0.0
      %1322 = vmatmul.mubr.f32.gmra.mrb[0].mxu0 %v503
      %v1323 = vpop.f32.mrb[0].mxu0
      %v1324 = vadd.f32 %v938, %v1323
      %v1325 = vpop.f32.mrb[0].mxu0
      %1326 = vmatprep.mubr.f32.mxu0 0.0
      %1327 = vmatmul.mubr.f32.gmra.mrb[0].mxu0 %v504
      %v1328 = vpop.f32.mrb[0].mxu0
      %v1329 = vadd.f32 %v943, %v1328
      %v1330 = vpop.f32.mrb[0].mxu0
      %1331 = vmatprep.mubr.f32.mxu0 0.0
      %1332 = vmatmul.mubr.f32.gmra.mrb[0].mxu0 %v505
      %v1333 = vpop.f32.mrb[0].mxu0
      %v1334 = vadd.f32 %v948, %v1333
      %v1335 = vpop.f32.mrb[0].mxu0
      %1336 = vmatprep.mubr.f32.mxu0 0.0
      %1337 = vmatmul.mubr.f32.gmra.mrb[0].mxu0 %v506
      %v1338 = vpop.f32.mrb[0].mxu0
      %v1339 = vadd.f32 %v953, %v1338
      %v1340 = vpop.f32.mrb[0].mxu0
      %1341 = vmatprep.mubr.f32.mxu0 0.0
      %1342 = vmatmul.mubr.f32.gmra.mrb[0].mxu0 %v507
      %v1343 = vpop.f32.mrb[0].mxu0
      %v1344 = vadd.f32 %v958, %v1343
      %v1345 = vpop.f32.mrb[0].mxu0
      %1346 = vmatprep.mubr.f32.mxu0 0.0
      %1347 = vmatmul.mubr.f32.gmra.mrb[0].mxu0 %v508
      %v1348 = vpop.f32.mrb[0].mxu0
      %v1349 = vadd.f32 %v963, %v1348
      %v1350 = vpop.f32.mrb[0].mxu0
      %1351 = vmatprep.mubr.f32.mxu0 0.0
      %1352 = vmatmul.mubr.f32.gmra.mrb[0].mxu0 %v509
      %v1353 = vpop.f32.mrb[0].mxu0
      %v1354 = vadd.f32 %v968, %v1353
      %v1355 = vpop.f32.mrb[0].mxu0
      %1356 = vmatprep.mubr.f32.mxu0 0.0
      %1357 = vmatmul.mubr.f32.gmra.mrb[0].mxu0 %v510
      %v1358 = vpop.f32.mrb[0].mxu0
      %v1359 = vadd.f32 %v973, %v1358
      %v1360 = vpop.f32.mrb[0].mxu0
      %1361 = vmatprep.mubr.f32.mxu0 0.0
      %1362 = vmatmul.mubr.f32.gmra.mrb[0].mxu0 %v511
      %v1363 = vpop.f32.mrb[0].mxu0
      %v1364 = vadd.f32 %v978, %v1363
      %v1365 = vpop.f32.mrb[0].mxu0
      %1366 = vmatprep.mubr.f32.mxu0 0.0
      %1367 = vmatmul.mubr.f32.gmra.mrb[0].mxu0 %v512
      %v1368 = vpop.f32.mrb[0].mxu0
      %v1369 = vadd.f32 %v983, %v1368
      %v1370 = vpop.f32.mrb[0].mxu0
      %1371 = vmatprep.mubr.f32.mxu0 0.0
      %1372 = vmatmul.mubr.f32.gmra.mrb[0].mxu0 %v513
      %v1373 = vpop.f32.mrb[0].mxu0
      %v1374 = vadd.f32 %v988, %v1373
      %v1375 = vpop.f32.mrb[0].mxu0
      %1376 = vmatprep.mubr.f32.mxu0 0.0
      %1377 = vmatmul.mubr.f32.gmra.mrb[0].mxu0 %v514
      %v1378 = vpop.f32.mrb[0].mxu0
      %v1379 = vadd.f32 %v993, %v1378
      %v1380 = vpop.f32.mrb[0].mxu0
      %1381 = vmatprep.mubr.f32.mxu0 0.0
      %1382 = vmatmul.mubr.f32.gmra.mrb[0].mxu0 %v515
      %v1383 = vpop.f32.mrb[0].mxu0
      %v1384 = vadd.f32 %v998, %v1383
      %v1385 = vpop.f32.mrb[0].mxu0
      %1386 = vmatprep.mubr.f32.mxu0 0.0
      %1387 = vmatmul.mubr.f32.gmra.mrb[0].mxu0 %v516
      %v1388 = vpop.f32.mrb[0].mxu0
      %v1389 = vadd.f32 %v1003, %v1388
      %v1390 = vpop.f32.mrb[0].mxu0
      %1391 = vdwg.mxu0
      %s1392 = scalar_lea.vmem %s3, 768
      %v1393 = vld [vmem:[%s1392] sm:$0xff]
      %v1394 = vld [vmem:[%s1392 + $0x8] sm:$0xff]
      %v1395 = vld [vmem:[%s1392 + $0x10] sm:$0xff]
      %v1396 = vld [vmem:[%s1392 + $0x18] sm:$0xff]
      %v1397 = vld [vmem:[%s1392 + $0x20] sm:$0xff]
      %v1398 = vld [vmem:[%s1392 + $0x28] sm:$0xff]
      %v1399 = vld [vmem:[%s1392 + $0x30] sm:$0xff]
      %v1400 = vld [vmem:[%s1392 + $0x38] sm:$0xff]
      %v1401 = vld [vmem:[%s1392 + $0x40] sm:$0xff]
      %v1402 = vld [vmem:[%s1392 + $0x48] sm:$0xff]
      %v1403 = vld [vmem:[%s1392 + $0x50] sm:$0xff]
      %v1404 = vld [vmem:[%s1392 + $0x58] sm:$0xff]
      %v1405 = vld [vmem:[%s1392 + $0x60] sm:$0xff]
      %v1406 = vld [vmem:[%s1392 + $0x68] sm:$0xff]
      %v1407 = vld [vmem:[%s1392 + $0x70] sm:$0xff]
      %v1408 = vld [vmem:[%s1392 + $0x78] sm:$0xff]
      %v1409 = vld [vmem:[%s1392 + $0x80] sm:$0xff]
      %v1410 = vld [vmem:[%s1392 + $0x88] sm:$0xff]
      %v1411 = vld [vmem:[%s1392 + $0x90] sm:$0xff]
      %v1412 = vld [vmem:[%s1392 + $0x98] sm:$0xff]
      %v1413 = vld [vmem:[%s1392 + $0xa0] sm:$0xff]
      %v1414 = vld [vmem:[%s1392 + $0xa8] sm:$0xff]
      %v1415 = vld [vmem:[%s1392 + $0xb0] sm:$0xff]
      %v1416 = vld [vmem:[%s1392 + $0xb8] sm:$0xff]
      %v1417 = vld [vmem:[%s1392 + $0xc0] sm:$0xff]
      %v1418 = vld [vmem:[%s1392 + $0xc8] sm:$0xff]
      %v1419 = vld [vmem:[%s1392 + $0xd0] sm:$0xff]
      %v1420 = vld [vmem:[%s1392 + $0xd8] sm:$0xff]
      %v1421 = vld [vmem:[%s1392 + $0xe0] sm:$0xff]
      %v1422 = vld [vmem:[%s1392 + $0xe8] sm:$0xff]
      %v1423 = vld [vmem:[%s1392 + $0xf0] sm:$0xff]
      %v1424 = vld [vmem:[%s1392 + $0xf8] sm:$0xff]
      %v1425 = vld [vmem:[%s1392 + $0x100] sm:$0xff]
      %v1426 = vld [vmem:[%s1392 + $0x108] sm:$0xff]
      %v1427 = vld [vmem:[%s1392 + $0x110] sm:$0xff]
      %v1428 = vld [vmem:[%s1392 + $0x118] sm:$0xff]
      %v1429 = vld [vmem:[%s1392 + $0x120] sm:$0xff]
      %v1430 = vld [vmem:[%s1392 + $0x128] sm:$0xff]
      %v1431 = vld [vmem:[%s1392 + $0x130] sm:$0xff]
      %v1432 = vld [vmem:[%s1392 + $0x138] sm:$0xff]
      %v1433 = vld [vmem:[%s1392 + $0x140] sm:$0xff]
      %v1434 = vld [vmem:[%s1392 + $0x148] sm:$0xff]
      %v1435 = vld [vmem:[%s1392 + $0x150] sm:$0xff]
      %v1436 = vld [vmem:[%s1392 + $0x158] sm:$0xff]
      %v1437 = vld [vmem:[%s1392 + $0x160] sm:$0xff]
      %v1438 = vld [vmem:[%s1392 + $0x168] sm:$0xff]
      %v1439 = vld [vmem:[%s1392 + $0x170] sm:$0xff]
      %v1440 = vld [vmem:[%s1392 + $0x178] sm:$0xff]
      %1441 = vmatprep.subr.mxu0 %v1394
      %1442 = vmatpush1.msra.mxu0 %v1393
      %1443 = vmatprep.subr.mxu0 %v1397
      %1444 = vmatpush1.msra.mxu0 %v1396
      %1445 = vmatprep.subr.mxu0 %v1400
      %1446 = vmatpush1.msra.mxu0 %v1399
      %1447 = vmatprep.subr.mxu0 %v1403
      %1448 = vmatpush1.msra.mxu0 %v1402
      %1449 = vmatprep.subr.mxu0 %v1406
      %1450 = vmatpush1.msra.mxu0 %v1405
      %1451 = vmatprep.subr.mxu0 %v1409
      %1452 = vmatpush1.msra.mxu0 %v1408
      %1453 = vmatprep.subr.mxu0 %v1412
      %1454 = vmatpush1.msra.mxu0 %v1411
      %1455 = vmatprep.subr.mxu0 %v1415
      %1456 = vmatpush1.msra.mxu0 %v1414
      %1457 = vmatprep.subr.mxu0 %v1418
      %1458 = vmatpush1.msra.mxu0 %v1417
      %1459 = vmatprep.subr.mxu0 %v1421
      %1460 = vmatpush1.msra.mxu0 %v1420
      %1461 = vmatprep.subr.mxu0 %v1424
      %1462 = vmatpush1.msra.mxu0 %v1423
      %1463 = vmatprep.subr.mxu0 %v1427
      %1464 = vmatpush1.msra.mxu0 %v1426
      %1465 = vmatprep.subr.mxu0 %v1430
      %1466 = vmatpush1.msra.mxu0 %v1429
      %1467 = vmatprep.subr.mxu0 %v1433
      %1468 = vmatpush1.msra.mxu0 %v1432
      %1469 = vmatprep.subr.mxu0 %v1436
      %1470 = vmatpush1.msra.mxu0 %v1435
      %1471 = vmatprep.subr.mxu0 %v1439
      %1472 = vmatpush1.msra.mxu0 %v1438
      %1473 = vmatprep.subr.mxu0 0.0
      %1474 = vmatpush1.msra.mxu0 0.0
      %1475 = vmatprep.subr.mxu0 0.0
      %1476 = vmatpush1.msra.mxu0 0.0
      %1477 = vmatprep.subr.mxu0 0.0
      %1478 = vmatpush1.msra.mxu0 0.0
      %1479 = vmatprep.subr.mxu0 0.0
      %1480 = vmatpush1.msra.mxu0 0.0
      %1481 = vmatprep.subr.mxu0 0.0
      %1482 = vmatpush1.msra.mxu0 0.0
      %1483 = vmatprep.subr.mxu0 0.0
      %1484 = vmatpush1.msra.mxu0 0.0
      %1485 = vmatprep.subr.mxu0 0.0
      %1486 = vmatpush1.msra.mxu0 0.0
      %1487 = vmatprep.subr.mxu0 0.0
      %1488 = vmatpush1.msra.mxu0 0.0
      %1489 = vmatprep.subr.mxu0 0.0
      %1490 = vmatpush1.msra.mxu0 0.0
      %1491 = vmatprep.subr.mxu0 0.0
      %1492 = vmatpush1.msra.mxu0 0.0
      %1493 = vmatprep.subr.mxu0 0.0
      %1494 = vmatpush1.msra.mxu0 0.0
      %1495 = vmatprep.subr.mxu0 0.0
      %1496 = vmatpush1.msra.mxu0 0.0
      %1497 = vmatprep.subr.mxu0 0.0
      %1498 = vmatpush1.msra.mxu0 0.0
      %1499 = vmatprep.subr.mxu0 0.0
      %1500 = vmatpush1.msra.mxu0 0.0
      %1501 = vmatprep.subr.mxu0 0.0
      %1502 = vmatpush1.msra.mxu0 0.0
      %1503 = vmatprep.subr.mxu0 0.0
      %1504 = vmatpush1.msra.mxu0 0.0
      %1505 = vmatprep.mubr.f32.mxu0 0.0
      %1506 = vmatmul.mubr.f32.gmra.mrb[0].mxu0 %v499
      %v1507 = vpop.f32.mrb[0].mxu0
      %v1508 = vadd.f32 0.0, %v1507
      %v1509 = vpop.f32.mrb[0].mxu0
      %v1510 = vadd.f32 0.0, %v1509
      %1511 = vmatprep.mubr.f32.mxu0 0.0
      %1512 = vmatmul.mubr.f32.gmra.mrb[0].mxu0 %v500
      %v1513 = vpop.f32.mrb[0].mxu0
      %v1514 = vadd.f32 0.0, %v1513
      %v1515 = vpop.f32.mrb[0].mxu0
      %v1516 = vadd.f32 0.0, %v1515
      %1517 = vmatprep.mubr.f32.mxu0 0.0
      %1518 = vmatmul.mubr.f32.gmra.mrb[0].mxu0 %v501
      %v1519 = vpop.f32.mrb[0].mxu0
      %v1520 = vpop.f32.mrb[0].mxu0
      %v1521 = vadd.f32 0.0, %v1520
      %1522 = vmatprep.mubr.f32.mxu0 0.0
      %1523 = vmatmul.mubr.f32.gmra.mrb[0].mxu0 %v502
      %v1524 = vpop.f32.mrb[0].mxu0
      %v1525 = vadd.f32 0.0, %v1524
      %v1526 = vpop.f32.mrb[0].mxu0
      %v1527 = vadd.f32 0.0, %v1526
      %1528 = vmatprep.mubr.f32.mxu0 0.0
      %1529 = vmatmul.mubr.f32.gmra.mrb[0].mxu0 %v503
      %v1530 = vpop.f32.mrb[0].mxu0
      %v1531 = vadd.f32 0.0, %v1530
      %v1532 = vpop.f32.mrb[0].mxu0
      %v1533 = vadd.f32 0.0, %v1532
      %1534 = vmatprep.mubr.f32.mxu0 0.0
      %1535 = vmatmul.mubr.f32.gmra.mrb[0].mxu0 %v504
      %v1536 = vpop.f32.mrb[0].mxu0
      %v1537 = vpop.f32.mrb[0].mxu0
      %v1538 = vadd.f32 0.0, %v1537
      %1539 = vmatprep.mubr.f32.mxu0 0.0
      %1540 = vmatmul.mubr.f32.gmra.mrb[0].mxu0 %v505
      %v1541 = vpop.f32.mrb[0].mxu0
      %v1542 = vadd.f32 0.0, %v1541
      %v1543 = vpop.f32.mrb[0].mxu0
      %v1544 = vadd.f32 0.0, %v1543
      %1545 = vmatprep.mubr.f32.mxu0 0.0
      %1546 = vmatmul.mubr.f32.gmra.mrb[0].mxu0 %v506
      %v1547 = vpop.f32.mrb[0].mxu0
      %v1548 = vadd.f32 0.0, %v1547
      %v1549 = vpop.f32.mrb[0].mxu0
      %v1550 = vadd.f32 0.0, %v1549
      %1551 = vmatprep.mubr.f32.mxu0 0.0
      %1552 = vmatmul.mubr.f32.gmra.mrb[0].mxu0 %v507
      %v1553 = vpop.f32.mrb[0].mxu0
      %v1554 = vpop.f32.mrb[0].mxu0
      %v1555 = vadd.f32 0.0, %v1554
      %1556 = vmatprep.mubr.f32.mxu0 0.0
      %1557 = vmatmul.mubr.f32.gmra.mrb[0].mxu0 %v508
      %v1558 = vpop.f32.mrb[0].mxu0
      %v1559 = vadd.f32 0.0, %v1558
      %v1560 = vpop.f32.mrb[0].mxu0
      %v1561 = vadd.f32 0.0, %v1560
      %1562 = vmatprep.mubr.f32.mxu0 0.0
      %1563 = vmatmul.mubr.f32.gmra.mrb[0].mxu0 %v509
      %v1564 = vpop.f32.mrb[0].mxu0
      %v1565 = vadd.f32 0.0, %v1564
      %v1566 = vpop.f32.mrb[0].mxu0
      %v1567 = vadd.f32 0.0, %v1566
      %1568 = vmatprep.mubr.f32.mxu0 0.0
      %1569 = vmatmul.mubr.f32.gmra.mrb[0].mxu0 %v510
      %v1570 = vpop.f32.mrb[0].mxu0
      %v1571 = vpop.f32.mrb[0].mxu0
      %v1572 = vadd.f32 0.0, %v1571
      %1573 = vmatprep.mubr.f32.mxu0 0.0
      %1574 = vmatmul.mubr.f32.gmra.mrb[0].mxu0 %v511
      %v1575 = vpop.f32.mrb[0].mxu0
      %v1576 = vadd.f32 0.0, %v1575
      %v1577 = vpop.f32.mrb[0].mxu0
      %v1578 = vadd.f32 0.0, %v1577
      %1579 = vmatprep.mubr.f32.mxu0 0.0
      %1580 = vmatmul.mubr.f32.gmra.mrb[0].mxu0 %v512
      %v1581 = vpop.f32.mrb[0].mxu0
      %v1582 = vadd.f32 0.0, %v1581
      %v1583 = vpop.f32.mrb[0].mxu0
      %v1584 = vadd.f32 0.0, %v1583
      %1585 = vmatprep.mubr.f32.mxu0 0.0
      %1586 = vmatmul.mubr.f32.gmra.mrb[0].mxu0 %v513
      %v1587 = vpop.f32.mrb[0].mxu0
      %v1588 = vpop.f32.mrb[0].mxu0
      %v1589 = vadd.f32 0.0, %v1588
      %1590 = vmatprep.mubr.f32.mxu0 0.0
      %1591 = vmatmul.mubr.f32.gmra.mrb[0].mxu0 %v514
      %v1592 = vpop.f32.mrb[0].mxu0
      %v1593 = vadd.f32 0.0, %v1592
      %v1594 = vpop.f32.mrb[0].mxu0
      %v1595 = vadd.f32 0.0, %v1594
      %1596 = vmatprep.mubr.f32.mxu0 0.0
      %1597 = vmatmul.mubr.f32.gmra.mrb[0].mxu0 %v515
      %v1598 = vpop.f32.mrb[0].mxu0
      %v1599 = vadd.f32 0.0, %v1598
      %v1600 = vpop.f32.mrb[0].mxu0
      %v1601 = vadd.f32 0.0, %v1600
      %1602 = vmatprep.mubr.f32.mxu0 0.0
      %1603 = vmatmul.mubr.f32.gmra.mrb[0].mxu0 %v516
      %v1604 = vpop.f32.mrb[0].mxu0
      %v1605 = vpop.f32.mrb[0].mxu0
      %v1606 = vadd.f32 0.0, %v1605
      %1607 = vmatprep.mubr.f32.mxu0 0.0
      %1608 = vmatmul.mubr.f32.gmra.mrb[0].mxu0 %v517
      %v1609 = vpop.f32.mrb[0].mxu0
      %v1610 = vadd.f32 0.0, %v1609
      %v1611 = vpop.f32.mrb[0].mxu0
      %v1612 = vadd.f32 0.0, %v1611
      %1613 = vmatprep.mubr.f32.mxu0 0.0
      %1614 = vmatmul.mubr.f32.gmra.mrb[0].mxu0 %v518
      %v1615 = vpop.f32.mrb[0].mxu0
      %v1616 = vadd.f32 0.0, %v1615
      %v1617 = vpop.f32.mrb[0].mxu0
      %v1618 = vadd.f32 0.0, %v1617
      %1619 = vmatprep.mubr.f32.mxu0 0.0
      %1620 = vmatmul.mubr.f32.gmra.mrb[0].mxu0 %v519
      %v1621 = vpop.f32.mrb[0].mxu0
      %v1622 = vpop.f32.mrb[0].mxu0
      %v1623 = vadd.f32 0.0, %v1622
      %1624 = vmatprep.mubr.f32.mxu0 0.0
      %1625 = vmatmul.mubr.f32.gmra.mrb[0].mxu0 %v520
      %v1626 = vpop.f32.mrb[0].mxu0
      %v1627 = vadd.f32 0.0, %v1626
      %v1628 = vpop.f32.mrb[0].mxu0
      %v1629 = vadd.f32 0.0, %v1628
      %1630 = vmatprep.mubr.f32.mxu0 0.0
      %1631 = vmatmul.mubr.f32.gmra.mrb[0].mxu0 %v521
      %v1632 = vpop.f32.mrb[0].mxu0
      %v1633 = vadd.f32 0.0, %v1632
      %v1634 = vpop.f32.mrb[0].mxu0
      %v1635 = vadd.f32 0.0, %v1634
      %1636 = vmatprep.mubr.f32.mxu0 0.0
      %1637 = vmatmul.mubr.f32.gmra.mrb[0].mxu0 %v522
      %v1638 = vpop.f32.mrb[0].mxu0
      %v1639 = vpop.f32.mrb[0].mxu0
      %v1640 = vadd.f32 0.0, %v1639
      %1641 = vdwg.mxu0
      %1642 = vmatprep.subr.mxu0 0.0
      %1643 = vmatpush1.msra.mxu0 %v1395
      %1644 = vmatprep.subr.mxu0 0.0
      %1645 = vmatpush1.msra.mxu0 %v1398
      %1646 = vmatprep.subr.mxu0 0.0
      %1647 = vmatpush1.msra.mxu0 %v1401
      %1648 = vmatprep.subr.mxu0 0.0
      %1649 = vmatpush1.msra.mxu0 %v1404
      %1650 = vmatprep.subr.mxu0 0.0
      %1651 = vmatpush1.msra.mxu0 %v1407
      %1652 = vmatprep.subr.mxu0 0.0
      %1653 = vmatpush1.msra.mxu0 %v1410
      %1654 = vmatprep.subr.mxu0 0.0
      %1655 = vmatpush1.msra.mxu0 %v1413
      %1656 = vmatprep.subr.mxu0 0.0
      %1657 = vmatpush1.msra.mxu0 %v1416
      %1658 = vmatprep.subr.mxu0 0.0
      %1659 = vmatpush1.msra.mxu0 %v1419
      %1660 = vmatprep.subr.mxu0 0.0
      %1661 = vmatpush1.msra.mxu0 %v1422
      %1662 = vmatprep.subr.mxu0 0.0
      %1663 = vmatpush1.msra.mxu0 %v1425
      %1664 = vmatprep.subr.mxu0 0.0
      %1665 = vmatpush1.msra.mxu0 %v1428
      %1666 = vmatprep.subr.mxu0 0.0
      %1667 = vmatpush1.msra.mxu0 %v1431
      %1668 = vmatprep.subr.mxu0 0.0
      %1669 = vmatpush1.msra.mxu0 %v1434
      %1670 = vmatprep.subr.mxu0 0.0
      %1671 = vmatpush1.msra.mxu0 %v1437
      %1672 = vmatprep.subr.mxu0 0.0
      %1673 = vmatpush1.msra.mxu0 %v1440
      %1674 = vmatprep.subr.mxu0 0.0
      %1675 = vmatpush1.msra.mxu0 0.0
      %1676 = vmatprep.subr.mxu0 0.0
      %1677 = vmatpush1.msra.mxu0 0.0
      %1678 = vmatprep.subr.mxu0 0.0
      %1679 = vmatpush1.msra.mxu0 0.0
      %1680 = vmatprep.subr.mxu0 0.0
      %1681 = vmatpush1.msra.mxu0 0.0
      %1682 = vmatprep.subr.mxu0 0.0
      %1683 = vmatpush1.msra.mxu0 0.0
      %1684 = vmatprep.subr.mxu0 0.0
      %1685 = vmatpush1.msra.mxu0 0.0
      %1686 = vmatprep.subr.mxu0 0.0
      %1687 = vmatpush1.msra.mxu0 0.0
      %1688 = vmatprep.subr.mxu0 0.0
      %1689 = vmatpush1.msra.mxu0 0.0
      %1690 = vmatprep.subr.mxu0 0.0
      %1691 = vmatpush1.msra.mxu0 0.0
      %1692 = vmatprep.subr.mxu0 0.0
      %1693 = vmatpush1.msra.mxu0 0.0
      %1694 = vmatprep.subr.mxu0 0.0
      %1695 = vmatpush1.msra.mxu0 0.0
      %1696 = vmatprep.subr.mxu0 0.0
      %1697 = vmatpush1.msra.mxu0 0.0
      %1698 = vmatprep.subr.mxu0 0.0
      %1699 = vmatpush1.msra.mxu0 0.0
      %1700 = vmatprep.subr.mxu0 0.0
      %1701 = vmatpush1.msra.mxu0 0.0
      %1702 = vmatprep.subr.mxu0 0.0
      %1703 = vmatpush1.msra.mxu0 0.0
      %1704 = vmatprep.subr.mxu0 0.0
      %1705 = vmatpush1.msra.mxu0 0.0
      %1706 = vmatprep.mubr.f32.mxu0 0.0
      %1707 = vmatmul.mubr.f32.gmra.mrb[0].mxu0 %v499
      %v1708 = vpop.f32.mrb[0].mxu0
      %v1709 = vadd.f32 0.0, %v1708
      %v1710 = vpop.f32.mrb[0].mxu0
      %1711 = vmatprep.mubr.f32.mxu0 0.0
      %1712 = vmatmul.mubr.f32.gmra.mrb[0].mxu0 %v500
      %v1713 = vpop.f32.mrb[0].mxu0
      %v1714 = vadd.f32 0.0, %v1713
      %v1715 = vpop.f32.mrb[0].mxu0
      %1716 = vmatprep.mubr.f32.mxu0 0.0
      %1717 = vmatmul.mubr.f32.gmra.mrb[0].mxu0 %v501
      %v1718 = vpop.f32.mrb[0].mxu0
      %v1719 = vadd.f32 0.0, %v1718
      %v1720 = vpop.f32.mrb[0].mxu0
      %1721 = vmatprep.mubr.f32.mxu0 0.0
      %1722 = vmatmul.mubr.f32.gmra.mrb[0].mxu0 %v502
      %v1723 = vpop.f32.mrb[0].mxu0
      %v1724 = vadd.f32 0.0, %v1723
      %v1725 = vpop.f32.mrb[0].mxu0
      %1726 = vmatprep.mubr.f32.mxu0 0.0
      %1727 = vmatmul.mubr.f32.gmra.mrb[0].mxu0 %v503
      %v1728 = vpop.f32.mrb[0].mxu0
      %v1729 = vadd.f32 0.0, %v1728
      %v1730 = vpop.f32.mrb[0].mxu0
      %1731 = vmatprep.mubr.f32.mxu0 0.0
      %1732 = vmatmul.mubr.f32.gmra.mrb[0].mxu0 %v504
      %v1733 = vpop.f32.mrb[0].mxu0
      %v1734 = vadd.f32 0.0, %v1733
      %v1735 = vpop.f32.mrb[0].mxu0
      %1736 = vmatprep.mubr.f32.mxu0 0.0
      %1737 = vmatmul.mubr.f32.gmra.mrb[0].mxu0 %v505
      %v1738 = vpop.f32.mrb[0].mxu0
      %v1739 = vadd.f32 0.0, %v1738
      %v1740 = vpop.f32.mrb[0].mxu0
      %1741 = vmatprep.mubr.f32.mxu0 0.0
      %1742 = vmatmul.mubr.f32.gmra.mrb[0].mxu0 %v506
      %v1743 = vpop.f32.mrb[0].mxu0
      %v1744 = vadd.f32 0.0, %v1743
      %v1745 = vpop.f32.mrb[0].mxu0
      %1746 = vmatprep.mubr.f32.mxu0 0.0
      %1747 = vmatmul.mubr.f32.gmra.mrb[0].mxu0 %v507
      %v1748 = vpop.f32.mrb[0].mxu0
      %v1749 = vadd.f32 0.0, %v1748
      %v1750 = vpop.f32.mrb[0].mxu0
      %1751 = vmatprep.mubr.f32.mxu0 0.0
      %1752 = vmatmul.mubr.f32.gmra.mrb[0].mxu0 %v508
      %v1753 = vpop.f32.mrb[0].mxu0
      %v1754 = vadd.f32 0.0, %v1753
      %v1755 = vpop.f32.mrb[0].mxu0
      %1756 = vmatprep.mubr.f32.mxu0 0.0
      %1757 = vmatmul.mubr.f32.gmra.mrb[0].mxu0 %v509
      %v1758 = vpop.f32.mrb[0].mxu0
      %v1759 = vadd.f32 0.0, %v1758
      %v1760 = vpop.f32.mrb[0].mxu0
      %1761 = vmatprep.mubr.f32.mxu0 0.0
      %1762 = vmatmul.mubr.f32.gmra.mrb[0].mxu0 %v510
      %v1763 = vpop.f32.mrb[0].mxu0
      %v1764 = vadd.f32 0.0, %v1763
      %v1765 = vpop.f32.mrb[0].mxu0
      %1766 = vmatprep.mubr.f32.mxu0 0.0
      %1767 = vmatmul.mubr.f32.gmra.mrb[0].mxu0 %v511
      %v1768 = vpop.f32.mrb[0].mxu0
      %v1769 = vadd.f32 0.0, %v1768
      %v1770 = vpop.f32.mrb[0].mxu0
      %1771 = vmatprep.mubr.f32.mxu0 0.0
      %1772 = vmatmul.mubr.f32.gmra.mrb[0].mxu0 %v512
      %v1773 = vpop.f32.mrb[0].mxu0
      %v1774 = vadd.f32 0.0, %v1773
      %v1775 = vpop.f32.mrb[0].mxu0
      %1776 = vmatprep.mubr.f32.mxu0 0.0
      %1777 = vmatmul.mubr.f32.gmra.mrb[0].mxu0 %v513
      %v1778 = vpop.f32.mrb[0].mxu0
      %v1779 = vadd.f32 0.0, %v1778
      %v1780 = vpop.f32.mrb[0].mxu0
      %1781 = vmatprep.mubr.f32.mxu0 0.0
      %1782 = vmatmul.mubr.f32.gmra.mrb[0].mxu0 %v514
      %v1783 = vpop.f32.mrb[0].mxu0
      %v1784 = vadd.f32 0.0, %v1783
      %v1785 = vpop.f32.mrb[0].mxu0
      %1786 = vmatprep.mubr.f32.mxu0 0.0
      %1787 = vmatmul.mubr.f32.gmra.mrb[0].mxu0 %v515
      %v1788 = vpop.f32.mrb[0].mxu0
      %v1789 = vadd.f32 0.0, %v1788
      %v1790 = vpop.f32.mrb[0].mxu0
      %1791 = vmatprep.mubr.f32.mxu0 0.0
      %1792 = vmatmul.mubr.f32.gmra.mrb[0].mxu0 %v516
      %v1793 = vpop.f32.mrb[0].mxu0
      %v1794 = vadd.f32 0.0, %v1793
      %v1795 = vpop.f32.mrb[0].mxu0
      %1796 = vmatprep.mubr.f32.mxu0 0.0
      %1797 = vmatmul.mubr.f32.gmra.mrb[0].mxu0 %v517
      %v1798 = vpop.f32.mrb[0].mxu0
      %v1799 = vadd.f32 0.0, %v1798
      %v1800 = vpop.f32.mrb[0].mxu0
      %1801 = vmatprep.mubr.f32.mxu0 0.0
      %1802 = vmatmul.mubr.f32.gmra.mrb[0].mxu0 %v518
      %v1803 = vpop.f32.mrb[0].mxu0
      %v1804 = vadd.f32 0.0, %v1803
      %v1805 = vpop.f32.mrb[0].mxu0
      %1806 = vmatprep.mubr.f32.mxu0 0.0
      %1807 = vmatmul.mubr.f32.gmra.mrb[0].mxu0 %v519
      %v1808 = vpop.f32.mrb[0].mxu0
      %v1809 = vadd.f32 0.0, %v1808
      %v1810 = vpop.f32.mrb[0].mxu0
      %1811 = vmatprep.mubr.f32.mxu0 0.0
      %1812 = vmatmul.mubr.f32.gmra.mrb[0].mxu0 %v520
      %v1813 = vpop.f32.mrb[0].mxu0
      %v1814 = vadd.f32 0.0, %v1813
      %v1815 = vpop.f32.mrb[0].mxu0
      %1816 = vmatprep.mubr.f32.mxu0 0.0
      %1817 = vmatmul.mubr.f32.gmra.mrb[0].mxu0 %v521
      %v1818 = vpop.f32.mrb[0].mxu0
      %v1819 = vadd.f32 0.0, %v1818
      %v1820 = vpop.f32.mrb[0].mxu0
      %1821 = vmatprep.mubr.f32.mxu0 0.0
      %1822 = vmatmul.mubr.f32.gmra.mrb[0].mxu0 %v522
      %v1823 = vpop.f32.mrb[0].mxu0
      %v1824 = vadd.f32 0.0, %v1823
      %v1825 = vpop.f32.mrb[0].mxu0
      %1826 = vdwg.mxu0
      %v1827 = vadd.f32 %v1073, %v1508
      %v1828 = vadd.f32 %v1075, %v1510
      %v1829 = vadd.f32 %v1274, %v1709
      %v1830 = vadd.f32 %v1079, %v1514
      %v1831 = vadd.f32 %v1081, %v1516
      %v1832 = vadd.f32 %v1279, %v1714
      %v1833 = vadd.f32 %v1086, %v1521
      %v1834 = vadd.f32 %v1284, %v1719
      %v1835 = vadd.f32 %v1090, %v1525
      %v1836 = vadd.f32 %v1092, %v1527
      %v1837 = vadd.f32 %v1289, %v1724
      %v1838 = vadd.f32 %v1096, %v1531
      %v1839 = vadd.f32 %v1098, %v1533
      %v1840 = vadd.f32 %v1294, %v1729
      %v1841 = vadd.f32 %v1103, %v1538
      %v1842 = vadd.f32 %v1299, %v1734
      %v1843 = vadd.f32 %v1107, %v1542
      %v1844 = vadd.f32 %v1109, %v1544
      %v1845 = vadd.f32 %v1304, %v1739
      %v1846 = vadd.f32 %v1113, %v1548
      %v1847 = vadd.f32 %v1115, %v1550
      %v1848 = vadd.f32 %v1309, %v1744
      %v1849 = vadd.f32 %v1120, %v1555
      %v1850 = vadd.f32 %v1314, %v1749
      %v1851 = vadd.f32 %v1124, %v1559
      %v1852 = vadd.f32 %v1126, %v1561
      %v1853 = vadd.f32 %v1319, %v1754
      %v1854 = vadd.f32 %v1130, %v1565
      %v1855 = vadd.f32 %v1132, %v1567
      %v1856 = vadd.f32 %v1324, %v1759
      %v1857 = vadd.f32 %v1137, %v1572
      %v1858 = vadd.f32 %v1329, %v1764
      %v1859 = vadd.f32 %v1141, %v1576
      %v1860 = vadd.f32 %v1143, %v1578
      %v1861 = vadd.f32 %v1334, %v1769
      %v1862 = vadd.f32 %v1147, %v1582
      %v1863 = vadd.f32 %v1149, %v1584
      %v1864 = vadd.f32 %v1339, %v1774
      %v1865 = vadd.f32 %v1154, %v1589
      %v1866 = vadd.f32 %v1344, %v1779
      %v1867 = vadd.f32 %v1158, %v1593
      %v1868 = vadd.f32 %v1160, %v1595
      %v1869 = vadd.f32 %v1349, %v1784
      %v1870 = vadd.f32 %v1164, %v1599
      %v1871 = vadd.f32 %v1166, %v1601
      %v1872 = vadd.f32 %v1354, %v1789
      %v1873 = vadd.f32 %v1171, %v1606
      %v1874 = vadd.f32 %v1359, %v1794
      %v1875 = vadd.f32 %v1175, %v1610
      %v1876 = vadd.f32 %v1177, %v1612
      %v1877 = vadd.f32 %v1364, %v1799
      %v1878 = vadd.f32 %v1181, %v1616
      %v1879 = vadd.f32 %v1183, %v1618
      %v1880 = vadd.f32 %v1369, %v1804
      %v1881 = vadd.f32 %v1188, %v1623
      %v1882 = vadd.f32 %v1374, %v1809
      %v1883 = vadd.f32 %v1192, %v1627
      %v1884 = vadd.f32 %v1194, %v1629
      %v1885 = vadd.f32 %v1379, %v1814
      %v1886 = vadd.f32 %v1198, %v1633
      %v1887 = vadd.f32 %v1200, %v1635
      %v1888 = vadd.f32 %v1384, %v1819
      %v1889 = vadd.f32 %v1205, %v1640
      %v1890 = vadd.f32 %v1389, %v1824
      %vm1915 = vcmask 1046528
      %v1916 = vrot.slane %v1828, 1
      %v1917 = vrot.slane %v1831, 1
      %v1918 = vsel %vm1915, %v1916, %v1917
      %v1919 = vrot.slane %v1833, 1
      %v1920 = vsel %vm1915, %v1917, %v1919
      %v1921 = vrot.slane %v1836, 1
      %v1922 = vrot.slane %v1839, 1
      %v1923 = vsel %vm1915, %v1921, %v1922
      %v1924 = vrot.slane %v1841, 1
      %v1925 = vsel %vm1915, %v1922, %v1924
      %v1926 = vrot.slane %v1844, 1
      %v1927 = vrot.slane %v1847, 1
      %v1928 = vsel %vm1915, %v1926, %v1927
      %v1929 = vrot.slane %v1849, 1
      %v1930 = vsel %vm1915, %v1927, %v1929
      %v1931 = vrot.slane %v1852, 1
      %v1932 = vrot.slane %v1855, 1
      %v1933 = vsel %vm1915, %v1931, %v1932
      %v1934 = vrot.slane %v1857, 1
      %v1935 = vsel %vm1915, %v1932, %v1934
      %v1936 = vrot.slane %v1860, 1
      %v1937 = vrot.slane %v1863, 1
      %v1938 = vsel %vm1915, %v1936, %v1937
      %v1939 = vrot.slane %v1865, 1
      %v1940 = vsel %vm1915, %v1937, %v1939
      %v1941 = vrot.slane %v1868, 1
      %v1942 = vrot.slane %v1871, 1
      %v1943 = vsel %vm1915, %v1941, %v1942
      %v1944 = vrot.slane %v1873, 1
      %v1945 = vsel %vm1915, %v1942, %v1944
      %v1946 = vrot.slane %v1876, 1
      %v1947 = vrot.slane %v1879, 1
      %v1948 = vsel %vm1915, %v1946, %v1947
      %v1949 = vrot.slane %v1881, 1
      %v1950 = vsel %vm1915, %v1947, %v1949
      %v1951 = vrot.slane %v1884, 1
      %v1952 = vrot.slane %v1887, 1
      %v1953 = vsel %vm1915, %v1951, %v1952
      %v1954 = vrot.slane %v1889, 1
      %v1955 = vsel %vm1915, %v1952, %v1954
      %v1972 = vadd.f32 %v1827, %v1918
      %v1973 = vadd.f32 %v1830, %v1920
      %v1974 = vadd.f32 %v1835, %v1923
      %v1975 = vadd.f32 %v1838, %v1925
      %v1976 = vadd.f32 %v1843, %v1928
      %v1977 = vadd.f32 %v1846, %v1930
      %v1978 = vadd.f32 %v1851, %v1933
      %v1979 = vadd.f32 %v1854, %v1935
      %v1980 = vadd.f32 %v1859, %v1938
      %v1981 = vadd.f32 %v1862, %v1940
      %v1982 = vadd.f32 %v1867, %v1943
      %v1983 = vadd.f32 %v1870, %v1945
      %v1984 = vadd.f32 %v1875, %v1948
      %v1985 = vadd.f32 %v1878, %v1950
      %v1986 = vadd.f32 %v1883, %v1953
      %v1987 = vadd.f32 %v1886, %v1955
      %vm2012 = vcmask 1045504
      %v2013 = vrot.slane %v1829, 2
      %v2014 = vrot.slane %v1832, 2
      %v2015 = vsel %vm2012, %v2013, %v2014
      %v2016 = vrot.slane %v1834, 2
      %v2017 = vsel %vm2012, %v2014, %v2016
      %v2018 = vrot.slane %v1837, 2
      %v2019 = vrot.slane %v1840, 2
      %v2020 = vsel %vm2012, %v2018, %v2019
      %v2021 = vrot.slane %v1842, 2
      %v2022 = vsel %vm2012, %v2019, %v2021
      %v2023 = vrot.slane %v1845, 2
      %v2024 = vrot.slane %v1848, 2
      %v2025 = vsel %vm2012, %v2023, %v2024
      %v2026 = vrot.slane %v1850, 2
      %v2027 = vsel %vm2012, %v2024, %v2026
      %v2028 = vrot.slane %v1853, 2
      %v2029 = vrot.slane %v1856, 2
      %v2030 = vsel %vm2012, %v2028, %v2029
      %v2031 = vrot.slane %v1858, 2
      %v2032 = vsel %vm2012, %v2029, %v2031
      %v2033 = vrot.slane %v1861, 2
      %v2034 = vrot.slane %v1864, 2
      %v2035 = vsel %vm2012, %v2033, %v2034
      %v2036 = vrot.slane %v1866, 2
      %v2037 = vsel %vm2012, %v2034, %v2036
      %v2038 = vrot.slane %v1869, 2
      %v2039 = vrot.slane %v1872, 2
      %v2040 = vsel %vm2012, %v2038, %v2039
      %v2041 = vrot.slane %v1874, 2
      %v2042 = vsel %vm2012, %v2039, %v2041
      %v2043 = vrot.slane %v1877, 2
      %v2044 = vrot.slane %v1880, 2
      %v2045 = vsel %vm2012, %v2043, %v2044
      %v2046 = vrot.slane %v1882, 2
      %v2047 = vsel %vm2012, %v2044, %v2046
      %v2048 = vrot.slane %v1885, 2
      %v2049 = vrot.slane %v1888, 2
      %v2050 = vsel %vm2012, %v2048, %v2049
      %v2051 = vrot.slane %v1890, 2
      %v2052 = vsel %vm2012, %v2049, %v2051
      %v2069 = vadd.f32 %v1972, %v2015
      %v2070 = vadd.f32 %v1973, %v2017
      %v2071 = vadd.f32 %v1974, %v2020
      %v2072 = vadd.f32 %v1975, %v2022
      %v2073 = vadd.f32 %v1976, %v2025
      %v2074 = vadd.f32 %v1977, %v2027
      %v2075 = vadd.f32 %v1978, %v2030
      %v2076 = vadd.f32 %v1979, %v2032
      %v2077 = vadd.f32 %v1980, %v2035
      %v2078 = vadd.f32 %v1981, %v2037
      %v2079 = vadd.f32 %v1982, %v2040
      %v2080 = vadd.f32 %v1983, %v2042
      %v2081 = vadd.f32 %v1984, %v2045
      %v2082 = vadd.f32 %v1985, %v2047
      %v2083 = vadd.f32 %v1986, %v2050
      %v2084 = vadd.f32 %v1987, %v2052
      %2085 = vst [vmem:[%s231] sm:$0xff] %v2069
      %2086 = vst [vmem:[%s231 + $0x8] sm:$0xff] %v2070
      %2087 = vst [vmem:[%s231 + $0x10] sm:$0xff] %v2071
      %2088 = vst [vmem:[%s231 + $0x18] sm:$0xff] %v2072
      %2089 = vst [vmem:[%s231 + $0x20] sm:$0xff] %v2073
      %2090 = vst [vmem:[%s231 + $0x28] sm:$0xff] %v2074
      %2091 = vst [vmem:[%s231 + $0x30] sm:$0xff] %v2075
      %2092 = vst [vmem:[%s231 + $0x38] sm:$0xff] %v2076
      %2093 = vst [vmem:[%s231 + $0x40] sm:$0xff] %v2077
      %2094 = vst [vmem:[%s231 + $0x48] sm:$0xff] %v2078
      %2095 = vst [vmem:[%s231 + $0x50] sm:$0xff] %v2079
      %2096 = vst [vmem:[%s231 + $0x58] sm:$0xff] %v2080
      %2097 = vst [vmem:[%s231 + $0x60] sm:$0xff] %v2081
      %2098 = vst [vmem:[%s231 + $0x68] sm:$0xff] %v2082
      %2099 = vst [vmem:[%s231 + $0x70] sm:$0xff] %v2083
      %2100 = vst [vmem:[%s231 + $0x78] sm:$0xff] %v2084
      %v2101 = vadd.f32 %v2069, %v2070
      %v2102 = vadd.f32 %v2101, %v2071
      %v2103 = vadd.f32 %v2102, %v2072
      %v2104 = vadd.f32 %v2103, %v2073
      %v2105 = vadd.f32 %v2104, %v2074
      %v2106 = vadd.f32 %v2105, %v2075
      %v2107 = vadd.f32 %v2106, %v2076
      %v2108 = vadd.f32 %v2107, %v2077
      %v2109 = vadd.f32 %v2108, %v2078
      %v2110 = vadd.f32 %v2109, %v2079
      %v2111 = vadd.f32 %v2110, %v2080
      %v2112 = vadd.f32 %v2111, %v2081
      %v2113 = vadd.f32 %v2112, %v2082
      %v2114 = vadd.f32 %v2113, %v2083
      %v2115 = vadd.f32 %v2114, %v2084
      %v2116 = vrot.slane %v2115, 4
      %v2117 = vadd.f32 %v2115, %v2116
      %v2118 = vrot.slane %v2117, 2
      %v2119 = vadd.f32 %v2117, %v2118
      %v2120 = vrot.slane %v2119, 1
      %v2121 = vadd.f32 %v2119, %v2120
      %2122 = vst [vmem:[%s235] sm:$0x1] %v2121
      %v2123 = vmul.f32 %v2069, %v2069
      %v2124 = vmul.f32 %v2070, %v2070
      %v2125 = vmul.f32 %v2071, %v2071
      %v2126 = vmul.f32 %v2072, %v2072
      %v2127 = vmul.f32 %v2073, %v2073
      %v2128 = vmul.f32 %v2074, %v2074
      %v2129 = vmul.f32 %v2075, %v2075
      %v2130 = vmul.f32 %v2076, %v2076
      %v2131 = vmul.f32 %v2077, %v2077
      %v2132 = vmul.f32 %v2078, %v2078
      %v2133 = vmul.f32 %v2079, %v2079
      %v2134 = vmul.f32 %v2080, %v2080
      %v2135 = vmul.f32 %v2081, %v2081
      %v2136 = vmul.f32 %v2082, %v2082
      %v2137 = vmul.f32 %v2083, %v2083
      %v2138 = vmul.f32 %v2084, %v2084
      %v2139 = vadd.f32 %v2123, %v2124
      %v2140 = vadd.f32 %v2139, %v2125
      %v2141 = vadd.f32 %v2140, %v2126
      %v2142 = vadd.f32 %v2141, %v2127
      %v2143 = vadd.f32 %v2142, %v2128
      %v2144 = vadd.f32 %v2143, %v2129
      %v2145 = vadd.f32 %v2144, %v2130
      %v2146 = vadd.f32 %v2145, %v2131
      %v2147 = vadd.f32 %v2146, %v2132
      %v2148 = vadd.f32 %v2147, %v2133
      %v2149 = vadd.f32 %v2148, %v2134
      %v2150 = vadd.f32 %v2149, %v2135
      %v2151 = vadd.f32 %v2150, %v2136
      %v2152 = vadd.f32 %v2151, %v2137
      %v2153 = vadd.f32 %v2152, %v2138
      %v2154 = vrot.slane %v2153, 4
      %v2155 = vadd.f32 %v2153, %v2154
      %v2156 = vrot.slane %v2155, 2
      %v2157 = vadd.f32 %v2155, %v2156
      %v2158 = vrot.slane %v2157, 1
      %v2159 = vadd.f32 %v2157, %v2158
      %2160 = vst [vmem:[%s235 + $0x1] sm:$0x1] %v2159
      %p2161 = scmp.lt.s32.totalorder %s17, 3
      %s2162 = scalar_select %p2161, %s17, 3
      %s2163 = smul.addr %s2162, 16
      %s2164 = smul.addr %s2163, 8
      %s2165 = scalar_lea.vmem %s4, %s2164
      %p2166 = scmp.lt.s32.totalorder %s17, 3
      %s2167 = scalar_select %p2166, %s17, 3
      %s2168 = smul.addr %s2167, 8
      %s2169 = scalar_lea.vmem %s5, %s2168
      // Predicated region
      $region37: #{_lambda_.4} parent=35 // pred_check
        %p2170 = pneg %p124
      $region38: #{_lambda_.4} parent=35 // pred_check_branch
        %2172 = sbr.rel (%p2170) target = $region40
      $region39: #{_lambda_.4} parent=35 // pred_region
        _
      $region40: #{_lambda_.4} parent=35 // pred_fallthru
        _
      // Predicated region
      $region41: #{_lambda_.4} parent=35 // pred_check
        %p2173 = pneg %p150
      $region42: #{_lambda_.4} parent=35 // pred_check_branch
        %2175 = sbr.rel (%p2173) target = $region44
      $region43: #{_lambda_.4} parent=35 // pred_region
        _
      $region44: #{_lambda_.4} parent=35 // pred_fallthru
        _
    $region36: #{_lambda_.4} parent=5 // pred_fallthru
      _
    %p2176 = scmp.le.s32.totalorder 2, %s12
    // Predicated region
    $region45: #{_lambda_.4} parent=5 // pred_check
      %p2177 = pneg %p2176
    $region46: #{_lambda_.4} parent=5 // pred_check_branch
      %2179 = sbr.rel (%p2177) target = $region48
    $region47: #{_lambda_.4} parent=5 // pred_region
      %s2180 = ssub.s32 %s12, 2
      // Predicated region
      $region49: #{_lambda_.4} parent=47 // pred_check
        %p2181 = pneg %p130
      $region50: #{_lambda_.4} parent=47 // pred_check_branch
        %2183 = sbr.rel (%p2181) target = $region52
      $region51: #{_lambda_.4} parent=47 // pred_region
        %p2184 = scmp.lt.s32.totalorder %s18, 3
        %s2185 = scalar_select %p2184, %s18, 3
        %s2186 = smul.addr %s2185, 16
        %s2187 = smul.addr %s2186, 8
        %s2188 = scalar_lea.vmem %s4, %s2187
      $region52: #{_lambda_.4} parent=47 // pred_fallthru
        _
      // Predicated region
      $region53: #{_lambda_.4} parent=47 // pred_check
        %p2189 = pneg %p156
      $region54: #{_lambda_.4} parent=47 // pred_check_branch
        %2191 = sbr.rel (%p2189) target = $region56
      $region55: #{_lambda_.4} parent=47 // pred_region
        %p2192 = scmp.lt.s32.totalorder %s18, 3
        %s2193 = scalar_select %p2192, %s18, 3
        %s2194 = smul.addr %s2193, 8
        %s2195 = scalar_lea.vmem %s5, %s2194
      $region56: #{_lambda_.4} parent=47 // pred_fallthru
        _
    $region48: #{_lambda_.4} parent=5 // pred_fallthru
      _
  $region6: #{_lambda_.4} parent=0 // loop_footer
    %s16 = sadd.s32 1, %s12
  $region7: #{_lambda_.4} parent=0 // loop_footer_branch
    %11 = sbr.rel target = $region3
  $region8: #{_lambda_.4} parent=0 // loop_exit
    _

</llo_original>
